<compile_context>
chip_gen: v7x
topology: tpu7x:2x2x1
jax: 0.10.0
libtpu: 0.0.40
codegen_flags: <defaults>
</compile_context>

<pallas_src>
import math
from functools import partial

import jax
import jax.numpy as jnp
from jax import lax
from jax.experimental import pallas as pl
from jax.experimental.pallas import tpu as pltpu

CPAD = 128                      # lane-padded channel width
VMEM = pltpu.MemorySpace.VMEM
INV_SQRT2 = 1.0 / math.sqrt(2.0)
LRELU_SLOPE = 0.2


def _lrelu(y):
    return jnp.where(y >= 0, y, LRELU_SLOPE * y)


# ------------------------------ Pallas kernels ------------------------------

def block_front_kernel(xp_ref, xres_ref, w1_ref, b1_ref, wres_ref, bres_ref,
                       h_ref, res_ref):
    """Fused residual 1x1 conv + first 3x3 conv + LeakyReLU(0.2).

    xp_ref  : [B, H+2, W+2, C]   zero-padded block input (for the 3x3 conv)
    xres_ref: [B, Hr, Wr, C]     block input (stride-2 pre-subsampled if downsample)
    w1_ref  : [9, C, C]  b1_ref: [1, C]
    wres_ref: [C, C]     bres_ref: [1, C]
    h_ref   : [B, H, W, C]       main-path activation (post LeakyReLU)
    res_ref : [B, Hr, Wr, C]     residual-path activation
    """
    B, H, W, C = h_ref.shape
    acc = jnp.zeros((B * H * W, C), jnp.float32)
    for dy in range(3):
        for dx in range(3):
            xt = xp_ref[:, dy:dy + H, dx:dx + W, :].reshape(B * H * W, C)
            acc = acc + jnp.dot(xt, w1_ref[dy * 3 + dx],
                                preferred_element_type=jnp.float32)
    h_ref[...] = _lrelu(acc + b1_ref[...]).reshape(B, H, W, C)

    Br, Hr, Wr, _ = res_ref.shape
    xr = xres_ref[...].reshape(Br * Hr * Wr, C)
    res = jnp.dot(xr, wres_ref[...], preferred_element_type=jnp.float32) + bres_ref[...]
    res_ref[...] = res.reshape(Br, Hr, Wr, C)


def conv3x3_kernel(xp_ref, w_ref, b_ref, o_ref, *, lrelu):
    """Plain 3x3 cross-correlation over a zero-padded NHWC input."""
    B, H, W, C = o_ref.shape
    acc = jnp.zeros((B * H * W, C), jnp.float32)
    for dy in range(3):
        for dx in range(3):
            xt = xp_ref[:, dy:dy + H, dx:dx + W, :].reshape(B * H * W, C)
            acc = acc + jnp.dot(xt, w_ref[dy * 3 + dx],
                                preferred_element_type=jnp.float32)
    y = acc + b_ref[...]
    if lrelu:
        y = _lrelu(y)
    o_ref[...] = y.reshape(B, H, W, C)


def conv3x3_combine_kernel(xp_ref, w_ref, b_ref, res_ref, mask_ref, o_ref):
    """3x3 conv + LeakyReLU, then (h + res)/sqrt(2) and time-mask (non-downsample tail)."""
    B, H, W, C = o_ref.shape
    acc = jnp.zeros((B * H * W, C), jnp.float32)
    for dy in range(3):
        for dx in range(3):
            xt = xp_ref[:, dy:dy + H, dx:dx + W, :].reshape(B * H * W, C)
            acc = acc + jnp.dot(xt, w_ref[dy * 3 + dx],
                                preferred_element_type=jnp.float32)
    y = _lrelu(acc + b_ref[...]).reshape(B, H, W, C)
    o_ref[...] = (y + res_ref[...]) * INV_SQRT2 * mask_ref[...]


def conv3x3_taps_combine_kernel(taps_ref, w_ref, b_ref, res_ref, mask_ref, o_ref):
    """Stride-2 3x3 conv from pre-gathered taps, fused with residual combine + mask.

    taps_ref: [9, B*Ho*Wo, C]  (tap t = dy*3+dx, rows already at strided positions)
    """
    B, Ho, Wo, C = o_ref.shape
    acc = jnp.zeros((B * Ho * Wo, C), jnp.float32)
    for t in range(9):
        acc = acc + jnp.dot(taps_ref[t], w_ref[t],
                            preferred_element_type=jnp.float32)
    y = (acc + b_ref[...]).reshape(B, Ho, Wo, C)
    o_ref[...] = (y + res_ref[...]) * INV_SQRT2 * mask_ref[...]


def blur_kernel(xp_ref, o_ref):
    """Depthwise normalized ([1,2,1] x [1,2,1]) / 16 blur over reflect-padded input."""
    B, H, W, C = o_ref.shape
    f = (1.0, 2.0, 1.0)
    acc = jnp.zeros((B, H, W, C), jnp.float32)
    for dy in range(3):
        for dx in range(3):
            acc = acc + (f[dy] * f[dx] / 16.0) * xp_ref[:, dy:dy + H, dx:dx + W, :]
    o_ref[...] = acc


def final_head_kernel(xp_ref, w_ref, b_ref, mask_ref, invlen_ref, wl_ref, bl_ref,
                      o_ref, *, inv_h):
    """Final 3x3 conv + mask + mean over H + length-normalized sum over W + logit."""
    B, Hp, Wp, C = xp_ref.shape
    H, W = Hp - 2, Wp - 2
    acc = jnp.zeros((B * H * W, C), jnp.float32)
    for dy in range(3):
        for dx in range(3):
            xt = xp_ref[:, dy:dy + H, dx:dx + W, :].reshape(B * H * W, C)
            acc = acc + jnp.dot(xt, w_ref[dy * 3 + dx],
                                preferred_element_type=jnp.float32)
    y = (acc + b_ref[...]).reshape(B, H, W, C) * mask_ref[...]
    s = jnp.sum(jnp.sum(y, axis=1), axis=1)          # [B, C]
    pooled = s * (inv_h * invlen_ref[...])           # [B, C]
    o_ref[...] = (jnp.dot(pooled, wl_ref[...], preferred_element_type=jnp.float32)
                  + bl_ref[...])


# ------------------------------ call wrappers --------------------------------

def _vmem_specs(n):
    return [pl.BlockSpec(memory_space=VMEM) for _ in range(n)]


def _spatial_pad(x):
    return jnp.pad(x, ((0, 0), (1, 1), (1, 1), (0, 0)))


def block_front(x, w1, b1, w_res, b_res, downsample):
    B, H, W, _ = x.shape
    xp = _spatial_pad(x)
    x_res = x[:, ::2, ::2, :] if downsample else x
    Hr, Wr = x_res.shape[1], x_res.shape[2]
    flops = 2 * B * H * W * CPAD * CPAD * 9 + 2 * B * Hr * Wr * CPAD * CPAD
    h, res = pl.pallas_call(
        block_front_kernel,
        out_shape=(jax.ShapeDtypeStruct((B, H, W, CPAD), jnp.float32),
                   jax.ShapeDtypeStruct((B, Hr, Wr, CPAD), jnp.float32)),
        in_specs=_vmem_specs(6),
        out_specs=(pl.BlockSpec(memory_space=VMEM), pl.BlockSpec(memory_space=VMEM)),
        cost_estimate=pl.CostEstimate(
            flops=flops, transcendentals=0,
            bytes_accessed=4 * (xp.size + x_res.size + w1.size + w_res.size
                                + B * H * W * CPAD + B * Hr * Wr * CPAD)),
    )(xp, x_res, w1, b1, w_res, b_res)
    return h, res


def conv3x3(x, w, b, *, lrelu):
    B, H, W, _ = x.shape
    xp = _spatial_pad(x)
    return pl.pallas_call(
        partial(conv3x3_kernel, lrelu=lrelu),
        out_shape=jax.ShapeDtypeStruct((B, H, W, CPAD), jnp.float32),
        in_specs=_vmem_specs(3),
        out_specs=pl.BlockSpec(memory_space=VMEM),
        cost_estimate=pl.CostEstimate(
            flops=2 * B * H * W * CPAD * CPAD * 9, transcendentals=0,
            bytes_accessed=4 * (xp.size + w.size + b.size + B * H * W * CPAD)),
    )(xp, w, b)


def conv3x3_combine(x, w, b, res, mask):
    B, H, W, _ = x.shape
    xp = _spatial_pad(x)
    return pl.pallas_call(
        conv3x3_combine_kernel,
        out_shape=jax.ShapeDtypeStruct((B, H, W, CPAD), jnp.float32),
        in_specs=_vmem_specs(5),
        out_specs=pl.BlockSpec(memory_space=VMEM),
        cost_estimate=pl.CostEstimate(
            flops=2 * B * H * W * CPAD * CPAD * 9, transcendentals=0,
            bytes_accessed=4 * (xp.size + w.size + res.size + mask.size
                                + B * H * W * CPAD)),
    )(xp, w, b, res, mask)


def conv3x3_stride2_combine(x, w, b, res, mask):
    B, H, W, C = x.shape
    Ho, Wo = H // 2, W // 2
    xp = _spatial_pad(x)
    # Gather the 9 strided taps in XLA (layout plumbing); kernel sees lane-dense matmuls.
    taps = jnp.stack([
        xp[:, dy:dy + 2 * Ho:2, dx:dx + 2 * Wo:2, :].reshape(B * Ho * Wo, C)
        for dy in range(3) for dx in range(3)
    ])                                                  # [9, B*Ho*Wo, C]
    return pl.pallas_call(
        conv3x3_taps_combine_kernel,
        out_shape=jax.ShapeDtypeStruct((B, Ho, Wo, CPAD), jnp.float32),
        in_specs=_vmem_specs(5),
        out_specs=pl.BlockSpec(memory_space=VMEM),
        cost_estimate=pl.CostEstimate(
            flops=2 * B * Ho * Wo * CPAD * CPAD * 9, transcendentals=0,
            bytes_accessed=4 * (taps.size + w.size + res.size + mask.size
                                + B * Ho * Wo * CPAD)),
    )(taps, w, b, res, mask)


def blur(x):
    B, H, W, C = x.shape
    # kornia filter2d default border: reflect
    xp = jnp.pad(x, ((0, 0), (1, 1), (1, 1), (0, 0)), mode='reflect')
    return pl.pallas_call(
        blur_kernel,
        out_shape=jax.ShapeDtypeStruct((B, H, W, C), jnp.float32),
        in_specs=_vmem_specs(1),
        out_specs=pl.BlockSpec(memory_space=VMEM),
    )(xp)


def final_head(x, mask, inv_len, w_final, b_final, w_logit, b_logit):
    B, H, W, _ = x.shape
    xp = _spatial_pad(x)
    out = pl.pallas_call(
        partial(final_head_kernel, inv_h=1.0 / H),
        out_shape=jax.ShapeDtypeStruct((B, CPAD), jnp.float32),   # lane-dense output
        in_specs=_vmem_specs(7),
        out_specs=pl.BlockSpec(memory_space=VMEM),
        cost_estimate=pl.CostEstimate(
            flops=2 * B * H * W * CPAD * CPAD * 9 + 2 * B * CPAD * CPAD,
            transcendentals=0,
            bytes_accessed=4 * (xp.size + w_final.size + mask.size
                                + w_logit.size + B * CPAD)),
    )(xp, w_final, b_final, mask, inv_len, w_logit, b_logit)
    return out[:, 0]


# ------------------------------ full forward ---------------------------------

def _time_mask(lengths, scale, B, H, W):
    ceil_len = jnp.ceil(lengths.astype(jnp.float32) / scale).astype(jnp.int32)
    m = (jnp.arange(W, dtype=jnp.int32)[None, :] < ceil_len[:, None]).astype(jnp.float32)
    return jnp.broadcast_to(m[:, None, :, None], (B, H, W, 1))


def discriminator_forward(x, condition, lengths, params):
    """x: [B, H, W, CPAD] channels-last, channel-zero-padded input."""
    t_cond = condition.shape[-1]
    for blk in params["blocks"]:
        ds = blk["downsample"]
        h, res = block_front(x, blk["w1"], blk["b1"], blk["w_res"], blk["b_res"], ds)
        if ds:
            h = conv3x3(h, blk["w2"], blk["b2"], lrelu=True)
            h = blur(h)
            B, Hh, Wh, _ = h.shape
            Ho, Wo = Hh // 2, Wh // 2
            scale = t_cond // Wo
            mask = _time_mask(lengths, scale, B, Ho, Wo)
            x = conv3x3_stride2_combine(h, blk["w_ds"], blk["b_ds"], res, mask)
        else:
            B, Hh, Wh, _ = h.shape
            scale = t_cond // Wh
            mask = _time_mask(lengths, scale, B, Hh, Wh)
            x = conv3x3_combine(h, blk["w2"], blk["b2"], res, mask)
    B, H, W, _ = x.shape
    scale = t_cond // W
    mask = _time_mask(lengths, scale, B, H, W)
    inv_len = (scale / lengths.astype(jnp.float32)).reshape(B, 1)
    return final_head(x, mask, inv_len, params["w_final"], params["b_final"],
                      params["w_logit"], params["b_logit"])


# ------------------------------ parameters -----------------------------------

def _kaiming(key, shape, fan_in):
    return math.sqrt(2.0 / fan_in) * jax.random.normal(key, shape, jnp.float32)


def make_real_params(key, n_bands=8, network_capacity=2, channels=1, fmap_max=64):
    num_layers = int(math.log2(n_bands) - 1)
    filters = [channels] + [network_capacity * 4 * 2 ** i for i in range(num_layers + 1)]
    filters = [min(fmap_max, f) for f in filters]
    chan_in_out = list(zip(filters[:-1], filters[1:]))

    keys = iter(jax.random.split(key, 64))
    blocks = []
    for ind, (cin, cout) in enumerate(chan_in_out):
        ds = ind != len(chan_in_out) - 1
        blk = {
            "downsample": ds,
            "w_res": _kaiming(next(keys), (1, 1, cin, cout), cin),
            "b_res": 0.01 * jax.random.normal(next(keys), (cout,), jnp.float32),
            "w1": _kaiming(next(keys), (3, 3, cin, cout), cin * 9),
            "b1": 0.01 * jax.random.normal(next(keys), (cout,), jnp.float32),
            "w2": _kaiming(next(keys), (3, 3, cout, cout), cout * 9),
            "b2": 0.01 * jax.random.normal(next(keys), (cout,), jnp.float32),
        }
        if ds:
            blk["w_ds"] = _kaiming(next(keys), (3, 3, cout, cout), cout * 9)
            blk["b_ds"] = 0.01 * jax.random.normal(next(keys), (cout,), jnp.float32)
        blocks.append(blk)
    c_last = filters[-1]
    return {
        "blocks": blocks,
        "w_final": _kaiming(next(keys), (3, 3, c_last, c_last), c_last * 9),
        "b_final": 0.01 * jax.random.normal(next(keys), (c_last,), jnp.float32),
        "w_logit": _kaiming(next(keys), (c_last, 1), c_last),
        "b_logit": 0.01 * jax.random.normal(next(keys), (1,), jnp.float32),
        "channel_last": c_last,
    }


def _pad_conv_w(w):                      # [3,3,cin,cout] -> [9, CPAD, CPAD]
    kh, kw, cin, cout = w.shape
    wp = jnp.zeros((kh * kw, CPAD, CPAD), jnp.float32)
    return wp.at[:, :cin, :cout].set(w.reshape(kh * kw, cin, cout))


def _pad_1x1_w(w):                       # [1,1,cin,cout] -> [CPAD, CPAD]
    _, _, cin, cout = w.shape
    return jnp.zeros((CPAD, CPAD), jnp.float32).at[:cin, :cout].set(w[0, 0])


def _pad_bias(b):                        # [cout] -> [1, CPAD]
    return jnp.zeros((1, CPAD), jnp.float32).at[0, :b.shape[0]].set(b)


def make_padded_params(rp):
    blocks = []
    for blk in rp["blocks"]:
        pb = {
            "downsample": blk["downsample"],
            "w_res": _pad_1x1_w(blk["w_res"]), "b_res": _pad_bias(blk["b_res"]),
            "w1": _pad_conv_w(blk["w1"]), "b1": _pad_bias(blk["b1"]),
            "w2": _pad_conv_w(blk["w2"]), "b2": _pad_bias(blk["b2"]),
        }
        if blk["downsample"]:
            pb["w_ds"] = _pad_conv_w(blk["w_ds"])
            pb["b_ds"] = _pad_bias(blk["b_ds"])
        blocks.append(pb)
    c_last = rp["channel_last"]
    wl = jnp.zeros((CPAD, CPAD), jnp.float32).at[:c_last, 0].set(rp["w_logit"][:, 0])
    bl = jnp.zeros((1, CPAD), jnp.float32).at[0, 0].set(rp["b_logit"][0])
    return {"blocks": blocks,
            "w_final": _pad_conv_w(rp["w_final"]), "b_final": _pad_bias(rp["b_final"]),
            "w_logit": wl, "b_logit": bl}


# ----------------------------- pure-JAX reference ----------------------------

def _conv_ref(x, w, b, stride, pad):
    y = lax.conv_general_dilated(
        x, w, (stride, stride), [(pad, pad), (pad, pad)],
        dimension_numbers=('NHWC', 'HWIO', 'NHWC'),
        precision=lax.Precision.HIGHEST)
    return y + b


def _blur_ref(x):
    B, H, W, C = x.shape
    f = jnp.array([1.0, 2.0, 1.0], jnp.float32)
    k = jnp.outer(f, f)
    k = k / jnp.sum(k)
    xp = jnp.pad(x, ((0, 0), (1, 1), (1, 1), (0, 0)), mode='reflect')
    acc = jnp.zeros_like(x)
    for dy in range(3):
        for dx in range(3):
            acc = acc + k[dy, dx] * xp[:, dy:dy + H, dx:dx + W, :]
    return acc


def reference_forward(x, condition, lengths, rp):
    t_cond = condition.shape[-1]
    lrelu = lambda v: jnp.where(v >= 0, v, 0.2 * v)

    def mask_seq(v, ceil_len):
        W = v.shape[2]
        m = (jnp.arange(W)[None, :] < ceil_len[:, None]).astype(v.dtype)
        return v * m[:, None, :, None]

    for blk in rp["blocks"]:
        ds = blk["downsample"]
        res = _conv_ref(x, blk["w_res"], blk["b_res"], 2 if ds else 1, 0)
        h = lrelu(_conv_ref(x, blk["w1"], blk["b1"], 1, 1))
        h = lrelu(_conv_ref(h, blk["w2"], blk["b2"], 1, 1))
        if ds:
            h = _blur_ref(h)
            h = _conv_ref(h, blk["w_ds"], blk["b_ds"], 2, 1)
        x = (h + res) * INV_SQRT2
        scale = t_cond // x.shape[2]
        ceil_len = jnp.ceil(lengths.astype(jnp.float32) / scale).astype(jnp.int32)
        x = mask_seq(x, ceil_len)
    x = _conv_ref(x, rp["w_final"], rp["b_final"], 1, 1)
    scale = t_cond // x.shape[2]
    ceil_len = jnp.ceil(lengths.astype(jnp.float32) / scale).astype(jnp.int32)
    x = mask_seq(x, ceil_len)
    x = jnp.mean(x, axis=1)                                              # [B, W, C]
    x = (x / (lengths.astype(jnp.float32) / scale)[:, None, None]).sum(axis=1)  # [B, C]
    logits = x @ rp["w_logit"] + rp["b_logit"]                           # [B, 1]
    return logits[:, 0]


# ----------------------------------- main -------------------------------------

if __name__ == "__main__":
    B = 2
    n_bands = 8            # frequency bins (H)  -> 3 discriminator blocks
    T = 32                 # time steps (W); stays a multiple of 8 at every level
    channels = 1
    network_capacity = 2   # small filters: [1, 8, 16, 32]
    fmap_max = 64

    key = jax.random.PRNGKey(0)
    kx, kc, kp = jax.random.split(key, 3)
    x_real = jax.random.normal(kx, (B, n_bands, T, channels), jnp.float32)   # NHWC
    condition = jax.random.normal(kc, (B, 4, T), jnp.float32)                # only shape[-1] used
    lengths = jnp.array([32, 19], jnp.int32)

    rparams = make_real_params(kp, n_bands=n_bands, network_capacity=network_capacity,
                               channels=channels, fmap_max=fmap_max)
    pparams = make_padded_params(rparams)

    # zero-pad channels to CPAD lanes (lane-dense layout)
    x_pad = jnp.zeros((B, n_bands, T, CPAD), jnp.float32).at[..., :channels].set(x_real)

    logits = discriminator_forward(x_pad, condition, lengths, pparams)
    jax.block_until_ready(logits)

    logits_ref = reference_forward(x_real, condition, lengths, rparams)
    assert logits.shape == (B,)
    assert jnp.allclose(logits, logits_ref, atol=1e-2, rtol=1e-2), (logits, logits_ref)

    print("KERNEL_OK")
</pallas_src>

<mosaic_0001>
module attributes {stable_mosaic.version = 11 : i64} {
  func.func @block_front_kernel(%arg0: memref<2x10x34x128xf32, #tpu.memory_space<vmem>>, %arg1: memref<2x4x16x128xf32, #tpu.memory_space<vmem>>, %arg2: memref<9x128x128xf32, #tpu.memory_space<vmem>>, %arg3: memref<1x128xf32, #tpu.memory_space<vmem>>, %arg4: memref<128x128xf32, #tpu.memory_space<vmem>>, %arg5: memref<1x128xf32, #tpu.memory_space<vmem>>, %arg6: memref<2x8x32x128xf32, #tpu.memory_space<vmem>>, %arg7: memref<2x4x16x128xf32, #tpu.memory_space<vmem>>) attributes {dimension_semantics = [], scalar_prefetch = 0 : i64, scratch_operands = 0 : i64, tpu.core_type = #tpu.core_type<tc>} {
    %cst = arith.constant 0.000000e+00 : f32
    %0 = vector.broadcast %cst : f32 to vector<512x128xf32>
    %c0 = arith.constant 0 : index
    %c0_0 = arith.constant 0 : index
    %c0_1 = arith.constant 0 : index
    %c0_2 = arith.constant 0 : index
    %1 = vector.load %arg0[%c0, %c0_0, %c0_1, %c0_2] : memref<2x10x34x128xf32, #tpu.memory_space<vmem>>, vector<2x8x32x128xf32>
    %2 = vector.shape_cast %1 : vector<2x8x32x128xf32> to vector<512x128xf32>
    %c0_3 = arith.constant 0 : index
    %c0_4 = arith.constant 0 : index
    %c0_5 = arith.constant 0 : index
    %3 = vector.load %arg2[%c0_3, %c0_4, %c0_5] : memref<9x128x128xf32, #tpu.memory_space<vmem>>, vector<1x128x128xf32>
    %4 = vector.shape_cast %3 : vector<1x128x128xf32> to vector<128x128xf32>
    %cst_6 = arith.constant dense<0.000000e+00> : vector<512x128xf32>
    %5 = tpu.matmul %2, %4, %cst_6 {dimension_numbers = #tpu.dot_dimension_numbers<[1], [0], [0], [1], [0, 0, 1, 1], [], []>} : vector<512x128xf32>, vector<128x128xf32>, vector<512x128xf32> -> vector<512x128xf32>
    %6 = arith.addf %0, %5 : vector<512x128xf32>
    %c0_7 = arith.constant 0 : index
    %c0_8 = arith.constant 0 : index
    %c1 = arith.constant 1 : index
    %c0_9 = arith.constant 0 : index
    %7 = vector.load %arg0[%c0_7, %c0_8, %c1, %c0_9] : memref<2x10x34x128xf32, #tpu.memory_space<vmem>>, vector<2x8x32x128xf32>
    %8 = vector.shape_cast %7 : vector<2x8x32x128xf32> to vector<512x128xf32>
    %c1_10 = arith.constant 1 : index
    %c0_11 = arith.constant 0 : index
    %c0_12 = arith.constant 0 : index
    %9 = vector.load %arg2[%c1_10, %c0_11, %c0_12] : memref<9x128x128xf32, #tpu.memory_space<vmem>>, vector<1x128x128xf32>
    %10 = vector.shape_cast %9 : vector<1x128x128xf32> to vector<128x128xf32>
    %cst_13 = arith.constant dense<0.000000e+00> : vector<512x128xf32>
    %11 = tpu.matmul %8, %10, %cst_13 {dimension_numbers = #tpu.dot_dimension_numbers<[1], [0], [0], [1], [0, 0, 1, 1], [], []>} : vector<512x128xf32>, vector<128x128xf32>, vector<512x128xf32> -> vector<512x128xf32>
    %12 = arith.addf %6, %11 : vector<512x128xf32>
    %c0_14 = arith.constant 0 : index
    %c0_15 = arith.constant 0 : index
    %c2 = arith.constant 2 : index
    %c0_16 = arith.constant 0 : index
    %13 = vector.load %arg0[%c0_14, %c0_15, %c2, %c0_16] : memref<2x10x34x128xf32, #tpu.memory_space<vmem>>, vector<2x8x32x128xf32>
    %14 = vector.shape_cast %13 : vector<2x8x32x128xf32> to vector<512x128xf32>
    %c2_17 = arith.constant 2 : index
    %c0_18 = arith.constant 0 : index
    %c0_19 = arith.constant 0 : index
    %15 = vector.load %arg2[%c2_17, %c0_18, %c0_19] : memref<9x128x128xf32, #tpu.memory_space<vmem>>, vector<1x128x128xf32>
    %16 = vector.shape_cast %15 : vector<1x128x128xf32> to vector<128x128xf32>
    %cst_20 = arith.constant dense<0.000000e+00> : vector<512x128xf32>
    %17 = tpu.matmul %14, %16, %cst_20 {dimension_numbers = #tpu.dot_dimension_numbers<[1], [0], [0], [1], [0, 0, 1, 1], [], []>} : vector<512x128xf32>, vector<128x128xf32>, vector<512x128xf32> -> vector<512x128xf32>
    %18 = arith.addf %12, %17 : vector<512x128xf32>
    %c0_21 = arith.constant 0 : index
    %c1_22 = arith.constant 1 : index
    %c0_23 = arith.constant 0 : index
    %c0_24 = arith.constant 0 : index
    %19 = vector.load %arg0[%c0_21, %c1_22, %c0_23, %c0_24] : memref<2x10x34x128xf32, #tpu.memory_space<vmem>>, vector<2x8x32x128xf32>
    %20 = vector.shape_cast %19 : vector<2x8x32x128xf32> to vector<512x128xf32>
    %c3 = arith.constant 3 : index
    %c0_25 = arith.constant 0 : index
    %c0_26 = arith.constant 0 : index
    %21 = vector.load %arg2[%c3, %c0_25, %c0_26] : memref<9x128x128xf32, #tpu.memory_space<vmem>>, vector<1x128x128xf32>
    %22 = vector.shape_cast %21 : vector<1x128x128xf32> to vector<128x128xf32>
    %cst_27 = arith.constant dense<0.000000e+00> : vector<512x128xf32>
    %23 = tpu.matmul %20, %22, %cst_27 {dimension_numbers = #tpu.dot_dimension_numbers<[1], [0], [0], [1], [0, 0, 1, 1], [], []>} : vector<512x128xf32>, vector<128x128xf32>, vector<512x128xf32> -> vector<512x128xf32>
    %24 = arith.addf %18, %23 : vector<512x128xf32>
    %c0_28 = arith.constant 0 : index
    %c1_29 = arith.constant 1 : index
    %c1_30 = arith.constant 1 : index
    %c0_31 = arith.constant 0 : index
    %25 = vector.load %arg0[%c0_28, %c1_29, %c1_30, %c0_31] : memref<2x10x34x128xf32, #tpu.memory_space<vmem>>, vector<2x8x32x128xf32>
    %26 = vector.shape_cast %25 : vector<2x8x32x128xf32> to vector<512x128xf32>
    %c4 = arith.constant 4 : index
    %c0_32 = arith.constant 0 : index
    %c0_33 = arith.constant 0 : index
    %27 = vector.load %arg2[%c4, %c0_32, %c0_33] : memref<9x128x128xf32, #tpu.memory_space<vmem>>, vector<1x128x128xf32>
    %28 = vector.shape_cast %27 : vector<1x128x128xf32> to vector<128x128xf32>
    %cst_34 = arith.constant dense<0.000000e+00> : vector<512x128xf32>
    %29 = tpu.matmul %26, %28, %cst_34 {dimension_numbers = #tpu.dot_dimension_numbers<[1], [0], [0], [1], [0, 0, 1, 1], [], []>} : vector<512x128xf32>, vector<128x128xf32>, vector<512x128xf32> -> vector<512x128xf32>
    %30 = arith.addf %24, %29 : vector<512x128xf32>
    %c0_35 = arith.constant 0 : index
    %c1_36 = arith.constant 1 : index
    %c2_37 = arith.constant 2 : index
    %c0_38 = arith.constant 0 : index
    %31 = vector.load %arg0[%c0_35, %c1_36, %c2_37, %c0_38] : memref<2x10x34x128xf32, #tpu.memory_space<vmem>>, vector<2x8x32x128xf32>
    %32 = vector.shape_cast %31 : vector<2x8x32x128xf32> to vector<512x128xf32>
    %c5 = arith.constant 5 : index
    %c0_39 = arith.constant 0 : index
    %c0_40 = arith.constant 0 : index
    %33 = vector.load %arg2[%c5, %c0_39, %c0_40] : memref<9x128x128xf32, #tpu.memory_space<vmem>>, vector<1x128x128xf32>
    %34 = vector.shape_cast %33 : vector<1x128x128xf32> to vector<128x128xf32>
    %cst_41 = arith.constant dense<0.000000e+00> : vector<512x128xf32>
    %35 = tpu.matmul %32, %34, %cst_41 {dimension_numbers = #tpu.dot_dimension_numbers<[1], [0], [0], [1], [0, 0, 1, 1], [], []>} : vector<512x128xf32>, vector<128x128xf32>, vector<512x128xf32> -> vector<512x128xf32>
    %36 = arith.addf %30, %35 : vector<512x128xf32>
    %c0_42 = arith.constant 0 : index
    %c2_43 = arith.constant 2 : index
    %c0_44 = arith.constant 0 : index
    %c0_45 = arith.constant 0 : index
    %37 = vector.load %arg0[%c0_42, %c2_43, %c0_44, %c0_45] : memref<2x10x34x128xf32, #tpu.memory_space<vmem>>, vector<2x8x32x128xf32>
    %38 = vector.shape_cast %37 : vector<2x8x32x128xf32> to vector<512x128xf32>
    %c6 = arith.constant 6 : index
    %c0_46 = arith.constant 0 : index
    %c0_47 = arith.constant 0 : index
    %39 = vector.load %arg2[%c6, %c0_46, %c0_47] : memref<9x128x128xf32, #tpu.memory_space<vmem>>, vector<1x128x128xf32>
    %40 = vector.shape_cast %39 : vector<1x128x128xf32> to vector<128x128xf32>
    %cst_48 = arith.constant dense<0.000000e+00> : vector<512x128xf32>
    %41 = tpu.matmul %38, %40, %cst_48 {dimension_numbers = #tpu.dot_dimension_numbers<[1], [0], [0], [1], [0, 0, 1, 1], [], []>} : vector<512x128xf32>, vector<128x128xf32>, vector<512x128xf32> -> vector<512x128xf32>
    %42 = arith.addf %36, %41 : vector<512x128xf32>
    %c0_49 = arith.constant 0 : index
    %c2_50 = arith.constant 2 : index
    %c1_51 = arith.constant 1 : index
    %c0_52 = arith.constant 0 : index
    %43 = vector.load %arg0[%c0_49, %c2_50, %c1_51, %c0_52] : memref<2x10x34x128xf32, #tpu.memory_space<vmem>>, vector<2x8x32x128xf32>
    %44 = vector.shape_cast %43 : vector<2x8x32x128xf32> to vector<512x128xf32>
    %c7 = arith.constant 7 : index
    %c0_53 = arith.constant 0 : index
    %c0_54 = arith.constant 0 : index
    %45 = vector.load %arg2[%c7, %c0_53, %c0_54] : memref<9x128x128xf32, #tpu.memory_space<vmem>>, vector<1x128x128xf32>
    %46 = vector.shape_cast %45 : vector<1x128x128xf32> to vector<128x128xf32>
    %cst_55 = arith.constant dense<0.000000e+00> : vector<512x128xf32>
    %47 = tpu.matmul %44, %46, %cst_55 {dimension_numbers = #tpu.dot_dimension_numbers<[1], [0], [0], [1], [0, 0, 1, 1], [], []>} : vector<512x128xf32>, vector<128x128xf32>, vector<512x128xf32> -> vector<512x128xf32>
    %48 = arith.addf %42, %47 : vector<512x128xf32>
    %c0_56 = arith.constant 0 : index
    %c2_57 = arith.constant 2 : index
    %c2_58 = arith.constant 2 : index
    %c0_59 = arith.constant 0 : index
    %49 = vector.load %arg0[%c0_56, %c2_57, %c2_58, %c0_59] : memref<2x10x34x128xf32, #tpu.memory_space<vmem>>, vector<2x8x32x128xf32>
    %50 = vector.shape_cast %49 : vector<2x8x32x128xf32> to vector<512x128xf32>
    %c8 = arith.constant 8 : index
    %c0_60 = arith.constant 0 : index
    %c0_61 = arith.constant 0 : index
    %51 = vector.load %arg2[%c8, %c0_60, %c0_61] : memref<9x128x128xf32, #tpu.memory_space<vmem>>, vector<1x128x128xf32>
    %52 = vector.shape_cast %51 : vector<1x128x128xf32> to vector<128x128xf32>
    %cst_62 = arith.constant dense<0.000000e+00> : vector<512x128xf32>
    %53 = tpu.matmul %50, %52, %cst_62 {dimension_numbers = #tpu.dot_dimension_numbers<[1], [0], [0], [1], [0, 0, 1, 1], [], []>} : vector<512x128xf32>, vector<128x128xf32>, vector<512x128xf32> -> vector<512x128xf32>
    %54 = arith.addf %48, %53 : vector<512x128xf32>
    %c0_63 = arith.constant 0 : index
    %c0_64 = arith.constant 0 : index
    %55 = vector.load %arg3[%c0_63, %c0_64] : memref<1x128xf32, #tpu.memory_space<vmem>>, vector<1x128xf32>
    %56 = vector.broadcast %55 : vector<1x128xf32> to vector<512x128xf32>
    %57 = arith.addf %54, %56 : vector<512x128xf32>
    %cst_65 = arith.constant 0.000000e+00 : f32
    %58 = vector.broadcast %cst_65 : f32 to vector<512x128xf32>
    %59 = arith.cmpf oge, %57, %58 : vector<512x128xf32>
    %cst_66 = arith.constant 2.000000e-01 : f32
    %60 = vector.broadcast %cst_66 : f32 to vector<512x128xf32>
    %61 = arith.mulf %60, %57 : vector<512x128xf32>
    %62 = arith.select %59, %57, %61 : vector<512x128xi1>, vector<512x128xf32>
    %63 = vector.shape_cast %62 : vector<512x128xf32> to vector<2x8x32x128xf32>
    %c0_67 = arith.constant 0 : index
    %c0_68 = arith.constant 0 : index
    %c0_69 = arith.constant 0 : index
    %c0_70 = arith.constant 0 : index
    %64 = vector.load %arg6[%c0_67, %c0_68, %c0_69, %c0_70] : memref<2x8x32x128xf32, #tpu.memory_space<vmem>>, vector<2x8x32x128xf32>
    tpu.vector_store %arg6[%c0_67, %c0_68, %c0_69, %c0_70], %63 {strides = array<i32>} : memref<2x8x32x128xf32, #tpu.memory_space<vmem>>, vector<2x8x32x128xf32>,
    %c0_71 = arith.constant 0 : index
    %c0_72 = arith.constant 0 : index
    %c0_73 = arith.constant 0 : index
    %c0_74 = arith.constant 0 : index
    %65 = vector.load %arg1[%c0_71, %c0_72, %c0_73, %c0_74] : memref<2x4x16x128xf32, #tpu.memory_space<vmem>>, vector<2x4x16x128xf32>
    %66 = vector.shape_cast %65 : vector<2x4x16x128xf32> to vector<128x128xf32>
    %c0_75 = arith.constant 0 : index
    %c0_76 = arith.constant 0 : index
    %67 = vector.load %arg4[%c0_75, %c0_76] : memref<128x128xf32, #tpu.memory_space<vmem>>, vector<128x128xf32>
    %cst_77 = arith.constant dense<0.000000e+00> : vector<128x128xf32>
    %68 = tpu.matmul %66, %67, %cst_77 {dimension_numbers = #tpu.dot_dimension_numbers<[1], [0], [0], [1], [0, 0, 1, 1], [], []>} : vector<128x128xf32>, vector<128x128xf32>, vector<128x128xf32> -> vector<128x128xf32>
    %c0_78 = arith.constant 0 : index
    %c0_79 = arith.constant 0 : index
    %69 = vector.load %arg5[%c0_78, %c0_79] : memref<1x128xf32, #tpu.memory_space<vmem>>, vector<1x128xf32>
    %70 = vector.broadcast %69 : vector<1x128xf32> to vector<128x128xf32>
    %71 = arith.addf %68, %70 : vector<128x128xf32>
    %72 = vector.shape_cast %71 : vector<128x128xf32> to vector<2x4x16x128xf32>
    %c0_80 = arith.constant 0 : index
    %c0_81 = arith.constant 0 : index
    %c0_82 = arith.constant 0 : index
    %c0_83 = arith.constant 0 : index
    %73 = vector.load %arg7[%c0_80, %c0_81, %c0_82, %c0_83] : memref<2x4x16x128xf32, #tpu.memory_space<vmem>>, vector<2x4x16x128xf32>
    tpu.vector_store %arg7[%c0_80, %c0_81, %c0_82, %c0_83], %72 {strides = array<i32>} : memref<2x4x16x128xf32, #tpu.memory_space<vmem>>, vector<2x4x16x128xf32>,
    return
  }
}

</mosaic_0001>

<llo_original>
// kernel: tpu_custom_call.1
$region0: #{tpu_custom_call.1}
  #allocation0 [shape = 'u32[]', space=smem, size = 0x4, offset = 0x4, fixed_abs, tag = 'smem constant byte address 0x4 - core index']
  #allocation1 [shape = 'u32[144,128]{1,0:T(1,128)}', space=vmem, size = 0x12000, scoped, tag = 'internal scratch']
  %s0 = inlined_call_operand.vmem [shape: f32[2,10,34,128], index: 0, kind: input, shape index: {}]
  %s1 = inlined_call_operand.vmem [shape: f32[2,4,16,128], index: 1, kind: input, shape index: {}]
  %s2 = inlined_call_operand.vmem [shape: f32[9,128,128], index: 2, kind: input, shape index: {}]
  %s3 = inlined_call_operand.vmem [shape: f32[1,128], index: 3, kind: input, shape index: {}]
  %s4 = inlined_call_operand.vmem [shape: f32[128,128], index: 4, kind: input, shape index: {}]
  %s5 = inlined_call_operand.vmem [shape: f32[1,128], index: 5, kind: input, shape index: {}]
  %s6 = inlined_call_operand.hbm [shape: f32[2,8,32,128], index: 6, kind: output, shape index: {0}]
  %s7 = inlined_call_operand.hbm [shape: f32[2,4,16,128], index: 7, kind: output, shape index: {1}]
  %8 = xla_tuple %s6, %s7
  %s9 = sld [smem:[#allocation0]]
  $region42: #{tpu_custom_call.1} parent=0
    _
  %s11 = ssub.s32 1, %s9
  %s12 = scalar_select 0, %s11, %s9
  $region1: #{tpu_custom_call.1} parent=0
    #allocation2 [shape = 'u8[262144]{0}', space=vmem, size = 0x40000, scoped, tag = 'output window, operand 0, single buffered']
    #allocation3 [shape = 's32[1]{0}', space=sflag, size = 0x4, scoped, tag = 'scoped memory for tpu_custom_call.1']
    #allocation4 [shape = 'u8[65536]{0}', space=vmem, size = 0x10000, scoped, tag = 'output window, operand 1, single buffered']
    #allocation5 [shape = 's32[1]{0}', space=sflag, size = 0x4, scoped, tag = 'scoped memory for tpu_custom_call.1']
    %13 = vsyncpa [#allocation3], 0
    %14 = vsyncpa [#allocation5], 0
    // Predicated region
    $region2: #{tpu_custom_call.1} parent=1 // pred_check
      _
    $region3: #{tpu_custom_call.1} parent=1 // pred_check_branch
      %16 = sbr.rel (0) target = $region5
    $region4: #{tpu_custom_call.1} parent=1 // pred_region
      _
    $region5: #{tpu_custom_call.1} parent=1 // pred_fallthru
      _
    // Predicated region
    $region6: #{tpu_custom_call.1} parent=1 // pred_check
      _
    $region7: #{tpu_custom_call.1} parent=1 // pred_check_branch
      %18 = sbr.rel (0) target = $region9
    $region8: #{tpu_custom_call.1} parent=1 // pred_region
      _
    $region9: #{tpu_custom_call.1} parent=1 // pred_fallthru
      _
    // Predicated region
    $region10: #{tpu_custom_call.1} parent=1 // pred_check
      _
    $region11: #{tpu_custom_call.1} parent=1 // pred_check_branch
      %20 = sbr.rel (0) target = $region13
    $region12: #{tpu_custom_call.1} parent=1 // pred_region
      _
    $region13: #{tpu_custom_call.1} parent=1 // pred_fallthru
      _
    // Predicated region
    $region14: #{tpu_custom_call.1} parent=1 // pred_check
      _
    $region15: #{tpu_custom_call.1} parent=1 // pred_check_branch
      %22 = sbr.rel (0) target = $region17
    $region16: #{tpu_custom_call.1} parent=1 // pred_region
      _
    $region17: #{tpu_custom_call.1} parent=1 // pred_fallthru
      _
    // Predicated region
    $region18: #{tpu_custom_call.1} parent=1 // pred_check
      _
    $region19: #{tpu_custom_call.1} parent=1 // pred_check_branch
      %24 = sbr.rel (0) target = $region21
    $region20: #{tpu_custom_call.1} parent=1 // pred_region
      _
    $region21: #{tpu_custom_call.1} parent=1 // pred_fallthru
      _
    // Predicated region
    $region22: #{tpu_custom_call.1} parent=1 // pred_check
      _
    $region23: #{tpu_custom_call.1} parent=1 // pred_check_branch
      %26 = sbr.rel (0) target = $region25
    $region24: #{tpu_custom_call.1} parent=1 // pred_region
      _
    $region25: #{tpu_custom_call.1} parent=1 // pred_fallthru
      _
    %v27 = vld [vmem:[%s0] sm:$0xff]
    %v28 = vld [vmem:[%s0 + $0x8] sm:$0xff]
    %v29 = vld [vmem:[%s0 + $0x10] sm:$0xff]
    %v30 = vld [vmem:[%s0 + $0x18] sm:$0xff]
    %v31 = vld [vmem:[%s0 + $0x28] sm:$0xff]
    %v32 = vld [vmem:[%s0 + $0x30] sm:$0xff]
    %v33 = vld [vmem:[%s0 + $0x38] sm:$0xff]
    %v34 = vld [vmem:[%s0 + $0x40] sm:$0xff]
    %v35 = vld [vmem:[%s0 + $0x50] sm:$0xff]
    %v36 = vld [vmem:[%s0 + $0x58] sm:$0xff]
    %v37 = vld [vmem:[%s0 + $0x60] sm:$0xff]
    %v38 = vld [vmem:[%s0 + $0x68] sm:$0xff]
    %v39 = vld [vmem:[%s0 + $0x78] sm:$0xff]
    %v40 = vld [vmem:[%s0 + $0x80] sm:$0xff]
    %v41 = vld [vmem:[%s0 + $0x88] sm:$0xff]
    %v42 = vld [vmem:[%s0 + $0x90] sm:$0xff]
    %v43 = vld [vmem:[%s0 + $0xa0] sm:$0xff]
    %v44 = vld [vmem:[%s0 + $0xa8] sm:$0xff]
    %v45 = vld [vmem:[%s0 + $0xb0] sm:$0xff]
    %v46 = vld [vmem:[%s0 + $0xb8] sm:$0xff]
    %v47 = vld [vmem:[%s0 + $0xc8] sm:$0xff]
    %v48 = vld [vmem:[%s0 + $0xd0] sm:$0xff]
    %v49 = vld [vmem:[%s0 + $0xd8] sm:$0xff]
    %v50 = vld [vmem:[%s0 + $0xe0] sm:$0xff]
    %v51 = vld [vmem:[%s0 + $0xf0] sm:$0xff]
    %v52 = vld [vmem:[%s0 + $0xf8] sm:$0xff]
    %v53 = vld [vmem:[%s0 + $0x100] sm:$0xff]
    %v54 = vld [vmem:[%s0 + $0x108] sm:$0xff]
    %v55 = vld [vmem:[%s0 + $0x118] sm:$0xff]
    %v56 = vld [vmem:[%s0 + $0x120] sm:$0xff]
    %v57 = vld [vmem:[%s0 + $0x128] sm:$0xff]
    %v58 = vld [vmem:[%s0 + $0x130] sm:$0xff]
    %v59 = vld [vmem:[%s0 + $0x190] sm:$0xff]
    %v60 = vld [vmem:[%s0 + $0x198] sm:$0xff]
    %v61 = vld [vmem:[%s0 + $0x1a0] sm:$0xff]
    %v62 = vld [vmem:[%s0 + $0x1a8] sm:$0xff]
    %v63 = vld [vmem:[%s0 + $0x1b8] sm:$0xff]
    %v64 = vld [vmem:[%s0 + $0x1c0] sm:$0xff]
    %v65 = vld [vmem:[%s0 + $0x1c8] sm:$0xff]
    %v66 = vld [vmem:[%s0 + $0x1d0] sm:$0xff]
    %v67 = vld [vmem:[%s0 + $0x1e0] sm:$0xff]
    %v68 = vld [vmem:[%s0 + $0x1e8] sm:$0xff]
    %v69 = vld [vmem:[%s0 + $0x1f0] sm:$0xff]
    %v70 = vld [vmem:[%s0 + $0x1f8] sm:$0xff]
    %v71 = vld [vmem:[%s0 + $0x208] sm:$0xff]
    %v72 = vld [vmem:[%s0 + $0x210] sm:$0xff]
    %v73 = vld [vmem:[%s0 + $0x218] sm:$0xff]
    %v74 = vld [vmem:[%s0 + $0x220] sm:$0xff]
    %v75 = vld [vmem:[%s0 + $0x230] sm:$0xff]
    %v76 = vld [vmem:[%s0 + $0x238] sm:$0xff]
    %v77 = vld [vmem:[%s0 + $0x240] sm:$0xff]
    %v78 = vld [vmem:[%s0 + $0x248] sm:$0xff]
    %v79 = vld [vmem:[%s0 + $0x258] sm:$0xff]
    %v80 = vld [vmem:[%s0 + $0x260] sm:$0xff]
    %v81 = vld [vmem:[%s0 + $0x268] sm:$0xff]
    %v82 = vld [vmem:[%s0 + $0x270] sm:$0xff]
    %v83 = vld [vmem:[%s0 + $0x280] sm:$0xff]
    %v84 = vld [vmem:[%s0 + $0x288] sm:$0xff]
    %v85 = vld [vmem:[%s0 + $0x290] sm:$0xff]
    %v86 = vld [vmem:[%s0 + $0x298] sm:$0xff]
    %v87 = vld [vmem:[%s0 + $0x2a8] sm:$0xff]
    %v88 = vld [vmem:[%s0 + $0x2b0] sm:$0xff]
    %v89 = vld [vmem:[%s0 + $0x2b8] sm:$0xff]
    %v90 = vld [vmem:[%s0 + $0x2c0] sm:$0xff]
    %v91 = vld [vmem:[%s2] sm:$0xff]
    %v92 = vld [vmem:[%s2 + $0x8] sm:$0xff]
    %v93 = vld [vmem:[%s2 + $0x10] sm:$0xff]
    %v94 = vld [vmem:[%s2 + $0x18] sm:$0xff]
    %v95 = vld [vmem:[%s2 + $0x20] sm:$0xff]
    %v96 = vld [vmem:[%s2 + $0x28] sm:$0xff]
    %v97 = vld [vmem:[%s2 + $0x30] sm:$0xff]
    %v98 = vld [vmem:[%s2 + $0x38] sm:$0xff]
    %v99 = vld [vmem:[%s2 + $0x40] sm:$0xff]
    %v100 = vld [vmem:[%s2 + $0x48] sm:$0xff]
    %v101 = vld [vmem:[%s2 + $0x50] sm:$0xff]
    %v102 = vld [vmem:[%s2 + $0x58] sm:$0xff]
    %v103 = vld [vmem:[%s2 + $0x60] sm:$0xff]
    %v104 = vld [vmem:[%s2 + $0x68] sm:$0xff]
    %v105 = vld [vmem:[%s2 + $0x70] sm:$0xff]
    %v106 = vld [vmem:[%s2 + $0x78] sm:$0xff]
    %v107 = vld [vmem:[%s0 + $0x1] sm:$0xff]
    %v108 = vld [vmem:[%s0 + $0x9] sm:$0xff]
    %v109 = vld [vmem:[%s0 + $0x11] sm:$0xff]
    %v110 = vld [vmem:[%s0 + $0x19] sm:$0xff]
    %v111 = vld [vmem:[%s0 + $0x29] sm:$0xff]
    %v112 = vld [vmem:[%s0 + $0x31] sm:$0xff]
    %v113 = vld [vmem:[%s0 + $0x39] sm:$0xff]
    %v114 = vld [vmem:[%s0 + $0x41] sm:$0xff]
    %v115 = vld [vmem:[%s0 + $0x51] sm:$0xff]
    %v116 = vld [vmem:[%s0 + $0x59] sm:$0xff]
    %v117 = vld [vmem:[%s0 + $0x61] sm:$0xff]
    %v118 = vld [vmem:[%s0 + $0x69] sm:$0xff]
    %v119 = vld [vmem:[%s0 + $0x79] sm:$0xff]
    %v120 = vld [vmem:[%s0 + $0x81] sm:$0xff]
    %v121 = vld [vmem:[%s0 + $0x89] sm:$0xff]
    %v122 = vld [vmem:[%s0 + $0x91] sm:$0xff]
    %v123 = vld [vmem:[%s0 + $0xa1] sm:$0xff]
    %v124 = vld [vmem:[%s0 + $0xa9] sm:$0xff]
    %v125 = vld [vmem:[%s0 + $0xb1] sm:$0xff]
    %v126 = vld [vmem:[%s0 + $0xb9] sm:$0xff]
    %v127 = vld [vmem:[%s0 + $0xc9] sm:$0xff]
    %v128 = vld [vmem:[%s0 + $0xd1] sm:$0xff]
    %v129 = vld [vmem:[%s0 + $0xd9] sm:$0xff]
    %v130 = vld [vmem:[%s0 + $0xe1] sm:$0xff]
    %v131 = vld [vmem:[%s0 + $0xf1] sm:$0xff]
    %v132 = vld [vmem:[%s0 + $0xf9] sm:$0xff]
    %v133 = vld [vmem:[%s0 + $0x101] sm:$0xff]
    %v134 = vld [vmem:[%s0 + $0x109] sm:$0xff]
    %v135 = vld [vmem:[%s0 + $0x119] sm:$0xff]
    %v136 = vld [vmem:[%s0 + $0x121] sm:$0xff]
    %v137 = vld [vmem:[%s0 + $0x129] sm:$0xff]
    %v138 = vld [vmem:[%s0 + $0x131] sm:$0xff]
    %v139 = vld [vmem:[%s0 + $0x191] sm:$0xff]
    %v140 = vld [vmem:[%s0 + $0x199] sm:$0xff]
    %v141 = vld [vmem:[%s0 + $0x1a1] sm:$0xff]
    %v142 = vld [vmem:[%s0 + $0x1a9] sm:$0xff]
    %v143 = vld [vmem:[%s0 + $0x1b9] sm:$0xff]
    %v144 = vld [vmem:[%s0 + $0x1c1] sm:$0xff]
    %v145 = vld [vmem:[%s0 + $0x1c9] sm:$0xff]
    %v146 = vld [vmem:[%s0 + $0x1d1] sm:$0xff]
    %v147 = vld [vmem:[%s0 + $0x1e1] sm:$0xff]
    %v148 = vld [vmem:[%s0 + $0x1e9] sm:$0xff]
    %v149 = vld [vmem:[%s0 + $0x1f1] sm:$0xff]
    %v150 = vld [vmem:[%s0 + $0x1f9] sm:$0xff]
    %v151 = vld [vmem:[%s0 + $0x209] sm:$0xff]
    %v152 = vld [vmem:[%s0 + $0x211] sm:$0xff]
    %v153 = vld [vmem:[%s0 + $0x219] sm:$0xff]
    %v154 = vld [vmem:[%s0 + $0x221] sm:$0xff]
    %v155 = vld [vmem:[%s0 + $0x231] sm:$0xff]
    %v156 = vld [vmem:[%s0 + $0x239] sm:$0xff]
    %v157 = vld [vmem:[%s0 + $0x241] sm:$0xff]
    %v158 = vld [vmem:[%s0 + $0x249] sm:$0xff]
    %v159 = vld [vmem:[%s0 + $0x259] sm:$0xff]
    %v160 = vld [vmem:[%s0 + $0x261] sm:$0xff]
    %v161 = vld [vmem:[%s0 + $0x269] sm:$0xff]
    %v162 = vld [vmem:[%s0 + $0x271] sm:$0xff]
    %v163 = vld [vmem:[%s0 + $0x281] sm:$0xff]
    %v164 = vld [vmem:[%s0 + $0x289] sm:$0xff]
    %v165 = vld [vmem:[%s0 + $0x291] sm:$0xff]
    %v166 = vld [vmem:[%s0 + $0x299] sm:$0xff]
    %v167 = vld [vmem:[%s0 + $0x2a9] sm:$0xff]
    %v168 = vld [vmem:[%s0 + $0x2b1] sm:$0xff]
    %v169 = vld [vmem:[%s0 + $0x2b9] sm:$0xff]
    %v170 = vld [vmem:[%s0 + $0x2c1] sm:$0xff]
    %s171 = scalar_lea.vmem %s2, 128
    %v172 = vld [vmem:[%s171] sm:$0xff]
    %v173 = vld [vmem:[%s171 + $0x8] sm:$0xff]
    %v174 = vld [vmem:[%s171 + $0x10] sm:$0xff]
    %v175 = vld [vmem:[%s171 + $0x18] sm:$0xff]
    %v176 = vld [vmem:[%s171 + $0x20] sm:$0xff]
    %v177 = vld [vmem:[%s171 + $0x28] sm:$0xff]
    %v178 = vld [vmem:[%s171 + $0x30] sm:$0xff]
    %v179 = vld [vmem:[%s171 + $0x38] sm:$0xff]
    %v180 = vld [vmem:[%s171 + $0x40] sm:$0xff]
    %v181 = vld [vmem:[%s171 + $0x48] sm:$0xff]
    %v182 = vld [vmem:[%s171 + $0x50] sm:$0xff]
    %v183 = vld [vmem:[%s171 + $0x58] sm:$0xff]
    %v184 = vld [vmem:[%s171 + $0x60] sm:$0xff]
    %v185 = vld [vmem:[%s171 + $0x68] sm:$0xff]
    %v186 = vld [vmem:[%s171 + $0x70] sm:$0xff]
    %v187 = vld [vmem:[%s171 + $0x78] sm:$0xff]
    %188 = vmatprep.subr.mxu0 0.0
    %189 = vmatpush1.msra.mxu0 %v172
    %190 = vmatprep.subr.mxu0 0.0
    %191 = vmatpush1.msra.mxu0 %v173
    %192 = vmatprep.subr.mxu0 0.0
    %193 = vmatpush1.msra.mxu0 %v174
    %194 = vmatprep.subr.mxu0 0.0
    %195 = vmatpush1.msra.mxu0 %v175
    %196 = vmatprep.subr.mxu0 0.0
    %197 = vmatpush1.msra.mxu0 %v176
    %198 = vmatprep.subr.mxu0 0.0
    %199 = vmatpush1.msra.mxu0 %v177
    %200 = vmatprep.subr.mxu0 0.0
    %201 = vmatpush1.msra.mxu0 %v178
    %202 = vmatprep.subr.mxu0 0.0
    %203 = vmatpush1.msra.mxu0 %v179
    %204 = vmatprep.subr.mxu0 0.0
    %205 = vmatpush1.msra.mxu0 %v180
    %206 = vmatprep.subr.mxu0 0.0
    %207 = vmatpush1.msra.mxu0 %v181
    %208 = vmatprep.subr.mxu0 0.0
    %209 = vmatpush1.msra.mxu0 %v182
    %210 = vmatprep.subr.mxu0 0.0
    %211 = vmatpush1.msra.mxu0 %v183
    %212 = vmatprep.subr.mxu0 0.0
    %213 = vmatpush1.msra.mxu0 %v184
    %214 = vmatprep.subr.mxu0 0.0
    %215 = vmatpush1.msra.mxu0 %v185
    %216 = vmatprep.subr.mxu0 0.0
    %217 = vmatpush1.msra.mxu0 %v186
    %218 = vmatprep.subr.mxu0 0.0
    %219 = vmatpush1.msra.mxu0 %v187
    %220 = vmatprep.subr.mxu0 0.0
    %221 = vmatpush1.msra.mxu0 0.0
    %222 = vmatprep.subr.mxu0 0.0
    %223 = vmatpush1.msra.mxu0 0.0
    %224 = vmatprep.subr.mxu0 0.0
    %225 = vmatpush1.msra.mxu0 0.0
    %226 = vmatprep.subr.mxu0 0.0
    %227 = vmatpush1.msra.mxu0 0.0
    %228 = vmatprep.subr.mxu0 0.0
    %229 = vmatpush1.msra.mxu0 0.0
    %230 = vmatprep.subr.mxu0 0.0
    %231 = vmatpush1.msra.mxu0 0.0
    %232 = vmatprep.subr.mxu0 0.0
    %233 = vmatpush1.msra.mxu0 0.0
    %234 = vmatprep.subr.mxu0 0.0
    %235 = vmatpush1.msra.mxu0 0.0
    %236 = vmatprep.subr.mxu0 0.0
    %237 = vmatpush1.msra.mxu0 0.0
    %238 = vmatprep.subr.mxu0 0.0
    %239 = vmatpush1.msra.mxu0 0.0
    %240 = vmatprep.subr.mxu0 0.0
    %241 = vmatpush1.msra.mxu0 0.0
    %242 = vmatprep.subr.mxu0 0.0
    %243 = vmatpush1.msra.mxu0 0.0
    %244 = vmatprep.subr.mxu0 0.0
    %245 = vmatpush1.msra.mxu0 0.0
    %246 = vmatprep.subr.mxu0 0.0
    %247 = vmatpush1.msra.mxu0 0.0
    %248 = vmatprep.subr.mxu0 0.0
    %249 = vmatpush1.msra.mxu0 0.0
    %250 = vmatprep.subr.mxu0 0.0
    %251 = vmatpush1.msra.mxu0 0.0
    %252 = vmatprep.mubr.f32.mxu0 0.0
    %253 = vmatmul.mubr.f32.gmra.mrb[0].mxu0 %v107
    %v254 = vpop.f32.mrb[0].mxu0
    %v255 = vadd.f32 0.0, %v254
    %v256 = vpop.f32.mrb[0].mxu0
    %257 = vmatprep.mubr.f32.mxu0 0.0
    %258 = vmatmul.mubr.f32.gmra.mrb[0].mxu0 %v108
    %v259 = vpop.f32.mrb[0].mxu0
    %v260 = vadd.f32 0.0, %v259
    %v261 = vpop.f32.mrb[0].mxu0
    %262 = vmatprep.mubr.f32.mxu0 0.0
    %263 = vmatmul.mubr.f32.gmra.mrb[0].mxu0 %v109
    %v264 = vpop.f32.mrb[0].mxu0
    %v265 = vadd.f32 0.0, %v264
    %v266 = vpop.f32.mrb[0].mxu0
    %267 = vmatprep.mubr.f32.mxu0 0.0
    %268 = vmatmul.mubr.f32.gmra.mrb[0].mxu0 %v110
    %v269 = vpop.f32.mrb[0].mxu0
    %v270 = vadd.f32 0.0, %v269
    %v271 = vpop.f32.mrb[0].mxu0
    %272 = vmatprep.mubr.f32.mxu0 0.0
    %273 = vmatmul.mubr.f32.gmra.mrb[0].mxu0 %v111
    %v274 = vpop.f32.mrb[0].mxu0
    %v275 = vadd.f32 0.0, %v274
    %v276 = vpop.f32.mrb[0].mxu0
    %277 = vmatprep.mubr.f32.mxu0 0.0
    %278 = vmatmul.mubr.f32.gmra.mrb[0].mxu0 %v112
    %v279 = vpop.f32.mrb[0].mxu0
    %v280 = vadd.f32 0.0, %v279
    %v281 = vpop.f32.mrb[0].mxu0
    %282 = vmatprep.mubr.f32.mxu0 0.0
    %283 = vmatmul.mubr.f32.gmra.mrb[0].mxu0 %v113
    %v284 = vpop.f32.mrb[0].mxu0
    %v285 = vadd.f32 0.0, %v284
    %v286 = vpop.f32.mrb[0].mxu0
    %287 = vmatprep.mubr.f32.mxu0 0.0
    %288 = vmatmul.mubr.f32.gmra.mrb[0].mxu0 %v114
    %v289 = vpop.f32.mrb[0].mxu0
    %v290 = vadd.f32 0.0, %v289
    %v291 = vpop.f32.mrb[0].mxu0
    %292 = vmatprep.mubr.f32.mxu0 0.0
    %293 = vmatmul.mubr.f32.gmra.mrb[0].mxu0 %v115
    %v294 = vpop.f32.mrb[0].mxu0
    %v295 = vadd.f32 0.0, %v294
    %v296 = vpop.f32.mrb[0].mxu0
    %297 = vmatprep.mubr.f32.mxu0 0.0
    %298 = vmatmul.mubr.f32.gmra.mrb[0].mxu0 %v116
    %v299 = vpop.f32.mrb[0].mxu0
    %v300 = vadd.f32 0.0, %v299
    %v301 = vpop.f32.mrb[0].mxu0
    %302 = vmatprep.mubr.f32.mxu0 0.0
    %303 = vmatmul.mubr.f32.gmra.mrb[0].mxu0 %v117
    %v304 = vpop.f32.mrb[0].mxu0
    %v305 = vadd.f32 0.0, %v304
    %v306 = vpop.f32.mrb[0].mxu0
    %307 = vmatprep.mubr.f32.mxu0 0.0
    %308 = vmatmul.mubr.f32.gmra.mrb[0].mxu0 %v118
    %v309 = vpop.f32.mrb[0].mxu0
    %v310 = vadd.f32 0.0, %v309
    %v311 = vpop.f32.mrb[0].mxu0
    %312 = vmatprep.mubr.f32.mxu0 0.0
    %313 = vmatmul.mubr.f32.gmra.mrb[0].mxu0 %v119
    %v314 = vpop.f32.mrb[0].mxu0
    %v315 = vadd.f32 0.0, %v314
    %v316 = vpop.f32.mrb[0].mxu0
    %317 = vmatprep.mubr.f32.mxu0 0.0
    %318 = vmatmul.mubr.f32.gmra.mrb[0].mxu0 %v120
    %v319 = vpop.f32.mrb[0].mxu0
    %v320 = vadd.f32 0.0, %v319
    %v321 = vpop.f32.mrb[0].mxu0
    %322 = vmatprep.mubr.f32.mxu0 0.0
    %323 = vmatmul.mubr.f32.gmra.mrb[0].mxu0 %v121
    %v324 = vpop.f32.mrb[0].mxu0
    %v325 = vadd.f32 0.0, %v324
    %v326 = vpop.f32.mrb[0].mxu0
    %327 = vmatprep.mubr.f32.mxu0 0.0
    %328 = vmatmul.mubr.f32.gmra.mrb[0].mxu0 %v122
    %v329 = vpop.f32.mrb[0].mxu0
    %v330 = vadd.f32 0.0, %v329
    %v331 = vpop.f32.mrb[0].mxu0
    %332 = vmatprep.mubr.f32.mxu0 0.0
    %333 = vmatmul.mubr.f32.gmra.mrb[0].mxu0 %v123
    %v334 = vpop.f32.mrb[0].mxu0
    %v335 = vadd.f32 0.0, %v334
    %v336 = vpop.f32.mrb[0].mxu0
    %337 = vmatprep.mubr.f32.mxu0 0.0
    %338 = vmatmul.mubr.f32.gmra.mrb[0].mxu0 %v124
    %v339 = vpop.f32.mrb[0].mxu0
    %v340 = vadd.f32 0.0, %v339
    %v341 = vpop.f32.mrb[0].mxu0
    %342 = vmatprep.mubr.f32.mxu0 0.0
    %343 = vmatmul.mubr.f32.gmra.mrb[0].mxu0 %v125
    %v344 = vpop.f32.mrb[0].mxu0
    %v345 = vadd.f32 0.0, %v344
    %v346 = vpop.f32.mrb[0].mxu0
    %347 = vmatprep.mubr.f32.mxu0 0.0
    %348 = vmatmul.mubr.f32.gmra.mrb[0].mxu0 %v126
    %v349 = vpop.f32.mrb[0].mxu0
    %v350 = vadd.f32 0.0, %v349
    %v351 = vpop.f32.mrb[0].mxu0
    %352 = vmatprep.mubr.f32.mxu0 0.0
    %353 = vmatmul.mubr.f32.gmra.mrb[0].mxu0 %v127
    %v354 = vpop.f32.mrb[0].mxu0
    %v355 = vadd.f32 0.0, %v354
    %v356 = vpop.f32.mrb[0].mxu0
    %357 = vmatprep.mubr.f32.mxu0 0.0
    %358 = vmatmul.mubr.f32.gmra.mrb[0].mxu0 %v128
    %v359 = vpop.f32.mrb[0].mxu0
    %v360 = vadd.f32 0.0, %v359
    %v361 = vpop.f32.mrb[0].mxu0
    %362 = vmatprep.mubr.f32.mxu0 0.0
    %363 = vmatmul.mubr.f32.gmra.mrb[0].mxu0 %v129
    %v364 = vpop.f32.mrb[0].mxu0
    %v365 = vadd.f32 0.0, %v364
    %v366 = vpop.f32.mrb[0].mxu0
    %367 = vmatprep.mubr.f32.mxu0 0.0
    %368 = vmatmul.mubr.f32.gmra.mrb[0].mxu0 %v130
    %v369 = vpop.f32.mrb[0].mxu0
    %v370 = vadd.f32 0.0, %v369
    %v371 = vpop.f32.mrb[0].mxu0
    %372 = vmatprep.mubr.f32.mxu0 0.0
    %373 = vmatmul.mubr.f32.gmra.mrb[0].mxu0 %v131
    %v374 = vpop.f32.mrb[0].mxu0
    %v375 = vadd.f32 0.0, %v374
    %v376 = vpop.f32.mrb[0].mxu0
    %377 = vmatprep.mubr.f32.mxu0 0.0
    %378 = vmatmul.mubr.f32.gmra.mrb[0].mxu0 %v132
    %v379 = vpop.f32.mrb[0].mxu0
    %v380 = vadd.f32 0.0, %v379
    %v381 = vpop.f32.mrb[0].mxu0
    %382 = vmatprep.mubr.f32.mxu0 0.0
    %383 = vmatmul.mubr.f32.gmra.mrb[0].mxu0 %v133
    %v384 = vpop.f32.mrb[0].mxu0
    %v385 = vadd.f32 0.0, %v384
    %v386 = vpop.f32.mrb[0].mxu0
    %387 = vmatprep.mubr.f32.mxu0 0.0
    %388 = vmatmul.mubr.f32.gmra.mrb[0].mxu0 %v134
    %v389 = vpop.f32.mrb[0].mxu0
    %v390 = vadd.f32 0.0, %v389
    %v391 = vpop.f32.mrb[0].mxu0
    %392 = vmatprep.mubr.f32.mxu0 0.0
    %393 = vmatmul.mubr.f32.gmra.mrb[0].mxu0 %v135
    %v394 = vpop.f32.mrb[0].mxu0
    %v395 = vadd.f32 0.0, %v394
    %v396 = vpop.f32.mrb[0].mxu0
    %397 = vmatprep.mubr.f32.mxu0 0.0
    %398 = vmatmul.mubr.f32.gmra.mrb[0].mxu0 %v136
    %v399 = vpop.f32.mrb[0].mxu0
    %v400 = vadd.f32 0.0, %v399
    %v401 = vpop.f32.mrb[0].mxu0
    %402 = vmatprep.mubr.f32.mxu0 0.0
    %403 = vmatmul.mubr.f32.gmra.mrb[0].mxu0 %v137
    %v404 = vpop.f32.mrb[0].mxu0
    %v405 = vadd.f32 0.0, %v404
    %v406 = vpop.f32.mrb[0].mxu0
    %407 = vmatprep.mubr.f32.mxu0 0.0
    %408 = vmatmul.mubr.f32.gmra.mrb[0].mxu0 %v138
    %v409 = vpop.f32.mrb[0].mxu0
    %v410 = vadd.f32 0.0, %v409
    %v411 = vpop.f32.mrb[0].mxu0
    %412 = vmatprep.mubr.f32.mxu0 0.0
    %413 = vmatmul.mubr.f32.gmra.mrb[0].mxu0 %v139
    %v414 = vpop.f32.mrb[0].mxu0
    %v415 = vadd.f32 0.0, %v414
    %v416 = vpop.f32.mrb[0].mxu0
    %417 = vmatprep.mubr.f32.mxu0 0.0
    %418 = vmatmul.mubr.f32.gmra.mrb[0].mxu0 %v140
    %v419 = vpop.f32.mrb[0].mxu0
    %v420 = vadd.f32 0.0, %v419
    %v421 = vpop.f32.mrb[0].mxu0
    %422 = vmatprep.mubr.f32.mxu0 0.0
    %423 = vmatmul.mubr.f32.gmra.mrb[0].mxu0 %v141
    %v424 = vpop.f32.mrb[0].mxu0
    %v425 = vadd.f32 0.0, %v424
    %v426 = vpop.f32.mrb[0].mxu0
    %427 = vmatprep.mubr.f32.mxu0 0.0
    %428 = vmatmul.mubr.f32.gmra.mrb[0].mxu0 %v142
    %v429 = vpop.f32.mrb[0].mxu0
    %v430 = vadd.f32 0.0, %v429
    %v431 = vpop.f32.mrb[0].mxu0
    %432 = vmatprep.mubr.f32.mxu0 0.0
    %433 = vmatmul.mubr.f32.gmra.mrb[0].mxu0 %v143
    %v434 = vpop.f32.mrb[0].mxu0
    %v435 = vadd.f32 0.0, %v434
    %v436 = vpop.f32.mrb[0].mxu0
    %437 = vmatprep.mubr.f32.mxu0 0.0
    %438 = vmatmul.mubr.f32.gmra.mrb[0].mxu0 %v144
    %v439 = vpop.f32.mrb[0].mxu0
    %v440 = vadd.f32 0.0, %v439
    %v441 = vpop.f32.mrb[0].mxu0
    %442 = vmatprep.mubr.f32.mxu0 0.0
    %443 = vmatmul.mubr.f32.gmra.mrb[0].mxu0 %v145
    %v444 = vpop.f32.mrb[0].mxu0
    %v445 = vadd.f32 0.0, %v444
    %v446 = vpop.f32.mrb[0].mxu0
    %447 = vmatprep.mubr.f32.mxu0 0.0
    %448 = vmatmul.mubr.f32.gmra.mrb[0].mxu0 %v146
    %v449 = vpop.f32.mrb[0].mxu0
    %v450 = vadd.f32 0.0, %v449
    %v451 = vpop.f32.mrb[0].mxu0
    %452 = vmatprep.mubr.f32.mxu0 0.0
    %453 = vmatmul.mubr.f32.gmra.mrb[0].mxu0 %v147
    %v454 = vpop.f32.mrb[0].mxu0
    %v455 = vadd.f32 0.0, %v454
    %v456 = vpop.f32.mrb[0].mxu0
    %457 = vmatprep.mubr.f32.mxu0 0.0
    %458 = vmatmul.mubr.f32.gmra.mrb[0].mxu0 %v148
    %v459 = vpop.f32.mrb[0].mxu0
    %v460 = vadd.f32 0.0, %v459
    %v461 = vpop.f32.mrb[0].mxu0
    %462 = vmatprep.mubr.f32.mxu0 0.0
    %463 = vmatmul.mubr.f32.gmra.mrb[0].mxu0 %v149
    %v464 = vpop.f32.mrb[0].mxu0
    %v465 = vadd.f32 0.0, %v464
    %v466 = vpop.f32.mrb[0].mxu0
    %467 = vmatprep.mubr.f32.mxu0 0.0
    %468 = vmatmul.mubr.f32.gmra.mrb[0].mxu0 %v150
    %v469 = vpop.f32.mrb[0].mxu0
    %v470 = vadd.f32 0.0, %v469
    %v471 = vpop.f32.mrb[0].mxu0
    %472 = vmatprep.mubr.f32.mxu0 0.0
    %473 = vmatmul.mubr.f32.gmra.mrb[0].mxu0 %v151
    %v474 = vpop.f32.mrb[0].mxu0
    %v475 = vadd.f32 0.0, %v474
    %v476 = vpop.f32.mrb[0].mxu0
    %477 = vmatprep.mubr.f32.mxu0 0.0
    %478 = vmatmul.mubr.f32.gmra.mrb[0].mxu0 %v152
    %v479 = vpop.f32.mrb[0].mxu0
    %v480 = vadd.f32 0.0, %v479
    %v481 = vpop.f32.mrb[0].mxu0
    %482 = vmatprep.mubr.f32.mxu0 0.0
    %483 = vmatmul.mubr.f32.gmra.mrb[0].mxu0 %v153
    %v484 = vpop.f32.mrb[0].mxu0
    %v485 = vadd.f32 0.0, %v484
    %v486 = vpop.f32.mrb[0].mxu0
    %487 = vmatprep.mubr.f32.mxu0 0.0
    %488 = vmatmul.mubr.f32.gmra.mrb[0].mxu0 %v154
    %v489 = vpop.f32.mrb[0].mxu0
    %v490 = vadd.f32 0.0, %v489
    %v491 = vpop.f32.mrb[0].mxu0
    %492 = vmatprep.mubr.f32.mxu0 0.0
    %493 = vmatmul.mubr.f32.gmra.mrb[0].mxu0 %v155
    %v494 = vpop.f32.mrb[0].mxu0
    %v495 = vadd.f32 0.0, %v494
    %v496 = vpop.f32.mrb[0].mxu0
    %497 = vmatprep.mubr.f32.mxu0 0.0
    %498 = vmatmul.mubr.f32.gmra.mrb[0].mxu0 %v156
    %v499 = vpop.f32.mrb[0].mxu0
    %v500 = vadd.f32 0.0, %v499
    %v501 = vpop.f32.mrb[0].mxu0
    %502 = vmatprep.mubr.f32.mxu0 0.0
    %503 = vmatmul.mubr.f32.gmra.mrb[0].mxu0 %v157
    %v504 = vpop.f32.mrb[0].mxu0
    %v505 = vadd.f32 0.0, %v504
    %v506 = vpop.f32.mrb[0].mxu0
    %507 = vmatprep.mubr.f32.mxu0 0.0
    %508 = vmatmul.mubr.f32.gmra.mrb[0].mxu0 %v158
    %v509 = vpop.f32.mrb[0].mxu0
    %v510 = vadd.f32 0.0, %v509
    %v511 = vpop.f32.mrb[0].mxu0
    %512 = vmatprep.mubr.f32.mxu0 0.0
    %513 = vmatmul.mubr.f32.gmra.mrb[0].mxu0 %v159
    %v514 = vpop.f32.mrb[0].mxu0
    %v515 = vadd.f32 0.0, %v514
    %v516 = vpop.f32.mrb[0].mxu0
    %517 = vmatprep.mubr.f32.mxu0 0.0
    %518 = vmatmul.mubr.f32.gmra.mrb[0].mxu0 %v160
    %v519 = vpop.f32.mrb[0].mxu0
    %v520 = vadd.f32 0.0, %v519
    %v521 = vpop.f32.mrb[0].mxu0
    %522 = vmatprep.mubr.f32.mxu0 0.0
    %523 = vmatmul.mubr.f32.gmra.mrb[0].mxu0 %v161
    %v524 = vpop.f32.mrb[0].mxu0
    %v525 = vadd.f32 0.0, %v524
    %v526 = vpop.f32.mrb[0].mxu0
    %527 = vmatprep.mubr.f32.mxu0 0.0
    %528 = vmatmul.mubr.f32.gmra.mrb[0].mxu0 %v162
    %v529 = vpop.f32.mrb[0].mxu0
    %v530 = vadd.f32 0.0, %v529
    %v531 = vpop.f32.mrb[0].mxu0
    %532 = vmatprep.mubr.f32.mxu0 0.0
    %533 = vmatmul.mubr.f32.gmra.mrb[0].mxu0 %v163
    %v534 = vpop.f32.mrb[0].mxu0
    %v535 = vadd.f32 0.0, %v534
    %v536 = vpop.f32.mrb[0].mxu0
    %537 = vmatprep.mubr.f32.mxu0 0.0
    %538 = vmatmul.mubr.f32.gmra.mrb[0].mxu0 %v164
    %v539 = vpop.f32.mrb[0].mxu0
    %v540 = vadd.f32 0.0, %v539
    %v541 = vpop.f32.mrb[0].mxu0
    %542 = vmatprep.mubr.f32.mxu0 0.0
    %543 = vmatmul.mubr.f32.gmra.mrb[0].mxu0 %v165
    %v544 = vpop.f32.mrb[0].mxu0
    %v545 = vadd.f32 0.0, %v544
    %v546 = vpop.f32.mrb[0].mxu0
    %547 = vmatprep.mubr.f32.mxu0 0.0
    %548 = vmatmul.mubr.f32.gmra.mrb[0].mxu0 %v166
    %v549 = vpop.f32.mrb[0].mxu0
    %v550 = vadd.f32 0.0, %v549
    %v551 = vpop.f32.mrb[0].mxu0
    %552 = vmatprep.mubr.f32.mxu0 0.0
    %553 = vmatmul.mubr.f32.gmra.mrb[0].mxu0 %v167
    %v554 = vpop.f32.mrb[0].mxu0
    %v555 = vadd.f32 0.0, %v554
    %v556 = vpop.f32.mrb[0].mxu0
    %557 = vmatprep.mubr.f32.mxu0 0.0
    %558 = vmatmul.mubr.f32.gmra.mrb[0].mxu0 %v168
    %v559 = vpop.f32.mrb[0].mxu0
    %v560 = vadd.f32 0.0, %v559
    %v561 = vpop.f32.mrb[0].mxu0
    %562 = vmatprep.mubr.f32.mxu0 0.0
    %563 = vmatmul.mubr.f32.gmra.mrb[0].mxu0 %v169
    %v564 = vpop.f32.mrb[0].mxu0
    %v565 = vadd.f32 0.0, %v564
    %v566 = vpop.f32.mrb[0].mxu0
    %567 = vmatprep.mubr.f32.mxu0 0.0
    %568 = vmatmul.mubr.f32.gmra.mrb[0].mxu0 %v170
    %v569 = vpop.f32.mrb[0].mxu0
    %v570 = vadd.f32 0.0, %v569
    %v571 = vpop.f32.mrb[0].mxu0
    %572 = vdwg.mxu0
    %573 = vmatprep.subr.mxu0 0.0
    %574 = vmatpush1.msra.mxu0 %v91
    %575 = vmatprep.subr.mxu0 0.0
    %576 = vmatpush1.msra.mxu0 %v92
    %577 = vmatprep.subr.mxu0 0.0
    %578 = vmatpush1.msra.mxu0 %v93
    %579 = vmatprep.subr.mxu0 0.0
    %580 = vmatpush1.msra.mxu0 %v94
    %581 = vmatprep.subr.mxu0 0.0
    %582 = vmatpush1.msra.mxu0 %v95
    %583 = vmatprep.subr.mxu0 0.0
    %584 = vmatpush1.msra.mxu0 %v96
    %585 = vmatprep.subr.mxu0 0.0
    %586 = vmatpush1.msra.mxu0 %v97
    %587 = vmatprep.subr.mxu0 0.0
    %588 = vmatpush1.msra.mxu0 %v98
    %589 = vmatprep.subr.mxu0 0.0
    %590 = vmatpush1.msra.mxu0 %v99
    %591 = vmatprep.subr.mxu0 0.0
    %592 = vmatpush1.msra.mxu0 %v100
    %593 = vmatprep.subr.mxu0 0.0
    %594 = vmatpush1.msra.mxu0 %v101
    %595 = vmatprep.subr.mxu0 0.0
    %596 = vmatpush1.msra.mxu0 %v102
    %597 = vmatprep.subr.mxu0 0.0
    %598 = vmatpush1.msra.mxu0 %v103
    %599 = vmatprep.subr.mxu0 0.0
    %600 = vmatpush1.msra.mxu0 %v104
    %601 = vmatprep.subr.mxu0 0.0
    %602 = vmatpush1.msra.mxu0 %v105
    %603 = vmatprep.subr.mxu0 0.0
    %604 = vmatpush1.msra.mxu0 %v106
    %605 = vmatprep.subr.mxu0 0.0
    %606 = vmatpush1.msra.mxu0 0.0
    %607 = vmatprep.subr.mxu0 0.0
    %608 = vmatpush1.msra.mxu0 0.0
    %609 = vmatprep.subr.mxu0 0.0
    %610 = vmatpush1.msra.mxu0 0.0
    %611 = vmatprep.subr.mxu0 0.0
    %612 = vmatpush1.msra.mxu0 0.0
    %613 = vmatprep.subr.mxu0 0.0
    %614 = vmatpush1.msra.mxu0 0.0
    %615 = vmatprep.subr.mxu0 0.0
    %616 = vmatpush1.msra.mxu0 0.0
    %617 = vmatprep.subr.mxu0 0.0
    %618 = vmatpush1.msra.mxu0 0.0
    %619 = vmatprep.subr.mxu0 0.0
    %620 = vmatpush1.msra.mxu0 0.0
    %621 = vmatprep.subr.mxu0 0.0
    %622 = vmatpush1.msra.mxu0 0.0
    %623 = vmatprep.subr.mxu0 0.0
    %624 = vmatpush1.msra.mxu0 0.0
    %625 = vmatprep.subr.mxu0 0.0
    %626 = vmatpush1.msra.mxu0 0.0
    %627 = vmatprep.subr.mxu0 0.0
    %628 = vmatpush1.msra.mxu0 0.0
    %629 = vmatprep.subr.mxu0 0.0
    %630 = vmatpush1.msra.mxu0 0.0
    %631 = vmatprep.subr.mxu0 0.0
    %632 = vmatpush1.msra.mxu0 0.0
    %633 = vmatprep.subr.mxu0 0.0
    %634 = vmatpush1.msra.mxu0 0.0
    %635 = vmatprep.subr.mxu0 0.0
    %636 = vmatpush1.msra.mxu0 0.0
    %637 = vmatprep.mubr.f32.mxu0 0.0
    %638 = vmatmul.mubr.f32.gmra.mrb[0].mxu0 %v27
    %v639 = vpop.f32.mrb[0].mxu0
    %v640 = vadd.f32 %v255, %v639
    %v641 = vpop.f32.mrb[0].mxu0
    %642 = vmatprep.mubr.f32.mxu0 0.0
    %643 = vmatmul.mubr.f32.gmra.mrb[0].mxu0 %v28
    %v644 = vpop.f32.mrb[0].mxu0
    %v645 = vadd.f32 %v260, %v644
    %v646 = vpop.f32.mrb[0].mxu0
    %647 = vmatprep.mubr.f32.mxu0 0.0
    %648 = vmatmul.mubr.f32.gmra.mrb[0].mxu0 %v29
    %v649 = vpop.f32.mrb[0].mxu0
    %v650 = vadd.f32 %v265, %v649
    %v651 = vpop.f32.mrb[0].mxu0
    %652 = vmatprep.mubr.f32.mxu0 0.0
    %653 = vmatmul.mubr.f32.gmra.mrb[0].mxu0 %v30
    %v654 = vpop.f32.mrb[0].mxu0
    %v655 = vadd.f32 %v270, %v654
    %v656 = vpop.f32.mrb[0].mxu0
    %657 = vmatprep.mubr.f32.mxu0 0.0
    %658 = vmatmul.mubr.f32.gmra.mrb[0].mxu0 %v31
    %v659 = vpop.f32.mrb[0].mxu0
    %v660 = vadd.f32 %v275, %v659
    %v661 = vpop.f32.mrb[0].mxu0
    %662 = vmatprep.mubr.f32.mxu0 0.0
    %663 = vmatmul.mubr.f32.gmra.mrb[0].mxu0 %v32
    %v664 = vpop.f32.mrb[0].mxu0
    %v665 = vadd.f32 %v280, %v664
    %v666 = vpop.f32.mrb[0].mxu0
    %667 = vmatprep.mubr.f32.mxu0 0.0
    %668 = vmatmul.mubr.f32.gmra.mrb[0].mxu0 %v33
    %v669 = vpop.f32.mrb[0].mxu0
    %v670 = vadd.f32 %v285, %v669
    %v671 = vpop.f32.mrb[0].mxu0
    %672 = vmatprep.mubr.f32.mxu0 0.0
    %673 = vmatmul.mubr.f32.gmra.mrb[0].mxu0 %v34
    %v674 = vpop.f32.mrb[0].mxu0
    %v675 = vadd.f32 %v290, %v674
    %v676 = vpop.f32.mrb[0].mxu0
    %677 = vmatprep.mubr.f32.mxu0 0.0
    %678 = vmatmul.mubr.f32.gmra.mrb[0].mxu0 %v35
    %v679 = vpop.f32.mrb[0].mxu0
    %v680 = vadd.f32 %v295, %v679
    %v681 = vpop.f32.mrb[0].mxu0
    %682 = vmatprep.mubr.f32.mxu0 0.0
    %683 = vmatmul.mubr.f32.gmra.mrb[0].mxu0 %v36
    %v684 = vpop.f32.mrb[0].mxu0
    %v685 = vadd.f32 %v300, %v684
    %v686 = vpop.f32.mrb[0].mxu0
    %687 = vmatprep.mubr.f32.mxu0 0.0
    %688 = vmatmul.mubr.f32.gmra.mrb[0].mxu0 %v37
    %v689 = vpop.f32.mrb[0].mxu0
    %v690 = vadd.f32 %v305, %v689
    %v691 = vpop.f32.mrb[0].mxu0
    %692 = vmatprep.mubr.f32.mxu0 0.0
    %693 = vmatmul.mubr.f32.gmra.mrb[0].mxu0 %v38
    %v694 = vpop.f32.mrb[0].mxu0
    %v695 = vadd.f32 %v310, %v694
    %v696 = vpop.f32.mrb[0].mxu0
    %697 = vmatprep.mubr.f32.mxu0 0.0
    %698 = vmatmul.mubr.f32.gmra.mrb[0].mxu0 %v39
    %v699 = vpop.f32.mrb[0].mxu0
    %v700 = vadd.f32 %v315, %v699
    %v701 = vpop.f32.mrb[0].mxu0
    %702 = vmatprep.mubr.f32.mxu0 0.0
    %703 = vmatmul.mubr.f32.gmra.mrb[0].mxu0 %v40
    %v704 = vpop.f32.mrb[0].mxu0
    %v705 = vadd.f32 %v320, %v704
    %v706 = vpop.f32.mrb[0].mxu0
    %707 = vmatprep.mubr.f32.mxu0 0.0
    %708 = vmatmul.mubr.f32.gmra.mrb[0].mxu0 %v41
    %v709 = vpop.f32.mrb[0].mxu0
    %v710 = vadd.f32 %v325, %v709
    %v711 = vpop.f32.mrb[0].mxu0
    %712 = vmatprep.mubr.f32.mxu0 0.0
    %713 = vmatmul.mubr.f32.gmra.mrb[0].mxu0 %v42
    %v714 = vpop.f32.mrb[0].mxu0
    %v715 = vadd.f32 %v330, %v714
    %v716 = vpop.f32.mrb[0].mxu0
    %717 = vmatprep.mubr.f32.mxu0 0.0
    %718 = vmatmul.mubr.f32.gmra.mrb[0].mxu0 %v43
    %v719 = vpop.f32.mrb[0].mxu0
    %v720 = vadd.f32 %v335, %v719
    %v721 = vpop.f32.mrb[0].mxu0
    %722 = vmatprep.mubr.f32.mxu0 0.0
    %723 = vmatmul.mubr.f32.gmra.mrb[0].mxu0 %v44
    %v724 = vpop.f32.mrb[0].mxu0
    %v725 = vadd.f32 %v340, %v724
    %v726 = vpop.f32.mrb[0].mxu0
    %727 = vmatprep.mubr.f32.mxu0 0.0
    %728 = vmatmul.mubr.f32.gmra.mrb[0].mxu0 %v45
    %v729 = vpop.f32.mrb[0].mxu0
    %v730 = vadd.f32 %v345, %v729
    %v731 = vpop.f32.mrb[0].mxu0
    %732 = vmatprep.mubr.f32.mxu0 0.0
    %733 = vmatmul.mubr.f32.gmra.mrb[0].mxu0 %v46
    %v734 = vpop.f32.mrb[0].mxu0
    %v735 = vadd.f32 %v350, %v734
    %v736 = vpop.f32.mrb[0].mxu0
    %737 = vmatprep.mubr.f32.mxu0 0.0
    %738 = vmatmul.mubr.f32.gmra.mrb[0].mxu0 %v47
    %v739 = vpop.f32.mrb[0].mxu0
    %v740 = vadd.f32 %v355, %v739
    %v741 = vpop.f32.mrb[0].mxu0
    %742 = vmatprep.mubr.f32.mxu0 0.0
    %743 = vmatmul.mubr.f32.gmra.mrb[0].mxu0 %v48
    %v744 = vpop.f32.mrb[0].mxu0
    %v745 = vadd.f32 %v360, %v744
    %v746 = vpop.f32.mrb[0].mxu0
    %747 = vmatprep.mubr.f32.mxu0 0.0
    %748 = vmatmul.mubr.f32.gmra.mrb[0].mxu0 %v49
    %v749 = vpop.f32.mrb[0].mxu0
    %v750 = vadd.f32 %v365, %v749
    %v751 = vpop.f32.mrb[0].mxu0
    %752 = vmatprep.mubr.f32.mxu0 0.0
    %753 = vmatmul.mubr.f32.gmra.mrb[0].mxu0 %v50
    %v754 = vpop.f32.mrb[0].mxu0
    %v755 = vadd.f32 %v370, %v754
    %v756 = vpop.f32.mrb[0].mxu0
    %757 = vmatprep.mubr.f32.mxu0 0.0
    %758 = vmatmul.mubr.f32.gmra.mrb[0].mxu0 %v51
    %v759 = vpop.f32.mrb[0].mxu0
    %v760 = vadd.f32 %v375, %v759
    %v761 = vpop.f32.mrb[0].mxu0
    %762 = vmatprep.mubr.f32.mxu0 0.0
    %763 = vmatmul.mubr.f32.gmra.mrb[0].mxu0 %v52
    %v764 = vpop.f32.mrb[0].mxu0
    %v765 = vadd.f32 %v380, %v764
    %v766 = vpop.f32.mrb[0].mxu0
    %767 = vmatprep.mubr.f32.mxu0 0.0
    %768 = vmatmul.mubr.f32.gmra.mrb[0].mxu0 %v53
    %v769 = vpop.f32.mrb[0].mxu0
    %v770 = vadd.f32 %v385, %v769
    %v771 = vpop.f32.mrb[0].mxu0
    %772 = vmatprep.mubr.f32.mxu0 0.0
    %773 = vmatmul.mubr.f32.gmra.mrb[0].mxu0 %v54
    %v774 = vpop.f32.mrb[0].mxu0
    %v775 = vadd.f32 %v390, %v774
    %v776 = vpop.f32.mrb[0].mxu0
    %777 = vmatprep.mubr.f32.mxu0 0.0
    %778 = vmatmul.mubr.f32.gmra.mrb[0].mxu0 %v55
    %v779 = vpop.f32.mrb[0].mxu0
    %v780 = vadd.f32 %v395, %v779
    %v781 = vpop.f32.mrb[0].mxu0
    %782 = vmatprep.mubr.f32.mxu0 0.0
    %783 = vmatmul.mubr.f32.gmra.mrb[0].mxu0 %v56
    %v784 = vpop.f32.mrb[0].mxu0
    %v785 = vadd.f32 %v400, %v784
    %v786 = vpop.f32.mrb[0].mxu0
    %787 = vmatprep.mubr.f32.mxu0 0.0
    %788 = vmatmul.mubr.f32.gmra.mrb[0].mxu0 %v57
    %v789 = vpop.f32.mrb[0].mxu0
    %v790 = vadd.f32 %v405, %v789
    %v791 = vpop.f32.mrb[0].mxu0
    %792 = vmatprep.mubr.f32.mxu0 0.0
    %793 = vmatmul.mubr.f32.gmra.mrb[0].mxu0 %v58
    %v794 = vpop.f32.mrb[0].mxu0
    %v795 = vadd.f32 %v410, %v794
    %v796 = vpop.f32.mrb[0].mxu0
    %797 = vmatprep.mubr.f32.mxu0 0.0
    %798 = vmatmul.mubr.f32.gmra.mrb[0].mxu0 %v59
    %v799 = vpop.f32.mrb[0].mxu0
    %v800 = vadd.f32 %v415, %v799
    %v801 = vpop.f32.mrb[0].mxu0
    %802 = vmatprep.mubr.f32.mxu0 0.0
    %803 = vmatmul.mubr.f32.gmra.mrb[0].mxu0 %v60
    %v804 = vpop.f32.mrb[0].mxu0
    %v805 = vadd.f32 %v420, %v804
    %v806 = vpop.f32.mrb[0].mxu0
    %807 = vmatprep.mubr.f32.mxu0 0.0
    %808 = vmatmul.mubr.f32.gmra.mrb[0].mxu0 %v61
    %v809 = vpop.f32.mrb[0].mxu0
    %v810 = vadd.f32 %v425, %v809
    %v811 = vpop.f32.mrb[0].mxu0
    %812 = vmatprep.mubr.f32.mxu0 0.0
    %813 = vmatmul.mubr.f32.gmra.mrb[0].mxu0 %v62
    %v814 = vpop.f32.mrb[0].mxu0
    %v815 = vadd.f32 %v430, %v814
    %v816 = vpop.f32.mrb[0].mxu0
    %817 = vmatprep.mubr.f32.mxu0 0.0
    %818 = vmatmul.mubr.f32.gmra.mrb[0].mxu0 %v63
    %v819 = vpop.f32.mrb[0].mxu0
    %v820 = vadd.f32 %v435, %v819
    %v821 = vpop.f32.mrb[0].mxu0
    %822 = vmatprep.mubr.f32.mxu0 0.0
    %823 = vmatmul.mubr.f32.gmra.mrb[0].mxu0 %v64
    %v824 = vpop.f32.mrb[0].mxu0
    %v825 = vadd.f32 %v440, %v824
    %v826 = vpop.f32.mrb[0].mxu0
    %827 = vmatprep.mubr.f32.mxu0 0.0
    %828 = vmatmul.mubr.f32.gmra.mrb[0].mxu0 %v65
    %v829 = vpop.f32.mrb[0].mxu0
    %v830 = vadd.f32 %v445, %v829
    %v831 = vpop.f32.mrb[0].mxu0
    %832 = vmatprep.mubr.f32.mxu0 0.0
    %833 = vmatmul.mubr.f32.gmra.mrb[0].mxu0 %v66
    %v834 = vpop.f32.mrb[0].mxu0
    %v835 = vadd.f32 %v450, %v834
    %v836 = vpop.f32.mrb[0].mxu0
    %837 = vmatprep.mubr.f32.mxu0 0.0
    %838 = vmatmul.mubr.f32.gmra.mrb[0].mxu0 %v67
    %v839 = vpop.f32.mrb[0].mxu0
    %v840 = vadd.f32 %v455, %v839
    %v841 = vpop.f32.mrb[0].mxu0
    %842 = vmatprep.mubr.f32.mxu0 0.0
    %843 = vmatmul.mubr.f32.gmra.mrb[0].mxu0 %v68
    %v844 = vpop.f32.mrb[0].mxu0
    %v845 = vadd.f32 %v460, %v844
    %v846 = vpop.f32.mrb[0].mxu0
    %847 = vmatprep.mubr.f32.mxu0 0.0
    %848 = vmatmul.mubr.f32.gmra.mrb[0].mxu0 %v69
    %v849 = vpop.f32.mrb[0].mxu0
    %v850 = vadd.f32 %v465, %v849
    %v851 = vpop.f32.mrb[0].mxu0
    %852 = vmatprep.mubr.f32.mxu0 0.0
    %853 = vmatmul.mubr.f32.gmra.mrb[0].mxu0 %v70
    %v854 = vpop.f32.mrb[0].mxu0
    %v855 = vadd.f32 %v470, %v854
    %v856 = vpop.f32.mrb[0].mxu0
    %857 = vmatprep.mubr.f32.mxu0 0.0
    %858 = vmatmul.mubr.f32.gmra.mrb[0].mxu0 %v71
    %v859 = vpop.f32.mrb[0].mxu0
    %v860 = vadd.f32 %v475, %v859
    %v861 = vpop.f32.mrb[0].mxu0
    %862 = vmatprep.mubr.f32.mxu0 0.0
    %863 = vmatmul.mubr.f32.gmra.mrb[0].mxu0 %v72
    %v864 = vpop.f32.mrb[0].mxu0
    %v865 = vadd.f32 %v480, %v864
    %v866 = vpop.f32.mrb[0].mxu0
    %867 = vmatprep.mubr.f32.mxu0 0.0
    %868 = vmatmul.mubr.f32.gmra.mrb[0].mxu0 %v73
    %v869 = vpop.f32.mrb[0].mxu0
    %v870 = vadd.f32 %v485, %v869
    %v871 = vpop.f32.mrb[0].mxu0
    %872 = vmatprep.mubr.f32.mxu0 0.0
    %873 = vmatmul.mubr.f32.gmra.mrb[0].mxu0 %v74
    %v874 = vpop.f32.mrb[0].mxu0
    %v875 = vadd.f32 %v490, %v874
    %v876 = vpop.f32.mrb[0].mxu0
    %877 = vmatprep.mubr.f32.mxu0 0.0
    %878 = vmatmul.mubr.f32.gmra.mrb[0].mxu0 %v75
    %v879 = vpop.f32.mrb[0].mxu0
    %v880 = vadd.f32 %v495, %v879
    %v881 = vpop.f32.mrb[0].mxu0
    %882 = vmatprep.mubr.f32.mxu0 0.0
    %883 = vmatmul.mubr.f32.gmra.mrb[0].mxu0 %v76
    %v884 = vpop.f32.mrb[0].mxu0
    %v885 = vadd.f32 %v500, %v884
    %v886 = vpop.f32.mrb[0].mxu0
    %887 = vmatprep.mubr.f32.mxu0 0.0
    %888 = vmatmul.mubr.f32.gmra.mrb[0].mxu0 %v77
    %v889 = vpop.f32.mrb[0].mxu0
    %v890 = vadd.f32 %v505, %v889
    %v891 = vpop.f32.mrb[0].mxu0
    %892 = vmatprep.mubr.f32.mxu0 0.0
    %893 = vmatmul.mubr.f32.gmra.mrb[0].mxu0 %v78
    %v894 = vpop.f32.mrb[0].mxu0
    %v895 = vadd.f32 %v510, %v894
    %v896 = vpop.f32.mrb[0].mxu0
    %897 = vmatprep.mubr.f32.mxu0 0.0
    %898 = vmatmul.mubr.f32.gmra.mrb[0].mxu0 %v79
    %v899 = vpop.f32.mrb[0].mxu0
    %v900 = vadd.f32 %v515, %v899
    %v901 = vpop.f32.mrb[0].mxu0
    %902 = vmatprep.mubr.f32.mxu0 0.0
    %903 = vmatmul.mubr.f32.gmra.mrb[0].mxu0 %v80
    %v904 = vpop.f32.mrb[0].mxu0
    %v905 = vadd.f32 %v520, %v904
    %v906 = vpop.f32.mrb[0].mxu0
    %907 = vmatprep.mubr.f32.mxu0 0.0
    %908 = vmatmul.mubr.f32.gmra.mrb[0].mxu0 %v81
    %v909 = vpop.f32.mrb[0].mxu0
    %v910 = vadd.f32 %v525, %v909
    %v911 = vpop.f32.mrb[0].mxu0
    %912 = vmatprep.mubr.f32.mxu0 0.0
    %913 = vmatmul.mubr.f32.gmra.mrb[0].mxu0 %v82
    %v914 = vpop.f32.mrb[0].mxu0
    %v915 = vadd.f32 %v530, %v914
    %v916 = vpop.f32.mrb[0].mxu0
    %917 = vmatprep.mubr.f32.mxu0 0.0
    %918 = vmatmul.mubr.f32.gmra.mrb[0].mxu0 %v83
    %v919 = vpop.f32.mrb[0].mxu0
    %v920 = vadd.f32 %v535, %v919
    %v921 = vpop.f32.mrb[0].mxu0
    %922 = vmatprep.mubr.f32.mxu0 0.0
    %923 = vmatmul.mubr.f32.gmra.mrb[0].mxu0 %v84
    %v924 = vpop.f32.mrb[0].mxu0
    %v925 = vadd.f32 %v540, %v924
    %v926 = vpop.f32.mrb[0].mxu0
    %927 = vmatprep.mubr.f32.mxu0 0.0
    %928 = vmatmul.mubr.f32.gmra.mrb[0].mxu0 %v85
    %v929 = vpop.f32.mrb[0].mxu0
    %v930 = vadd.f32 %v545, %v929
    %v931 = vpop.f32.mrb[0].mxu0
    %932 = vmatprep.mubr.f32.mxu0 0.0
    %933 = vmatmul.mubr.f32.gmra.mrb[0].mxu0 %v86
    %v934 = vpop.f32.mrb[0].mxu0
    %v935 = vadd.f32 %v550, %v934
    %v936 = vpop.f32.mrb[0].mxu0
    %937 = vmatprep.mubr.f32.mxu0 0.0
    %938 = vmatmul.mubr.f32.gmra.mrb[0].mxu0 %v87
    %v939 = vpop.f32.mrb[0].mxu0
    %v940 = vadd.f32 %v555, %v939
    %v941 = vpop.f32.mrb[0].mxu0
    %942 = vmatprep.mubr.f32.mxu0 0.0
    %943 = vmatmul.mubr.f32.gmra.mrb[0].mxu0 %v88
    %v944 = vpop.f32.mrb[0].mxu0
    %v945 = vadd.f32 %v560, %v944
    %v946 = vpop.f32.mrb[0].mxu0
    %947 = vmatprep.mubr.f32.mxu0 0.0
    %948 = vmatmul.mubr.f32.gmra.mrb[0].mxu0 %v89
    %v949 = vpop.f32.mrb[0].mxu0
    %v950 = vadd.f32 %v565, %v949
    %v951 = vpop.f32.mrb[0].mxu0
    %952 = vmatprep.mubr.f32.mxu0 0.0
    %953 = vmatmul.mubr.f32.gmra.mrb[0].mxu0 %v90
    %v954 = vpop.f32.mrb[0].mxu0
    %v955 = vadd.f32 %v570, %v954
    %v956 = vpop.f32.mrb[0].mxu0
    %957 = vdwg.mxu0
    %v958 = vld [vmem:[%s0 + $0x2] sm:$0xff]
    %v959 = vld [vmem:[%s0 + $0xa] sm:$0xff]
    %v960 = vld [vmem:[%s0 + $0x12] sm:$0xff]
    %v961 = vld [vmem:[%s0 + $0x1a] sm:$0xff]
    %v962 = vld [vmem:[%s0 + $0x2a] sm:$0xff]
    %v963 = vld [vmem:[%s0 + $0x32] sm:$0xff]
    %v964 = vld [vmem:[%s0 + $0x3a] sm:$0xff]
    %v965 = vld [vmem:[%s0 + $0x42] sm:$0xff]
    %v966 = vld [vmem:[%s0 + $0x52] sm:$0xff]
    %v967 = vld [vmem:[%s0 + $0x5a] sm:$0xff]
    %v968 = vld [vmem:[%s0 + $0x62] sm:$0xff]
    %v969 = vld [vmem:[%s0 + $0x6a] sm:$0xff]
    %v970 = vld [vmem:[%s0 + $0x7a] sm:$0xff]
    %v971 = vld [vmem:[%s0 + $0x82] sm:$0xff]
    %v972 = vld [vmem:[%s0 + $0x8a] sm:$0xff]
    %v973 = vld [vmem:[%s0 + $0x92] sm:$0xff]
    %v974 = vld [vmem:[%s0 + $0xa2] sm:$0xff]
    %v975 = vld [vmem:[%s0 + $0xaa] sm:$0xff]
    %v976 = vld [vmem:[%s0 + $0xb2] sm:$0xff]
    %v977 = vld [vmem:[%s0 + $0xba] sm:$0xff]
    %v978 = vld [vmem:[%s0 + $0xca] sm:$0xff]
    %v979 = vld [vmem:[%s0 + $0xd2] sm:$0xff]
    %v980 = vld [vmem:[%s0 + $0xda] sm:$0xff]
    %v981 = vld [vmem:[%s0 + $0xe2] sm:$0xff]
    %v982 = vld [vmem:[%s0 + $0xf2] sm:$0xff]
    %v983 = vld [vmem:[%s0 + $0xfa] sm:$0xff]
    %v984 = vld [vmem:[%s0 + $0x102] sm:$0xff]
    %v985 = vld [vmem:[%s0 + $0x10a] sm:$0xff]
    %v986 = vld [vmem:[%s0 + $0x11a] sm:$0xff]
    %v987 = vld [vmem:[%s0 + $0x122] sm:$0xff]
    %v988 = vld [vmem:[%s0 + $0x12a] sm:$0xff]
    %v989 = vld [vmem:[%s0 + $0x132] sm:$0xff]
    %v990 = vld [vmem:[%s0 + $0x192] sm:$0xff]
    %v991 = vld [vmem:[%s0 + $0x19a] sm:$0xff]
    %v992 = vld [vmem:[%s0 + $0x1a2] sm:$0xff]
    %v993 = vld [vmem:[%s0 + $0x1aa] sm:$0xff]
    %v994 = vld [vmem:[%s0 + $0x1ba] sm:$0xff]
    %v995 = vld [vmem:[%s0 + $0x1c2] sm:$0xff]
    %v996 = vld [vmem:[%s0 + $0x1ca] sm:$0xff]
    %v997 = vld [vmem:[%s0 + $0x1d2] sm:$0xff]
    %v998 = vld [vmem:[%s0 + $0x1e2] sm:$0xff]
    %v999 = vld [vmem:[%s0 + $0x1ea] sm:$0xff]
    %v1000 = vld [vmem:[%s0 + $0x1f2] sm:$0xff]
    %v1001 = vld [vmem:[%s0 + $0x1fa] sm:$0xff]
    %v1002 = vld [vmem:[%s0 + $0x20a] sm:$0xff]
    %v1003 = vld [vmem:[%s0 + $0x212] sm:$0xff]
    %v1004 = vld [vmem:[%s0 + $0x21a] sm:$0xff]
    %v1005 = vld [vmem:[%s0 + $0x222] sm:$0xff]
    %v1006 = vld [vmem:[%s0 + $0x232] sm:$0xff]
    %v1007 = vld [vmem:[%s0 + $0x23a] sm:$0xff]
    %v1008 = vld [vmem:[%s0 + $0x242] sm:$0xff]
    %v1009 = vld [vmem:[%s0 + $0x24a] sm:$0xff]
    %v1010 = vld [vmem:[%s0 + $0x25a] sm:$0xff]
    %v1011 = vld [vmem:[%s0 + $0x262] sm:$0xff]
    %v1012 = vld [vmem:[%s0 + $0x26a] sm:$0xff]
    %v1013 = vld [vmem:[%s0 + $0x272] sm:$0xff]
    %v1014 = vld [vmem:[%s0 + $0x282] sm:$0xff]
    %v1015 = vld [vmem:[%s0 + $0x28a] sm:$0xff]
    %v1016 = vld [vmem:[%s0 + $0x292] sm:$0xff]
    %v1017 = vld [vmem:[%s0 + $0x29a] sm:$0xff]
    %v1018 = vld [vmem:[%s0 + $0x2aa] sm:$0xff]
    %v1019 = vld [vmem:[%s0 + $0x2b2] sm:$0xff]
    %v1020 = vld [vmem:[%s0 + $0x2ba] sm:$0xff]
    %v1021 = vld [vmem:[%s0 + $0x2c2] sm:$0xff]
    %s1022 = scalar_lea.vmem %s2, 256
    %v1023 = vld [vmem:[%s1022] sm:$0xff]
    %v1024 = vld [vmem:[%s1022 + $0x8] sm:$0xff]
    %v1025 = vld [vmem:[%s1022 + $0x10] sm:$0xff]
    %v1026 = vld [vmem:[%s1022 + $0x18] sm:$0xff]
    %v1027 = vld [vmem:[%s1022 + $0x20] sm:$0xff]
    %v1028 = vld [vmem:[%s1022 + $0x28] sm:$0xff]
    %v1029 = vld [vmem:[%s1022 + $0x30] sm:$0xff]
    %v1030 = vld [vmem:[%s1022 + $0x38] sm:$0xff]
    %v1031 = vld [vmem:[%s1022 + $0x40] sm:$0xff]
    %v1032 = vld [vmem:[%s1022 + $0x48] sm:$0xff]
    %v1033 = vld [vmem:[%s1022 + $0x50] sm:$0xff]
    %v1034 = vld [vmem:[%s1022 + $0x58] sm:$0xff]
    %v1035 = vld [vmem:[%s1022 + $0x60] sm:$0xff]
    %v1036 = vld [vmem:[%s1022 + $0x68] sm:$0xff]
    %v1037 = vld [vmem:[%s1022 + $0x70] sm:$0xff]
    %v1038 = vld [vmem:[%s1022 + $0x78] sm:$0xff]
    %1039 = vmatprep.subr.mxu0 0.0
    %1040 = vmatpush1.msra.mxu0 %v1023
    %1041 = vmatprep.subr.mxu0 0.0
    %1042 = vmatpush1.msra.mxu0 %v1024
    %1043 = vmatprep.subr.mxu0 0.0
    %1044 = vmatpush1.msra.mxu0 %v1025
    %1045 = vmatprep.subr.mxu0 0.0
    %1046 = vmatpush1.msra.mxu0 %v1026
    %1047 = vmatprep.subr.mxu0 0.0
    %1048 = vmatpush1.msra.mxu0 %v1027
    %1049 = vmatprep.subr.mxu0 0.0
    %1050 = vmatpush1.msra.mxu0 %v1028
    %1051 = vmatprep.subr.mxu0 0.0
    %1052 = vmatpush1.msra.mxu0 %v1029
    %1053 = vmatprep.subr.mxu0 0.0
    %1054 = vmatpush1.msra.mxu0 %v1030
    %1055 = vmatprep.subr.mxu0 0.0
    %1056 = vmatpush1.msra.mxu0 %v1031
    %1057 = vmatprep.subr.mxu0 0.0
    %1058 = vmatpush1.msra.mxu0 %v1032
    %1059 = vmatprep.subr.mxu0 0.0
    %1060 = vmatpush1.msra.mxu0 %v1033
    %1061 = vmatprep.subr.mxu0 0.0
    %1062 = vmatpush1.msra.mxu0 %v1034
    %1063 = vmatprep.subr.mxu0 0.0
    %1064 = vmatpush1.msra.mxu0 %v1035
    %1065 = vmatprep.subr.mxu0 0.0
    %1066 = vmatpush1.msra.mxu0 %v1036
    %1067 = vmatprep.subr.mxu0 0.0
    %1068 = vmatpush1.msra.mxu0 %v1037
    %1069 = vmatprep.subr.mxu0 0.0
    %1070 = vmatpush1.msra.mxu0 %v1038
    %1071 = vmatprep.subr.mxu0 0.0
    %1072 = vmatpush1.msra.mxu0 0.0
    %1073 = vmatprep.subr.mxu0 0.0
    %1074 = vmatpush1.msra.mxu0 0.0
    %1075 = vmatprep.subr.mxu0 0.0
    %1076 = vmatpush1.msra.mxu0 0.0
    %1077 = vmatprep.subr.mxu0 0.0
    %1078 = vmatpush1.msra.mxu0 0.0
    %1079 = vmatprep.subr.mxu0 0.0
    %1080 = vmatpush1.msra.mxu0 0.0
    %1081 = vmatprep.subr.mxu0 0.0
    %1082 = vmatpush1.msra.mxu0 0.0
    %1083 = vmatprep.subr.mxu0 0.0
    %1084 = vmatpush1.msra.mxu0 0.0
    %1085 = vmatprep.subr.mxu0 0.0
    %1086 = vmatpush1.msra.mxu0 0.0
    %1087 = vmatprep.subr.mxu0 0.0
    %1088 = vmatpush1.msra.mxu0 0.0
    %1089 = vmatprep.subr.mxu0 0.0
    %1090 = vmatpush1.msra.mxu0 0.0
    %1091 = vmatprep.subr.mxu0 0.0
    %1092 = vmatpush1.msra.mxu0 0.0
    %1093 = vmatprep.subr.mxu0 0.0
    %1094 = vmatpush1.msra.mxu0 0.0
    %1095 = vmatprep.subr.mxu0 0.0
    %1096 = vmatpush1.msra.mxu0 0.0
    %1097 = vmatprep.subr.mxu0 0.0
    %1098 = vmatpush1.msra.mxu0 0.0
    %1099 = vmatprep.subr.mxu0 0.0
    %1100 = vmatpush1.msra.mxu0 0.0
    %1101 = vmatprep.subr.mxu0 0.0
    %1102 = vmatpush1.msra.mxu0 0.0
    %1103 = vmatprep.mubr.f32.mxu0 0.0
    %1104 = vmatmul.mubr.f32.gmra.mrb[0].mxu0 %v958
    %v1105 = vpop.f32.mrb[0].mxu0
    %v1106 = vadd.f32 0.0, %v1105
    %v1107 = vpop.f32.mrb[0].mxu0
    %1108 = vmatprep.mubr.f32.mxu0 0.0
    %1109 = vmatmul.mubr.f32.gmra.mrb[0].mxu0 %v959
    %v1110 = vpop.f32.mrb[0].mxu0
    %v1111 = vadd.f32 0.0, %v1110
    %v1112 = vpop.f32.mrb[0].mxu0
    %1113 = vmatprep.mubr.f32.mxu0 0.0
    %1114 = vmatmul.mubr.f32.gmra.mrb[0].mxu0 %v960
    %v1115 = vpop.f32.mrb[0].mxu0
    %v1116 = vadd.f32 0.0, %v1115
    %v1117 = vpop.f32.mrb[0].mxu0
    %1118 = vmatprep.mubr.f32.mxu0 0.0
    %1119 = vmatmul.mubr.f32.gmra.mrb[0].mxu0 %v961
    %v1120 = vpop.f32.mrb[0].mxu0
    %v1121 = vadd.f32 0.0, %v1120
    %v1122 = vpop.f32.mrb[0].mxu0
    %1123 = vmatprep.mubr.f32.mxu0 0.0
    %1124 = vmatmul.mubr.f32.gmra.mrb[0].mxu0 %v962
    %v1125 = vpop.f32.mrb[0].mxu0
    %v1126 = vadd.f32 0.0, %v1125
    %v1127 = vpop.f32.mrb[0].mxu0
    %1128 = vmatprep.mubr.f32.mxu0 0.0
    %1129 = vmatmul.mubr.f32.gmra.mrb[0].mxu0 %v963
    %v1130 = vpop.f32.mrb[0].mxu0
    %v1131 = vadd.f32 0.0, %v1130
    %v1132 = vpop.f32.mrb[0].mxu0
    %1133 = vmatprep.mubr.f32.mxu0 0.0
    %1134 = vmatmul.mubr.f32.gmra.mrb[0].mxu0 %v964
    %v1135 = vpop.f32.mrb[0].mxu0
    %v1136 = vadd.f32 0.0, %v1135
    %v1137 = vpop.f32.mrb[0].mxu0
    %1138 = vmatprep.mubr.f32.mxu0 0.0
    %1139 = vmatmul.mubr.f32.gmra.mrb[0].mxu0 %v965
    %v1140 = vpop.f32.mrb[0].mxu0
    %v1141 = vadd.f32 0.0, %v1140
    %v1142 = vpop.f32.mrb[0].mxu0
    %1143 = vmatprep.mubr.f32.mxu0 0.0
    %1144 = vmatmul.mubr.f32.gmra.mrb[0].mxu0 %v966
    %v1145 = vpop.f32.mrb[0].mxu0
    %v1146 = vadd.f32 0.0, %v1145
    %v1147 = vpop.f32.mrb[0].mxu0
    %1148 = vmatprep.mubr.f32.mxu0 0.0
    %1149 = vmatmul.mubr.f32.gmra.mrb[0].mxu0 %v967
    %v1150 = vpop.f32.mrb[0].mxu0
    %v1151 = vadd.f32 0.0, %v1150
    %v1152 = vpop.f32.mrb[0].mxu0
    %1153 = vmatprep.mubr.f32.mxu0 0.0
    %1154 = vmatmul.mubr.f32.gmra.mrb[0].mxu0 %v968
    %v1155 = vpop.f32.mrb[0].mxu0
    %v1156 = vadd.f32 0.0, %v1155
    %v1157 = vpop.f32.mrb[0].mxu0
    %1158 = vmatprep.mubr.f32.mxu0 0.0
    %1159 = vmatmul.mubr.f32.gmra.mrb[0].mxu0 %v969
    %v1160 = vpop.f32.mrb[0].mxu0
    %v1161 = vadd.f32 0.0, %v1160
    %v1162 = vpop.f32.mrb[0].mxu0
    %1163 = vmatprep.mubr.f32.mxu0 0.0
    %1164 = vmatmul.mubr.f32.gmra.mrb[0].mxu0 %v970
    %v1165 = vpop.f32.mrb[0].mxu0
    %v1166 = vadd.f32 0.0, %v1165
    %v1167 = vpop.f32.mrb[0].mxu0
    %1168 = vmatprep.mubr.f32.mxu0 0.0
    %1169 = vmatmul.mubr.f32.gmra.mrb[0].mxu0 %v971
    %v1170 = vpop.f32.mrb[0].mxu0
    %v1171 = vadd.f32 0.0, %v1170
    %v1172 = vpop.f32.mrb[0].mxu0
    %1173 = vmatprep.mubr.f32.mxu0 0.0
    %1174 = vmatmul.mubr.f32.gmra.mrb[0].mxu0 %v972
    %v1175 = vpop.f32.mrb[0].mxu0
    %v1176 = vadd.f32 0.0, %v1175
    %v1177 = vpop.f32.mrb[0].mxu0
    %1178 = vmatprep.mubr.f32.mxu0 0.0
    %1179 = vmatmul.mubr.f32.gmra.mrb[0].mxu0 %v973
    %v1180 = vpop.f32.mrb[0].mxu0
    %v1181 = vadd.f32 0.0, %v1180
    %v1182 = vpop.f32.mrb[0].mxu0
    %1183 = vmatprep.mubr.f32.mxu0 0.0
    %1184 = vmatmul.mubr.f32.gmra.mrb[0].mxu0 %v974
    %v1185 = vpop.f32.mrb[0].mxu0
    %v1186 = vadd.f32 0.0, %v1185
    %v1187 = vpop.f32.mrb[0].mxu0
    %1188 = vmatprep.mubr.f32.mxu0 0.0
    %1189 = vmatmul.mubr.f32.gmra.mrb[0].mxu0 %v975
    %v1190 = vpop.f32.mrb[0].mxu0
    %v1191 = vadd.f32 0.0, %v1190
    %v1192 = vpop.f32.mrb[0].mxu0
    %1193 = vmatprep.mubr.f32.mxu0 0.0
    %1194 = vmatmul.mubr.f32.gmra.mrb[0].mxu0 %v976
    %v1195 = vpop.f32.mrb[0].mxu0
    %v1196 = vadd.f32 0.0, %v1195
    %v1197 = vpop.f32.mrb[0].mxu0
    %1198 = vmatprep.mubr.f32.mxu0 0.0
    %1199 = vmatmul.mubr.f32.gmra.mrb[0].mxu0 %v977
    %v1200 = vpop.f32.mrb[0].mxu0
    %v1201 = vadd.f32 0.0, %v1200
    %v1202 = vpop.f32.mrb[0].mxu0
    %1203 = vmatprep.mubr.f32.mxu0 0.0
    %1204 = vmatmul.mubr.f32.gmra.mrb[0].mxu0 %v978
    %v1205 = vpop.f32.mrb[0].mxu0
    %v1206 = vadd.f32 0.0, %v1205
    %v1207 = vpop.f32.mrb[0].mxu0
    %1208 = vmatprep.mubr.f32.mxu0 0.0
    %1209 = vmatmul.mubr.f32.gmra.mrb[0].mxu0 %v979
    %v1210 = vpop.f32.mrb[0].mxu0
    %v1211 = vadd.f32 0.0, %v1210
    %v1212 = vpop.f32.mrb[0].mxu0
    %1213 = vmatprep.mubr.f32.mxu0 0.0
    %1214 = vmatmul.mubr.f32.gmra.mrb[0].mxu0 %v980
    %v1215 = vpop.f32.mrb[0].mxu0
    %v1216 = vadd.f32 0.0, %v1215
    %v1217 = vpop.f32.mrb[0].mxu0
    %1218 = vmatprep.mubr.f32.mxu0 0.0
    %1219 = vmatmul.mubr.f32.gmra.mrb[0].mxu0 %v981
    %v1220 = vpop.f32.mrb[0].mxu0
    %v1221 = vadd.f32 0.0, %v1220
    %v1222 = vpop.f32.mrb[0].mxu0
    %1223 = vmatprep.mubr.f32.mxu0 0.0
    %1224 = vmatmul.mubr.f32.gmra.mrb[0].mxu0 %v982
    %v1225 = vpop.f32.mrb[0].mxu0
    %v1226 = vadd.f32 0.0, %v1225
    %v1227 = vpop.f32.mrb[0].mxu0
    %1228 = vmatprep.mubr.f32.mxu0 0.0
    %1229 = vmatmul.mubr.f32.gmra.mrb[0].mxu0 %v983
    %v1230 = vpop.f32.mrb[0].mxu0
    %v1231 = vadd.f32 0.0, %v1230
    %v1232 = vpop.f32.mrb[0].mxu0
    %1233 = vmatprep.mubr.f32.mxu0 0.0
    %1234 = vmatmul.mubr.f32.gmra.mrb[0].mxu0 %v984
    %v1235 = vpop.f32.mrb[0].mxu0
    %v1236 = vadd.f32 0.0, %v1235
    %v1237 = vpop.f32.mrb[0].mxu0
    %1238 = vmatprep.mubr.f32.mxu0 0.0
    %1239 = vmatmul.mubr.f32.gmra.mrb[0].mxu0 %v985
    %v1240 = vpop.f32.mrb[0].mxu0
    %v1241 = vadd.f32 0.0, %v1240
    %v1242 = vpop.f32.mrb[0].mxu0
    %1243 = vmatprep.mubr.f32.mxu0 0.0
    %1244 = vmatmul.mubr.f32.gmra.mrb[0].mxu0 %v986
    %v1245 = vpop.f32.mrb[0].mxu0
    %v1246 = vadd.f32 0.0, %v1245
    %v1247 = vpop.f32.mrb[0].mxu0
    %1248 = vmatprep.mubr.f32.mxu0 0.0
    %1249 = vmatmul.mubr.f32.gmra.mrb[0].mxu0 %v987
    %v1250 = vpop.f32.mrb[0].mxu0
    %v1251 = vadd.f32 0.0, %v1250
    %v1252 = vpop.f32.mrb[0].mxu0
    %1253 = vmatprep.mubr.f32.mxu0 0.0
    %1254 = vmatmul.mubr.f32.gmra.mrb[0].mxu0 %v988
    %v1255 = vpop.f32.mrb[0].mxu0
    %v1256 = vadd.f32 0.0, %v1255
    %v1257 = vpop.f32.mrb[0].mxu0
    %1258 = vmatprep.mubr.f32.mxu0 0.0
    %1259 = vmatmul.mubr.f32.gmra.mrb[0].mxu0 %v989
    %v1260 = vpop.f32.mrb[0].mxu0
    %v1261 = vadd.f32 0.0, %v1260
    %v1262 = vpop.f32.mrb[0].mxu0
    %1263 = vmatprep.mubr.f32.mxu0 0.0
    %1264 = vmatmul.mubr.f32.gmra.mrb[0].mxu0 %v990
    %v1265 = vpop.f32.mrb[0].mxu0
    %v1266 = vadd.f32 0.0, %v1265
    %v1267 = vpop.f32.mrb[0].mxu0
    %1268 = vmatprep.mubr.f32.mxu0 0.0
    %1269 = vmatmul.mubr.f32.gmra.mrb[0].mxu0 %v991
    %v1270 = vpop.f32.mrb[0].mxu0
    %v1271 = vadd.f32 0.0, %v1270
    %v1272 = vpop.f32.mrb[0].mxu0
    %1273 = vmatprep.mubr.f32.mxu0 0.0
    %1274 = vmatmul.mubr.f32.gmra.mrb[0].mxu0 %v992
    %v1275 = vpop.f32.mrb[0].mxu0
    %v1276 = vadd.f32 0.0, %v1275
    %v1277 = vpop.f32.mrb[0].mxu0
    %1278 = vmatprep.mubr.f32.mxu0 0.0
    %1279 = vmatmul.mubr.f32.gmra.mrb[0].mxu0 %v993
    %v1280 = vpop.f32.mrb[0].mxu0
    %v1281 = vadd.f32 0.0, %v1280
    %v1282 = vpop.f32.mrb[0].mxu0
    %1283 = vmatprep.mubr.f32.mxu0 0.0
    %1284 = vmatmul.mubr.f32.gmra.mrb[0].mxu0 %v994
    %v1285 = vpop.f32.mrb[0].mxu0
    %v1286 = vadd.f32 0.0, %v1285
    %v1287 = vpop.f32.mrb[0].mxu0
    %1288 = vmatprep.mubr.f32.mxu0 0.0
    %1289 = vmatmul.mubr.f32.gmra.mrb[0].mxu0 %v995
    %v1290 = vpop.f32.mrb[0].mxu0
    %v1291 = vadd.f32 0.0, %v1290
    %v1292 = vpop.f32.mrb[0].mxu0
    %1293 = vmatprep.mubr.f32.mxu0 0.0
    %1294 = vmatmul.mubr.f32.gmra.mrb[0].mxu0 %v996
    %v1295 = vpop.f32.mrb[0].mxu0
    %v1296 = vadd.f32 0.0, %v1295
    %v1297 = vpop.f32.mrb[0].mxu0
    %1298 = vmatprep.mubr.f32.mxu0 0.0
    %1299 = vmatmul.mubr.f32.gmra.mrb[0].mxu0 %v997
    %v1300 = vpop.f32.mrb[0].mxu0
    %v1301 = vadd.f32 0.0, %v1300
    %v1302 = vpop.f32.mrb[0].mxu0
    %1303 = vmatprep.mubr.f32.mxu0 0.0
    %1304 = vmatmul.mubr.f32.gmra.mrb[0].mxu0 %v998
    %v1305 = vpop.f32.mrb[0].mxu0
    %v1306 = vadd.f32 0.0, %v1305
    %v1307 = vpop.f32.mrb[0].mxu0
    %1308 = vmatprep.mubr.f32.mxu0 0.0
    %1309 = vmatmul.mubr.f32.gmra.mrb[0].mxu0 %v999
    %v1310 = vpop.f32.mrb[0].mxu0
    %v1311 = vadd.f32 0.0, %v1310
    %v1312 = vpop.f32.mrb[0].mxu0
    %1313 = vmatprep.mubr.f32.mxu0 0.0
    %1314 = vmatmul.mubr.f32.gmra.mrb[0].mxu0 %v1000
    %v1315 = vpop.f32.mrb[0].mxu0
    %v1316 = vadd.f32 0.0, %v1315
    %v1317 = vpop.f32.mrb[0].mxu0
    %1318 = vmatprep.mubr.f32.mxu0 0.0
    %1319 = vmatmul.mubr.f32.gmra.mrb[0].mxu0 %v1001
    %v1320 = vpop.f32.mrb[0].mxu0
    %v1321 = vadd.f32 0.0, %v1320
    %v1322 = vpop.f32.mrb[0].mxu0
    %1323 = vmatprep.mubr.f32.mxu0 0.0
    %1324 = vmatmul.mubr.f32.gmra.mrb[0].mxu0 %v1002
    %v1325 = vpop.f32.mrb[0].mxu0
    %v1326 = vadd.f32 0.0, %v1325
    %v1327 = vpop.f32.mrb[0].mxu0
    %1328 = vmatprep.mubr.f32.mxu0 0.0
    %1329 = vmatmul.mubr.f32.gmra.mrb[0].mxu0 %v1003
    %v1330 = vpop.f32.mrb[0].mxu0
    %v1331 = vadd.f32 0.0, %v1330
    %v1332 = vpop.f32.mrb[0].mxu0
    %1333 = vmatprep.mubr.f32.mxu0 0.0
    %1334 = vmatmul.mubr.f32.gmra.mrb[0].mxu0 %v1004
    %v1335 = vpop.f32.mrb[0].mxu0
    %v1336 = vadd.f32 0.0, %v1335
    %v1337 = vpop.f32.mrb[0].mxu0
    %1338 = vmatprep.mubr.f32.mxu0 0.0
    %1339 = vmatmul.mubr.f32.gmra.mrb[0].mxu0 %v1005
    %v1340 = vpop.f32.mrb[0].mxu0
    %v1341 = vadd.f32 0.0, %v1340
    %v1342 = vpop.f32.mrb[0].mxu0
    %1343 = vmatprep.mubr.f32.mxu0 0.0
    %1344 = vmatmul.mubr.f32.gmra.mrb[0].mxu0 %v1006
    %v1345 = vpop.f32.mrb[0].mxu0
    %v1346 = vadd.f32 0.0, %v1345
    %v1347 = vpop.f32.mrb[0].mxu0
    %1348 = vmatprep.mubr.f32.mxu0 0.0
    %1349 = vmatmul.mubr.f32.gmra.mrb[0].mxu0 %v1007
    %v1350 = vpop.f32.mrb[0].mxu0
    %v1351 = vadd.f32 0.0, %v1350
    %v1352 = vpop.f32.mrb[0].mxu0
    %1353 = vmatprep.mubr.f32.mxu0 0.0
    %1354 = vmatmul.mubr.f32.gmra.mrb[0].mxu0 %v1008
    %v1355 = vpop.f32.mrb[0].mxu0
    %v1356 = vadd.f32 0.0, %v1355
    %v1357 = vpop.f32.mrb[0].mxu0
    %1358 = vmatprep.mubr.f32.mxu0 0.0
    %1359 = vmatmul.mubr.f32.gmra.mrb[0].mxu0 %v1009
    %v1360 = vpop.f32.mrb[0].mxu0
    %v1361 = vadd.f32 0.0, %v1360
    %v1362 = vpop.f32.mrb[0].mxu0
    %1363 = vmatprep.mubr.f32.mxu0 0.0
    %1364 = vmatmul.mubr.f32.gmra.mrb[0].mxu0 %v1010
    %v1365 = vpop.f32.mrb[0].mxu0
    %v1366 = vadd.f32 0.0, %v1365
    %v1367 = vpop.f32.mrb[0].mxu0
    %1368 = vmatprep.mubr.f32.mxu0 0.0
    %1369 = vmatmul.mubr.f32.gmra.mrb[0].mxu0 %v1011
    %v1370 = vpop.f32.mrb[0].mxu0
    %v1371 = vadd.f32 0.0, %v1370
    %v1372 = vpop.f32.mrb[0].mxu0
    %1373 = vmatprep.mubr.f32.mxu0 0.0
    %1374 = vmatmul.mubr.f32.gmra.mrb[0].mxu0 %v1012
    %v1375 = vpop.f32.mrb[0].mxu0
    %v1376 = vadd.f32 0.0, %v1375
    %v1377 = vpop.f32.mrb[0].mxu0
    %1378 = vmatprep.mubr.f32.mxu0 0.0
    %1379 = vmatmul.mubr.f32.gmra.mrb[0].mxu0 %v1013
    %v1380 = vpop.f32.mrb[0].mxu0
    %v1381 = vadd.f32 0.0, %v1380
    %v1382 = vpop.f32.mrb[0].mxu0
    %1383 = vmatprep.mubr.f32.mxu0 0.0
    %1384 = vmatmul.mubr.f32.gmra.mrb[0].mxu0 %v1014
    %v1385 = vpop.f32.mrb[0].mxu0
    %v1386 = vadd.f32 0.0, %v1385
    %v1387 = vpop.f32.mrb[0].mxu0
    %1388 = vmatprep.mubr.f32.mxu0 0.0
    %1389 = vmatmul.mubr.f32.gmra.mrb[0].mxu0 %v1015
    %v1390 = vpop.f32.mrb[0].mxu0
    %v1391 = vadd.f32 0.0, %v1390
    %v1392 = vpop.f32.mrb[0].mxu0
    %1393 = vmatprep.mubr.f32.mxu0 0.0
    %1394 = vmatmul.mubr.f32.gmra.mrb[0].mxu0 %v1016
    %v1395 = vpop.f32.mrb[0].mxu0
    %v1396 = vadd.f32 0.0, %v1395
    %v1397 = vpop.f32.mrb[0].mxu0
    %1398 = vmatprep.mubr.f32.mxu0 0.0
    %1399 = vmatmul.mubr.f32.gmra.mrb[0].mxu0 %v1017
    %v1400 = vpop.f32.mrb[0].mxu0
    %v1401 = vadd.f32 0.0, %v1400
    %v1402 = vpop.f32.mrb[0].mxu0
    %1403 = vmatprep.mubr.f32.mxu0 0.0
    %1404 = vmatmul.mubr.f32.gmra.mrb[0].mxu0 %v1018
    %v1405 = vpop.f32.mrb[0].mxu0
    %v1406 = vadd.f32 0.0, %v1405
    %v1407 = vpop.f32.mrb[0].mxu0
    %1408 = vmatprep.mubr.f32.mxu0 0.0
    %1409 = vmatmul.mubr.f32.gmra.mrb[0].mxu0 %v1019
    %v1410 = vpop.f32.mrb[0].mxu0
    %v1411 = vadd.f32 0.0, %v1410
    %v1412 = vpop.f32.mrb[0].mxu0
    %1413 = vmatprep.mubr.f32.mxu0 0.0
    %1414 = vmatmul.mubr.f32.gmra.mrb[0].mxu0 %v1020
    %v1415 = vpop.f32.mrb[0].mxu0
    %v1416 = vadd.f32 0.0, %v1415
    %v1417 = vpop.f32.mrb[0].mxu0
    %1418 = vmatprep.mubr.f32.mxu0 0.0
    %1419 = vmatmul.mubr.f32.gmra.mrb[0].mxu0 %v1021
    %v1420 = vpop.f32.mrb[0].mxu0
    %v1421 = vadd.f32 0.0, %v1420
    %v1422 = vpop.f32.mrb[0].mxu0
    %1423 = vdwg.mxu0
    %v1424 = vadd.f32 %v640, %v1106
    %v1425 = vadd.f32 %v645, %v1111
    %v1426 = vadd.f32 %v650, %v1116
    %v1427 = vadd.f32 %v655, %v1121
    %v1428 = vadd.f32 %v660, %v1126
    %v1429 = vadd.f32 %v665, %v1131
    %v1430 = vadd.f32 %v670, %v1136
    %v1431 = vadd.f32 %v675, %v1141
    %v1432 = vadd.f32 %v680, %v1146
    %v1433 = vadd.f32 %v685, %v1151
    %v1434 = vadd.f32 %v690, %v1156
    %v1435 = vadd.f32 %v695, %v1161
    %v1436 = vadd.f32 %v700, %v1166
    %v1437 = vadd.f32 %v705, %v1171
    %v1438 = vadd.f32 %v710, %v1176
    %v1439 = vadd.f32 %v715, %v1181
    %v1440 = vadd.f32 %v720, %v1186
    %v1441 = vadd.f32 %v725, %v1191
    %v1442 = vadd.f32 %v730, %v1196
    %v1443 = vadd.f32 %v735, %v1201
    %v1444 = vadd.f32 %v740, %v1206
    %v1445 = vadd.f32 %v745, %v1211
    %v1446 = vadd.f32 %v750, %v1216
    %v1447 = vadd.f32 %v755, %v1221
    %v1448 = vadd.f32 %v760, %v1226
    %v1449 = vadd.f32 %v765, %v1231
    %v1450 = vadd.f32 %v770, %v1236
    %v1451 = vadd.f32 %v775, %v1241
    %v1452 = vadd.f32 %v780, %v1246
    %v1453 = vadd.f32 %v785, %v1251
    %v1454 = vadd.f32 %v790, %v1256
    %v1455 = vadd.f32 %v795, %v1261
    %v1456 = vadd.f32 %v800, %v1266
    %v1457 = vadd.f32 %v805, %v1271
    %v1458 = vadd.f32 %v810, %v1276
    %v1459 = vadd.f32 %v815, %v1281
    %v1460 = vadd.f32 %v820, %v1286
    %v1461 = vadd.f32 %v825, %v1291
    %v1462 = vadd.f32 %v830, %v1296
    %v1463 = vadd.f32 %v835, %v1301
    %v1464 = vadd.f32 %v840, %v1306
    %v1465 = vadd.f32 %v845, %v1311
    %v1466 = vadd.f32 %v850, %v1316
    %v1467 = vadd.f32 %v855, %v1321
    %v1468 = vadd.f32 %v860, %v1326
    %v1469 = vadd.f32 %v865, %v1331
    %v1470 = vadd.f32 %v870, %v1336
    %v1471 = vadd.f32 %v875, %v1341
    %v1472 = vadd.f32 %v880, %v1346
    %v1473 = vadd.f32 %v885, %v1351
    %v1474 = vadd.f32 %v890, %v1356
    %v1475 = vadd.f32 %v895, %v1361
    %v1476 = vadd.f32 %v900, %v1366
    %v1477 = vadd.f32 %v905, %v1371
    %v1478 = vadd.f32 %v910, %v1376
    %v1479 = vadd.f32 %v915, %v1381
    %v1480 = vadd.f32 %v920, %v1386
    %v1481 = vadd.f32 %v925, %v1391
    %v1482 = vadd.f32 %v930, %v1396
    %v1483 = vadd.f32 %v935, %v1401
    %v1484 = vadd.f32 %v940, %v1406
    %v1485 = vadd.f32 %v945, %v1411
    %v1486 = vadd.f32 %v950, %v1416
    %v1487 = vadd.f32 %v955, %v1421
    %s1488 = scalar_lea.vmem %s0, 40
    %v1489 = vld [vmem:[%s1488] sm:$0xff]
    %v1490 = vld [vmem:[%s1488 + $0x8] sm:$0xff]
    %v1491 = vld [vmem:[%s1488 + $0x10] sm:$0xff]
    %v1492 = vld [vmem:[%s1488 + $0x18] sm:$0xff]
    %v1493 = vld [vmem:[%s1488 + $0x28] sm:$0xff]
    %v1494 = vld [vmem:[%s1488 + $0x30] sm:$0xff]
    %v1495 = vld [vmem:[%s1488 + $0x38] sm:$0xff]
    %v1496 = vld [vmem:[%s1488 + $0x40] sm:$0xff]
    %v1497 = vld [vmem:[%s1488 + $0x50] sm:$0xff]
    %v1498 = vld [vmem:[%s1488 + $0x58] sm:$0xff]
    %v1499 = vld [vmem:[%s1488 + $0x60] sm:$0xff]
    %v1500 = vld [vmem:[%s1488 + $0x68] sm:$0xff]
    %v1501 = vld [vmem:[%s1488 + $0x78] sm:$0xff]
    %v1502 = vld [vmem:[%s1488 + $0x80] sm:$0xff]
    %v1503 = vld [vmem:[%s1488 + $0x88] sm:$0xff]
    %v1504 = vld [vmem:[%s1488 + $0x90] sm:$0xff]
    %v1505 = vld [vmem:[%s1488 + $0xa0] sm:$0xff]
    %v1506 = vld [vmem:[%s1488 + $0xa8] sm:$0xff]
    %v1507 = vld [vmem:[%s1488 + $0xb0] sm:$0xff]
    %v1508 = vld [vmem:[%s1488 + $0xb8] sm:$0xff]
    %v1509 = vld [vmem:[%s1488 + $0xc8] sm:$0xff]
    %v1510 = vld [vmem:[%s1488 + $0xd0] sm:$0xff]
    %v1511 = vld [vmem:[%s1488 + $0xd8] sm:$0xff]
    %v1512 = vld [vmem:[%s1488 + $0xe0] sm:$0xff]
    %v1513 = vld [vmem:[%s1488 + $0xf0] sm:$0xff]
    %v1514 = vld [vmem:[%s1488 + $0xf8] sm:$0xff]
    %v1515 = vld [vmem:[%s1488 + $0x100] sm:$0xff]
    %v1516 = vld [vmem:[%s1488 + $0x108] sm:$0xff]
    %v1517 = vld [vmem:[%s1488 + $0x118] sm:$0xff]
    %v1518 = vld [vmem:[%s1488 + $0x120] sm:$0xff]
    %v1519 = vld [vmem:[%s1488 + $0x128] sm:$0xff]
    %v1520 = vld [vmem:[%s1488 + $0x130] sm:$0xff]
    %v1521 = vld [vmem:[%s1488 + $0x190] sm:$0xff]
    %v1522 = vld [vmem:[%s1488 + $0x198] sm:$0xff]
    %v1523 = vld [vmem:[%s1488 + $0x1a0] sm:$0xff]
    %v1524 = vld [vmem:[%s1488 + $0x1a8] sm:$0xff]
    %v1525 = vld [vmem:[%s1488 + $0x1b8] sm:$0xff]
    %v1526 = vld [vmem:[%s1488 + $0x1c0] sm:$0xff]
    %v1527 = vld [vmem:[%s1488 + $0x1c8] sm:$0xff]
    %v1528 = vld [vmem:[%s1488 + $0x1d0] sm:$0xff]
    %v1529 = vld [vmem:[%s1488 + $0x1e0] sm:$0xff]
    %v1530 = vld [vmem:[%s1488 + $0x1e8] sm:$0xff]
    %v1531 = vld [vmem:[%s1488 + $0x1f0] sm:$0xff]
    %v1532 = vld [vmem:[%s1488 + $0x1f8] sm:$0xff]
    %v1533 = vld [vmem:[%s1488 + $0x208] sm:$0xff]
    %v1534 = vld [vmem:[%s1488 + $0x210] sm:$0xff]
    %v1535 = vld [vmem:[%s1488 + $0x218] sm:$0xff]
    %v1536 = vld [vmem:[%s1488 + $0x220] sm:$0xff]
    %v1537 = vld [vmem:[%s1488 + $0x230] sm:$0xff]
    %v1538 = vld [vmem:[%s1488 + $0x238] sm:$0xff]
    %v1539 = vld [vmem:[%s1488 + $0x240] sm:$0xff]
    %v1540 = vld [vmem:[%s1488 + $0x248] sm:$0xff]
    %v1541 = vld [vmem:[%s1488 + $0x258] sm:$0xff]
    %v1542 = vld [vmem:[%s1488 + $0x260] sm:$0xff]
    %v1543 = vld [vmem:[%s1488 + $0x268] sm:$0xff]
    %v1544 = vld [vmem:[%s1488 + $0x270] sm:$0xff]
    %v1545 = vld [vmem:[%s1488 + $0x280] sm:$0xff]
    %v1546 = vld [vmem:[%s1488 + $0x288] sm:$0xff]
    %v1547 = vld [vmem:[%s1488 + $0x290] sm:$0xff]
    %v1548 = vld [vmem:[%s1488 + $0x298] sm:$0xff]
    %v1549 = vld [vmem:[%s1488 + $0x2a8] sm:$0xff]
    %v1550 = vld [vmem:[%s1488 + $0x2b0] sm:$0xff]
    %v1551 = vld [vmem:[%s1488 + $0x2b8] sm:$0xff]
    %v1552 = vld [vmem:[%s1488 + $0x2c0] sm:$0xff]
    %s1553 = scalar_lea.vmem %s2, 384
    %v1554 = vld [vmem:[%s1553] sm:$0xff]
    %v1555 = vld [vmem:[%s1553 + $0x8] sm:$0xff]
    %v1556 = vld [vmem:[%s1553 + $0x10] sm:$0xff]
    %v1557 = vld [vmem:[%s1553 + $0x18] sm:$0xff]
    %v1558 = vld [vmem:[%s1553 + $0x20] sm:$0xff]
    %v1559 = vld [vmem:[%s1553 + $0x28] sm:$0xff]
    %v1560 = vld [vmem:[%s1553 + $0x30] sm:$0xff]
    %v1561 = vld [vmem:[%s1553 + $0x38] sm:$0xff]
    %v1562 = vld [vmem:[%s1553 + $0x40] sm:$0xff]
    %v1563 = vld [vmem:[%s1553 + $0x48] sm:$0xff]
    %v1564 = vld [vmem:[%s1553 + $0x50] sm:$0xff]
    %v1565 = vld [vmem:[%s1553 + $0x58] sm:$0xff]
    %v1566 = vld [vmem:[%s1553 + $0x60] sm:$0xff]
    %v1567 = vld [vmem:[%s1553 + $0x68] sm:$0xff]
    %v1568 = vld [vmem:[%s1553 + $0x70] sm:$0xff]
    %v1569 = vld [vmem:[%s1553 + $0x78] sm:$0xff]
    %1570 = vmatprep.subr.mxu0 0.0
    %1571 = vmatpush1.msra.mxu0 %v1554
    %1572 = vmatprep.subr.mxu0 0.0
    %1573 = vmatpush1.msra.mxu0 %v1555
    %1574 = vmatprep.subr.mxu0 0.0
    %1575 = vmatpush1.msra.mxu0 %v1556
    %1576 = vmatprep.subr.mxu0 0.0
    %1577 = vmatpush1.msra.mxu0 %v1557
    %1578 = vmatprep.subr.mxu0 0.0
    %1579 = vmatpush1.msra.mxu0 %v1558
    %1580 = vmatprep.subr.mxu0 0.0
    %1581 = vmatpush1.msra.mxu0 %v1559
    %1582 = vmatprep.subr.mxu0 0.0
    %1583 = vmatpush1.msra.mxu0 %v1560
    %1584 = vmatprep.subr.mxu0 0.0
    %1585 = vmatpush1.msra.mxu0 %v1561
    %1586 = vmatprep.subr.mxu0 0.0
    %1587 = vmatpush1.msra.mxu0 %v1562
    %1588 = vmatprep.subr.mxu0 0.0
    %1589 = vmatpush1.msra.mxu0 %v1563
    %1590 = vmatprep.subr.mxu0 0.0
    %1591 = vmatpush1.msra.mxu0 %v1564
    %1592 = vmatprep.subr.mxu0 0.0
    %1593 = vmatpush1.msra.mxu0 %v1565
    %1594 = vmatprep.subr.mxu0 0.0
    %1595 = vmatpush1.msra.mxu0 %v1566
    %1596 = vmatprep.subr.mxu0 0.0
    %1597 = vmatpush1.msra.mxu0 %v1567
    %1598 = vmatprep.subr.mxu0 0.0
    %1599 = vmatpush1.msra.mxu0 %v1568
    %1600 = vmatprep.subr.mxu0 0.0
    %1601 = vmatpush1.msra.mxu0 %v1569
    %1602 = vmatprep.subr.mxu0 0.0
    %1603 = vmatpush1.msra.mxu0 0.0
    %1604 = vmatprep.subr.mxu0 0.0
    %1605 = vmatpush1.msra.mxu0 0.0
    %1606 = vmatprep.subr.mxu0 0.0
    %1607 = vmatpush1.msra.mxu0 0.0
    %1608 = vmatprep.subr.mxu0 0.0
    %1609 = vmatpush1.msra.mxu0 0.0
    %1610 = vmatprep.subr.mxu0 0.0
    %1611 = vmatpush1.msra.mxu0 0.0
    %1612 = vmatprep.subr.mxu0 0.0
    %1613 = vmatpush1.msra.mxu0 0.0
    %1614 = vmatprep.subr.mxu0 0.0
    %1615 = vmatpush1.msra.mxu0 0.0
    %1616 = vmatprep.subr.mxu0 0.0
    %1617 = vmatpush1.msra.mxu0 0.0
    %1618 = vmatprep.subr.mxu0 0.0
    %1619 = vmatpush1.msra.mxu0 0.0
    %1620 = vmatprep.subr.mxu0 0.0
    %1621 = vmatpush1.msra.mxu0 0.0
    %1622 = vmatprep.subr.mxu0 0.0
    %1623 = vmatpush1.msra.mxu0 0.0
    %1624 = vmatprep.subr.mxu0 0.0
    %1625 = vmatpush1.msra.mxu0 0.0
    %1626 = vmatprep.subr.mxu0 0.0
    %1627 = vmatpush1.msra.mxu0 0.0
    %1628 = vmatprep.subr.mxu0 0.0
    %1629 = vmatpush1.msra.mxu0 0.0
    %1630 = vmatprep.subr.mxu0 0.0
    %1631 = vmatpush1.msra.mxu0 0.0
    %1632 = vmatprep.subr.mxu0 0.0
    %1633 = vmatpush1.msra.mxu0 0.0
    %1634 = vmatprep.mubr.f32.mxu0 0.0
    %1635 = vmatmul.mubr.f32.gmra.mrb[0].mxu0 %v1489
    %v1636 = vpop.f32.mrb[0].mxu0
    %v1637 = vadd.f32 0.0, %v1636
    %v1638 = vpop.f32.mrb[0].mxu0
    %1639 = vmatprep.mubr.f32.mxu0 0.0
    %1640 = vmatmul.mubr.f32.gmra.mrb[0].mxu0 %v1490
    %v1641 = vpop.f32.mrb[0].mxu0
    %v1642 = vadd.f32 0.0, %v1641
    %v1643 = vpop.f32.mrb[0].mxu0
    %1644 = vmatprep.mubr.f32.mxu0 0.0
    %1645 = vmatmul.mubr.f32.gmra.mrb[0].mxu0 %v1491
    %v1646 = vpop.f32.mrb[0].mxu0
    %v1647 = vadd.f32 0.0, %v1646
    %v1648 = vpop.f32.mrb[0].mxu0
    %1649 = vmatprep.mubr.f32.mxu0 0.0
    %1650 = vmatmul.mubr.f32.gmra.mrb[0].mxu0 %v1492
    %v1651 = vpop.f32.mrb[0].mxu0
    %v1652 = vadd.f32 0.0, %v1651
    %v1653 = vpop.f32.mrb[0].mxu0
    %1654 = vmatprep.mubr.f32.mxu0 0.0
    %1655 = vmatmul.mubr.f32.gmra.mrb[0].mxu0 %v1493
    %v1656 = vpop.f32.mrb[0].mxu0
    %v1657 = vadd.f32 0.0, %v1656
    %v1658 = vpop.f32.mrb[0].mxu0
    %1659 = vmatprep.mubr.f32.mxu0 0.0
    %1660 = vmatmul.mubr.f32.gmra.mrb[0].mxu0 %v1494
    %v1661 = vpop.f32.mrb[0].mxu0
    %v1662 = vadd.f32 0.0, %v1661
    %v1663 = vpop.f32.mrb[0].mxu0
    %1664 = vmatprep.mubr.f32.mxu0 0.0
    %1665 = vmatmul.mubr.f32.gmra.mrb[0].mxu0 %v1495
    %v1666 = vpop.f32.mrb[0].mxu0
    %v1667 = vadd.f32 0.0, %v1666
    %v1668 = vpop.f32.mrb[0].mxu0
    %1669 = vmatprep.mubr.f32.mxu0 0.0
    %1670 = vmatmul.mubr.f32.gmra.mrb[0].mxu0 %v1496
    %v1671 = vpop.f32.mrb[0].mxu0
    %v1672 = vadd.f32 0.0, %v1671
    %v1673 = vpop.f32.mrb[0].mxu0
    %1674 = vmatprep.mubr.f32.mxu0 0.0
    %1675 = vmatmul.mubr.f32.gmra.mrb[0].mxu0 %v1497
    %v1676 = vpop.f32.mrb[0].mxu0
    %v1677 = vadd.f32 0.0, %v1676
    %v1678 = vpop.f32.mrb[0].mxu0
    %1679 = vmatprep.mubr.f32.mxu0 0.0
    %1680 = vmatmul.mubr.f32.gmra.mrb[0].mxu0 %v1498
    %v1681 = vpop.f32.mrb[0].mxu0
    %v1682 = vadd.f32 0.0, %v1681
    %v1683 = vpop.f32.mrb[0].mxu0
    %1684 = vmatprep.mubr.f32.mxu0 0.0
    %1685 = vmatmul.mubr.f32.gmra.mrb[0].mxu0 %v1499
    %v1686 = vpop.f32.mrb[0].mxu0
    %v1687 = vadd.f32 0.0, %v1686
    %v1688 = vpop.f32.mrb[0].mxu0
    %1689 = vmatprep.mubr.f32.mxu0 0.0
    %1690 = vmatmul.mubr.f32.gmra.mrb[0].mxu0 %v1500
    %v1691 = vpop.f32.mrb[0].mxu0
    %v1692 = vadd.f32 0.0, %v1691
    %v1693 = vpop.f32.mrb[0].mxu0
    %1694 = vmatprep.mubr.f32.mxu0 0.0
    %1695 = vmatmul.mubr.f32.gmra.mrb[0].mxu0 %v1501
    %v1696 = vpop.f32.mrb[0].mxu0
    %v1697 = vadd.f32 0.0, %v1696
    %v1698 = vpop.f32.mrb[0].mxu0
    %1699 = vmatprep.mubr.f32.mxu0 0.0
    %1700 = vmatmul.mubr.f32.gmra.mrb[0].mxu0 %v1502
    %v1701 = vpop.f32.mrb[0].mxu0
    %v1702 = vadd.f32 0.0, %v1701
    %v1703 = vpop.f32.mrb[0].mxu0
    %1704 = vmatprep.mubr.f32.mxu0 0.0
    %1705 = vmatmul.mubr.f32.gmra.mrb[0].mxu0 %v1503
    %v1706 = vpop.f32.mrb[0].mxu0
    %v1707 = vadd.f32 0.0, %v1706
    %v1708 = vpop.f32.mrb[0].mxu0
    %1709 = vmatprep.mubr.f32.mxu0 0.0
    %1710 = vmatmul.mubr.f32.gmra.mrb[0].mxu0 %v1504
    %v1711 = vpop.f32.mrb[0].mxu0
    %v1712 = vadd.f32 0.0, %v1711
    %v1713 = vpop.f32.mrb[0].mxu0
    %1714 = vmatprep.mubr.f32.mxu0 0.0
    %1715 = vmatmul.mubr.f32.gmra.mrb[0].mxu0 %v1505
    %v1716 = vpop.f32.mrb[0].mxu0
    %v1717 = vadd.f32 0.0, %v1716
    %v1718 = vpop.f32.mrb[0].mxu0
    %1719 = vmatprep.mubr.f32.mxu0 0.0
    %1720 = vmatmul.mubr.f32.gmra.mrb[0].mxu0 %v1506
    %v1721 = vpop.f32.mrb[0].mxu0
    %v1722 = vadd.f32 0.0, %v1721
    %v1723 = vpop.f32.mrb[0].mxu0
    %1724 = vmatprep.mubr.f32.mxu0 0.0
    %1725 = vmatmul.mubr.f32.gmra.mrb[0].mxu0 %v1507
    %v1726 = vpop.f32.mrb[0].mxu0
    %v1727 = vadd.f32 0.0, %v1726
    %v1728 = vpop.f32.mrb[0].mxu0
    %1729 = vmatprep.mubr.f32.mxu0 0.0
    %1730 = vmatmul.mubr.f32.gmra.mrb[0].mxu0 %v1508
    %v1731 = vpop.f32.mrb[0].mxu0
    %v1732 = vadd.f32 0.0, %v1731
    %v1733 = vpop.f32.mrb[0].mxu0
    %1734 = vmatprep.mubr.f32.mxu0 0.0
    %1735 = vmatmul.mubr.f32.gmra.mrb[0].mxu0 %v1509
    %v1736 = vpop.f32.mrb[0].mxu0
    %v1737 = vadd.f32 0.0, %v1736
    %v1738 = vpop.f32.mrb[0].mxu0
    %1739 = vmatprep.mubr.f32.mxu0 0.0
    %1740 = vmatmul.mubr.f32.gmra.mrb[0].mxu0 %v1510
    %v1741 = vpop.f32.mrb[0].mxu0
    %v1742 = vadd.f32 0.0, %v1741
    %v1743 = vpop.f32.mrb[0].mxu0
    %1744 = vmatprep.mubr.f32.mxu0 0.0
    %1745 = vmatmul.mubr.f32.gmra.mrb[0].mxu0 %v1511
    %v1746 = vpop.f32.mrb[0].mxu0
    %v1747 = vadd.f32 0.0, %v1746
    %v1748 = vpop.f32.mrb[0].mxu0
    %1749 = vmatprep.mubr.f32.mxu0 0.0
    %1750 = vmatmul.mubr.f32.gmra.mrb[0].mxu0 %v1512
    %v1751 = vpop.f32.mrb[0].mxu0
    %v1752 = vadd.f32 0.0, %v1751
    %v1753 = vpop.f32.mrb[0].mxu0
    %1754 = vmatprep.mubr.f32.mxu0 0.0
    %1755 = vmatmul.mubr.f32.gmra.mrb[0].mxu0 %v1513
    %v1756 = vpop.f32.mrb[0].mxu0
    %v1757 = vadd.f32 0.0, %v1756
    %v1758 = vpop.f32.mrb[0].mxu0
    %1759 = vmatprep.mubr.f32.mxu0 0.0
    %1760 = vmatmul.mubr.f32.gmra.mrb[0].mxu0 %v1514
    %v1761 = vpop.f32.mrb[0].mxu0
    %v1762 = vadd.f32 0.0, %v1761
    %v1763 = vpop.f32.mrb[0].mxu0
    %1764 = vmatprep.mubr.f32.mxu0 0.0
    %1765 = vmatmul.mubr.f32.gmra.mrb[0].mxu0 %v1515
    %v1766 = vpop.f32.mrb[0].mxu0
    %v1767 = vadd.f32 0.0, %v1766
    %v1768 = vpop.f32.mrb[0].mxu0
    %1769 = vmatprep.mubr.f32.mxu0 0.0
    %1770 = vmatmul.mubr.f32.gmra.mrb[0].mxu0 %v1516
    %v1771 = vpop.f32.mrb[0].mxu0
    %v1772 = vadd.f32 0.0, %v1771
    %v1773 = vpop.f32.mrb[0].mxu0
    %1774 = vmatprep.mubr.f32.mxu0 0.0
    %1775 = vmatmul.mubr.f32.gmra.mrb[0].mxu0 %v1517
    %v1776 = vpop.f32.mrb[0].mxu0
    %v1777 = vadd.f32 0.0, %v1776
    %v1778 = vpop.f32.mrb[0].mxu0
    %1779 = vmatprep.mubr.f32.mxu0 0.0
    %1780 = vmatmul.mubr.f32.gmra.mrb[0].mxu0 %v1518
    %v1781 = vpop.f32.mrb[0].mxu0
    %v1782 = vadd.f32 0.0, %v1781
    %v1783 = vpop.f32.mrb[0].mxu0
    %1784 = vmatprep.mubr.f32.mxu0 0.0
    %1785 = vmatmul.mubr.f32.gmra.mrb[0].mxu0 %v1519
    %v1786 = vpop.f32.mrb[0].mxu0
    %v1787 = vadd.f32 0.0, %v1786
    %v1788 = vpop.f32.mrb[0].mxu0
    %1789 = vmatprep.mubr.f32.mxu0 0.0
    %1790 = vmatmul.mubr.f32.gmra.mrb[0].mxu0 %v1520
    %v1791 = vpop.f32.mrb[0].mxu0
    %v1792 = vadd.f32 0.0, %v1791
    %v1793 = vpop.f32.mrb[0].mxu0
    %1794 = vmatprep.mubr.f32.mxu0 0.0
    %1795 = vmatmul.mubr.f32.gmra.mrb[0].mxu0 %v1521
    %v1796 = vpop.f32.mrb[0].mxu0
    %v1797 = vadd.f32 0.0, %v1796
    %v1798 = vpop.f32.mrb[0].mxu0
    %1799 = vmatprep.mubr.f32.mxu0 0.0
    %1800 = vmatmul.mubr.f32.gmra.mrb[0].mxu0 %v1522
    %v1801 = vpop.f32.mrb[0].mxu0
    %v1802 = vadd.f32 0.0, %v1801
    %v1803 = vpop.f32.mrb[0].mxu0
    %1804 = vmatprep.mubr.f32.mxu0 0.0
    %1805 = vmatmul.mubr.f32.gmra.mrb[0].mxu0 %v1523
    %v1806 = vpop.f32.mrb[0].mxu0
    %v1807 = vadd.f32 0.0, %v1806
    %v1808 = vpop.f32.mrb[0].mxu0
    %1809 = vmatprep.mubr.f32.mxu0 0.0
    %1810 = vmatmul.mubr.f32.gmra.mrb[0].mxu0 %v1524
    %v1811 = vpop.f32.mrb[0].mxu0
    %v1812 = vadd.f32 0.0, %v1811
    %v1813 = vpop.f32.mrb[0].mxu0
    %1814 = vmatprep.mubr.f32.mxu0 0.0
    %1815 = vmatmul.mubr.f32.gmra.mrb[0].mxu0 %v1525
    %v1816 = vpop.f32.mrb[0].mxu0
    %v1817 = vadd.f32 0.0, %v1816
    %v1818 = vpop.f32.mrb[0].mxu0
    %1819 = vmatprep.mubr.f32.mxu0 0.0
    %1820 = vmatmul.mubr.f32.gmra.mrb[0].mxu0 %v1526
    %v1821 = vpop.f32.mrb[0].mxu0
    %v1822 = vadd.f32 0.0, %v1821
    %v1823 = vpop.f32.mrb[0].mxu0
    %1824 = vmatprep.mubr.f32.mxu0 0.0
    %1825 = vmatmul.mubr.f32.gmra.mrb[0].mxu0 %v1527
    %v1826 = vpop.f32.mrb[0].mxu0
    %v1827 = vadd.f32 0.0, %v1826
    %v1828 = vpop.f32.mrb[0].mxu0
    %1829 = vmatprep.mubr.f32.mxu0 0.0
    %1830 = vmatmul.mubr.f32.gmra.mrb[0].mxu0 %v1528
    %v1831 = vpop.f32.mrb[0].mxu0
    %v1832 = vadd.f32 0.0, %v1831
    %v1833 = vpop.f32.mrb[0].mxu0
    %1834 = vmatprep.mubr.f32.mxu0 0.0
    %1835 = vmatmul.mubr.f32.gmra.mrb[0].mxu0 %v1529
    %v1836 = vpop.f32.mrb[0].mxu0
    %v1837 = vadd.f32 0.0, %v1836
    %v1838 = vpop.f32.mrb[0].mxu0
    %1839 = vmatprep.mubr.f32.mxu0 0.0
    %1840 = vmatmul.mubr.f32.gmra.mrb[0].mxu0 %v1530
    %v1841 = vpop.f32.mrb[0].mxu0
    %v1842 = vadd.f32 0.0, %v1841
    %v1843 = vpop.f32.mrb[0].mxu0
    %1844 = vmatprep.mubr.f32.mxu0 0.0
    %1845 = vmatmul.mubr.f32.gmra.mrb[0].mxu0 %v1531
    %v1846 = vpop.f32.mrb[0].mxu0
    %v1847 = vadd.f32 0.0, %v1846
    %v1848 = vpop.f32.mrb[0].mxu0
    %1849 = vmatprep.mubr.f32.mxu0 0.0
    %1850 = vmatmul.mubr.f32.gmra.mrb[0].mxu0 %v1532
    %v1851 = vpop.f32.mrb[0].mxu0
    %v1852 = vadd.f32 0.0, %v1851
    %v1853 = vpop.f32.mrb[0].mxu0
    %1854 = vmatprep.mubr.f32.mxu0 0.0
    %1855 = vmatmul.mubr.f32.gmra.mrb[0].mxu0 %v1533
    %v1856 = vpop.f32.mrb[0].mxu0
    %v1857 = vadd.f32 0.0, %v1856
    %v1858 = vpop.f32.mrb[0].mxu0
    %1859 = vmatprep.mubr.f32.mxu0 0.0
    %1860 = vmatmul.mubr.f32.gmra.mrb[0].mxu0 %v1534
    %v1861 = vpop.f32.mrb[0].mxu0
    %v1862 = vadd.f32 0.0, %v1861
    %v1863 = vpop.f32.mrb[0].mxu0
    %1864 = vmatprep.mubr.f32.mxu0 0.0
    %1865 = vmatmul.mubr.f32.gmra.mrb[0].mxu0 %v1535
    %v1866 = vpop.f32.mrb[0].mxu0
    %v1867 = vadd.f32 0.0, %v1866
    %v1868 = vpop.f32.mrb[0].mxu0
    %1869 = vmatprep.mubr.f32.mxu0 0.0
    %1870 = vmatmul.mubr.f32.gmra.mrb[0].mxu0 %v1536
    %v1871 = vpop.f32.mrb[0].mxu0
    %v1872 = vadd.f32 0.0, %v1871
    %v1873 = vpop.f32.mrb[0].mxu0
    %1874 = vmatprep.mubr.f32.mxu0 0.0
    %1875 = vmatmul.mubr.f32.gmra.mrb[0].mxu0 %v1537
    %v1876 = vpop.f32.mrb[0].mxu0
    %v1877 = vadd.f32 0.0, %v1876
    %v1878 = vpop.f32.mrb[0].mxu0
    %1879 = vmatprep.mubr.f32.mxu0 0.0
    %1880 = vmatmul.mubr.f32.gmra.mrb[0].mxu0 %v1538
    %v1881 = vpop.f32.mrb[0].mxu0
    %v1882 = vadd.f32 0.0, %v1881
    %v1883 = vpop.f32.mrb[0].mxu0
    %1884 = vmatprep.mubr.f32.mxu0 0.0
    %1885 = vmatmul.mubr.f32.gmra.mrb[0].mxu0 %v1539
    %v1886 = vpop.f32.mrb[0].mxu0
    %v1887 = vadd.f32 0.0, %v1886
    %v1888 = vpop.f32.mrb[0].mxu0
    %1889 = vmatprep.mubr.f32.mxu0 0.0
    %1890 = vmatmul.mubr.f32.gmra.mrb[0].mxu0 %v1540
    %v1891 = vpop.f32.mrb[0].mxu0
    %v1892 = vadd.f32 0.0, %v1891
    %v1893 = vpop.f32.mrb[0].mxu0
    %1894 = vmatprep.mubr.f32.mxu0 0.0
    %1895 = vmatmul.mubr.f32.gmra.mrb[0].mxu0 %v1541
    %v1896 = vpop.f32.mrb[0].mxu0
    %v1897 = vadd.f32 0.0, %v1896
    %v1898 = vpop.f32.mrb[0].mxu0
    %1899 = vmatprep.mubr.f32.mxu0 0.0
    %1900 = vmatmul.mubr.f32.gmra.mrb[0].mxu0 %v1542
    %v1901 = vpop.f32.mrb[0].mxu0
    %v1902 = vadd.f32 0.0, %v1901
    %v1903 = vpop.f32.mrb[0].mxu0
    %1904 = vmatprep.mubr.f32.mxu0 0.0
    %1905 = vmatmul.mubr.f32.gmra.mrb[0].mxu0 %v1543
    %v1906 = vpop.f32.mrb[0].mxu0
    %v1907 = vadd.f32 0.0, %v1906
    %v1908 = vpop.f32.mrb[0].mxu0
    %1909 = vmatprep.mubr.f32.mxu0 0.0
    %1910 = vmatmul.mubr.f32.gmra.mrb[0].mxu0 %v1544
    %v1911 = vpop.f32.mrb[0].mxu0
    %v1912 = vadd.f32 0.0, %v1911
    %v1913 = vpop.f32.mrb[0].mxu0
    %1914 = vmatprep.mubr.f32.mxu0 0.0
    %1915 = vmatmul.mubr.f32.gmra.mrb[0].mxu0 %v1545
    %v1916 = vpop.f32.mrb[0].mxu0
    %v1917 = vadd.f32 0.0, %v1916
    %v1918 = vpop.f32.mrb[0].mxu0
    %1919 = vmatprep.mubr.f32.mxu0 0.0
    %1920 = vmatmul.mubr.f32.gmra.mrb[0].mxu0 %v1546
    %v1921 = vpop.f32.mrb[0].mxu0
    %v1922 = vadd.f32 0.0, %v1921
    %v1923 = vpop.f32.mrb[0].mxu0
    %1924 = vmatprep.mubr.f32.mxu0 0.0
    %1925 = vmatmul.mubr.f32.gmra.mrb[0].mxu0 %v1547
    %v1926 = vpop.f32.mrb[0].mxu0
    %v1927 = vadd.f32 0.0, %v1926
    %v1928 = vpop.f32.mrb[0].mxu0
    %1929 = vmatprep.mubr.f32.mxu0 0.0
    %1930 = vmatmul.mubr.f32.gmra.mrb[0].mxu0 %v1548
    %v1931 = vpop.f32.mrb[0].mxu0
    %v1932 = vadd.f32 0.0, %v1931
    %v1933 = vpop.f32.mrb[0].mxu0
    %1934 = vmatprep.mubr.f32.mxu0 0.0
    %1935 = vmatmul.mubr.f32.gmra.mrb[0].mxu0 %v1549
    %v1936 = vpop.f32.mrb[0].mxu0
    %v1937 = vadd.f32 0.0, %v1936
    %v1938 = vpop.f32.mrb[0].mxu0
    %1939 = vmatprep.mubr.f32.mxu0 0.0
    %1940 = vmatmul.mubr.f32.gmra.mrb[0].mxu0 %v1550
    %v1941 = vpop.f32.mrb[0].mxu0
    %v1942 = vadd.f32 0.0, %v1941
    %v1943 = vpop.f32.mrb[0].mxu0
    %1944 = vmatprep.mubr.f32.mxu0 0.0
    %1945 = vmatmul.mubr.f32.gmra.mrb[0].mxu0 %v1551
    %v1946 = vpop.f32.mrb[0].mxu0
    %v1947 = vadd.f32 0.0, %v1946
    %v1948 = vpop.f32.mrb[0].mxu0
    %1949 = vmatprep.mubr.f32.mxu0 0.0
    %1950 = vmatmul.mubr.f32.gmra.mrb[0].mxu0 %v1552
    %v1951 = vpop.f32.mrb[0].mxu0
    %v1952 = vadd.f32 0.0, %v1951
    %v1953 = vpop.f32.mrb[0].mxu0
    %1954 = vdwg.mxu0
    %v1955 = vadd.f32 %v1424, %v1637
    %v1956 = vadd.f32 %v1425, %v1642
    %v1957 = vadd.f32 %v1426, %v1647
    %v1958 = vadd.f32 %v1427, %v1652
    %v1959 = vadd.f32 %v1428, %v1657
    %v1960 = vadd.f32 %v1429, %v1662
    %v1961 = vadd.f32 %v1430, %v1667
    %v1962 = vadd.f32 %v1431, %v1672
    %v1963 = vadd.f32 %v1432, %v1677
    %v1964 = vadd.f32 %v1433, %v1682
    %v1965 = vadd.f32 %v1434, %v1687
    %v1966 = vadd.f32 %v1435, %v1692
    %v1967 = vadd.f32 %v1436, %v1697
    %v1968 = vadd.f32 %v1437, %v1702
    %v1969 = vadd.f32 %v1438, %v1707
    %v1970 = vadd.f32 %v1439, %v1712
    %v1971 = vadd.f32 %v1440, %v1717
    %v1972 = vadd.f32 %v1441, %v1722
    %v1973 = vadd.f32 %v1442, %v1727
    %v1974 = vadd.f32 %v1443, %v1732
    %v1975 = vadd.f32 %v1444, %v1737
    %v1976 = vadd.f32 %v1445, %v1742
    %v1977 = vadd.f32 %v1446, %v1747
    %v1978 = vadd.f32 %v1447, %v1752
    %v1979 = vadd.f32 %v1448, %v1757
    %v1980 = vadd.f32 %v1449, %v1762
    %v1981 = vadd.f32 %v1450, %v1767
    %v1982 = vadd.f32 %v1451, %v1772
    %v1983 = vadd.f32 %v1452, %v1777
    %v1984 = vadd.f32 %v1453, %v1782
    %v1985 = vadd.f32 %v1454, %v1787
    %v1986 = vadd.f32 %v1455, %v1792
    %v1987 = vadd.f32 %v1456, %v1797
    %v1988 = vadd.f32 %v1457, %v1802
    %v1989 = vadd.f32 %v1458, %v1807
    %v1990 = vadd.f32 %v1459, %v1812
    %v1991 = vadd.f32 %v1460, %v1817
    %v1992 = vadd.f32 %v1461, %v1822
    %v1993 = vadd.f32 %v1462, %v1827
    %v1994 = vadd.f32 %v1463, %v1832
    %v1995 = vadd.f32 %v1464, %v1837
    %v1996 = vadd.f32 %v1465, %v1842
    %v1997 = vadd.f32 %v1466, %v1847
    %v1998 = vadd.f32 %v1467, %v1852
    %v1999 = vadd.f32 %v1468, %v1857
    %v2000 = vadd.f32 %v1469, %v1862
    %v2001 = vadd.f32 %v1470, %v1867
    %v2002 = vadd.f32 %v1471, %v1872
    %v2003 = vadd.f32 %v1472, %v1877
    %v2004 = vadd.f32 %v1473, %v1882
    %v2005 = vadd.f32 %v1474, %v1887
    %v2006 = vadd.f32 %v1475, %v1892
    %v2007 = vadd.f32 %v1476, %v1897
    %v2008 = vadd.f32 %v1477, %v1902
    %v2009 = vadd.f32 %v1478, %v1907
    %v2010 = vadd.f32 %v1479, %v1912
    %v2011 = vadd.f32 %v1480, %v1917
    %v2012 = vadd.f32 %v1481, %v1922
    %v2013 = vadd.f32 %v1482, %v1927
    %v2014 = vadd.f32 %v1483, %v1932
    %v2015 = vadd.f32 %v1484, %v1937
    %v2016 = vadd.f32 %v1485, %v1942
    %v2017 = vadd.f32 %v1486, %v1947
    %v2018 = vadd.f32 %v1487, %v1952
    %v2019 = vld [vmem:[%s1488 + $0x1] sm:$0xff]
    %v2020 = vld [vmem:[%s1488 + $0x9] sm:$0xff]
    %v2021 = vld [vmem:[%s1488 + $0x11] sm:$0xff]
    %v2022 = vld [vmem:[%s1488 + $0x19] sm:$0xff]
    %v2023 = vld [vmem:[%s1488 + $0x29] sm:$0xff]
    %v2024 = vld [vmem:[%s1488 + $0x31] sm:$0xff]
    %v2025 = vld [vmem:[%s1488 + $0x39] sm:$0xff]
    %v2026 = vld [vmem:[%s1488 + $0x41] sm:$0xff]
    %v2027 = vld [vmem:[%s1488 + $0x51] sm:$0xff]
    %v2028 = vld [vmem:[%s1488 + $0x59] sm:$0xff]
    %v2029 = vld [vmem:[%s1488 + $0x61] sm:$0xff]
    %v2030 = vld [vmem:[%s1488 + $0x69] sm:$0xff]
    %v2031 = vld [vmem:[%s1488 + $0x79] sm:$0xff]
    %v2032 = vld [vmem:[%s1488 + $0x81] sm:$0xff]
    %v2033 = vld [vmem:[%s1488 + $0x89] sm:$0xff]
    %v2034 = vld [vmem:[%s1488 + $0x91] sm:$0xff]
    %v2035 = vld [vmem:[%s1488 + $0xa1] sm:$0xff]
    %v2036 = vld [vmem:[%s1488 + $0xa9] sm:$0xff]
    %v2037 = vld [vmem:[%s1488 + $0xb1] sm:$0xff]
    %v2038 = vld [vmem:[%s1488 + $0xb9] sm:$0xff]
    %v2039 = vld [vmem:[%s1488 + $0xc9] sm:$0xff]
    %v2040 = vld [vmem:[%s1488 + $0xd1] sm:$0xff]
    %v2041 = vld [vmem:[%s1488 + $0xd9] sm:$0xff]
    %v2042 = vld [vmem:[%s1488 + $0xe1] sm:$0xff]
    %v2043 = vld [vmem:[%s1488 + $0xf1] sm:$0xff]
    %v2044 = vld [vmem:[%s1488 + $0xf9] sm:$0xff]
    %v2045 = vld [vmem:[%s1488 + $0x101] sm:$0xff]
    %v2046 = vld [vmem:[%s1488 + $0x109] sm:$0xff]
    %v2047 = vld [vmem:[%s1488 + $0x119] sm:$0xff]
    %v2048 = vld [vmem:[%s1488 + $0x121] sm:$0xff]
    %v2049 = vld [vmem:[%s1488 + $0x129] sm:$0xff]
    %v2050 = vld [vmem:[%s1488 + $0x131] sm:$0xff]
    %v2051 = vld [vmem:[%s1488 + $0x191] sm:$0xff]
    %v2052 = vld [vmem:[%s1488 + $0x199] sm:$0xff]
    %v2053 = vld [vmem:[%s1488 + $0x1a1] sm:$0xff]
    %v2054 = vld [vmem:[%s1488 + $0x1a9] sm:$0xff]
    %v2055 = vld [vmem:[%s1488 + $0x1b9] sm:$0xff]
    %v2056 = vld [vmem:[%s1488 + $0x1c1] sm:$0xff]
    %v2057 = vld [vmem:[%s1488 + $0x1c9] sm:$0xff]
    %v2058 = vld [vmem:[%s1488 + $0x1d1] sm:$0xff]
    %v2059 = vld [vmem:[%s1488 + $0x1e1] sm:$0xff]
    %v2060 = vld [vmem:[%s1488 + $0x1e9] sm:$0xff]
    %v2061 = vld [vmem:[%s1488 + $0x1f1] sm:$0xff]
    %v2062 = vld [vmem:[%s1488 + $0x1f9] sm:$0xff]
    %v2063 = vld [vmem:[%s1488 + $0x209] sm:$0xff]
    %v2064 = vld [vmem:[%s1488 + $0x211] sm:$0xff]
    %v2065 = vld [vmem:[%s1488 + $0x219] sm:$0xff]
    %v2066 = vld [vmem:[%s1488 + $0x221] sm:$0xff]
    %v2067 = vld [vmem:[%s1488 + $0x231] sm:$0xff]
    %v2068 = vld [vmem:[%s1488 + $0x239] sm:$0xff]
    %v2069 = vld [vmem:[%s1488 + $0x241] sm:$0xff]
    %v2070 = vld [vmem:[%s1488 + $0x249] sm:$0xff]
    %v2071 = vld [vmem:[%s1488 + $0x259] sm:$0xff]
    %v2072 = vld [vmem:[%s1488 + $0x261] sm:$0xff]
    %v2073 = vld [vmem:[%s1488 + $0x269] sm:$0xff]
    %v2074 = vld [vmem:[%s1488 + $0x271] sm:$0xff]
    %v2075 = vld [vmem:[%s1488 + $0x281] sm:$0xff]
    %v2076 = vld [vmem:[%s1488 + $0x289] sm:$0xff]
    %v2077 = vld [vmem:[%s1488 + $0x291] sm:$0xff]
    %v2078 = vld [vmem:[%s1488 + $0x299] sm:$0xff]
    %v2079 = vld [vmem:[%s1488 + $0x2a9] sm:$0xff]
    %v2080 = vld [vmem:[%s1488 + $0x2b1] sm:$0xff]
    %v2081 = vld [vmem:[%s1488 + $0x2b9] sm:$0xff]
    %v2082 = vld [vmem:[%s1488 + $0x2c1] sm:$0xff]
    %s2083 = scalar_lea.vmem %s2, 512
    %v2084 = vld [vmem:[%s2083] sm:$0xff]
    %v2085 = vld [vmem:[%s2083 + $0x8] sm:$0xff]
    %v2086 = vld [vmem:[%s2083 + $0x10] sm:$0xff]
    %v2087 = vld [vmem:[%s2083 + $0x18] sm:$0xff]
    %v2088 = vld [vmem:[%s2083 + $0x20] sm:$0xff]
    %v2089 = vld [vmem:[%s2083 + $0x28] sm:$0xff]
    %v2090 = vld [vmem:[%s2083 + $0x30] sm:$0xff]
    %v2091 = vld [vmem:[%s2083 + $0x38] sm:$0xff]
    %v2092 = vld [vmem:[%s2083 + $0x40] sm:$0xff]
    %v2093 = vld [vmem:[%s2083 + $0x48] sm:$0xff]
    %v2094 = vld [vmem:[%s2083 + $0x50] sm:$0xff]
    %v2095 = vld [vmem:[%s2083 + $0x58] sm:$0xff]
    %v2096 = vld [vmem:[%s2083 + $0x60] sm:$0xff]
    %v2097 = vld [vmem:[%s2083 + $0x68] sm:$0xff]
    %v2098 = vld [vmem:[%s2083 + $0x70] sm:$0xff]
    %v2099 = vld [vmem:[%s2083 + $0x78] sm:$0xff]
    %2100 = vmatprep.subr.mxu0 0.0
    %2101 = vmatpush1.msra.mxu0 %v2084
    %2102 = vmatprep.subr.mxu0 0.0
    %2103 = vmatpush1.msra.mxu0 %v2085
    %2104 = vmatprep.subr.mxu0 0.0
    %2105 = vmatpush1.msra.mxu0 %v2086
    %2106 = vmatprep.subr.mxu0 0.0
    %2107 = vmatpush1.msra.mxu0 %v2087
    %2108 = vmatprep.subr.mxu0 0.0
    %2109 = vmatpush1.msra.mxu0 %v2088
    %2110 = vmatprep.subr.mxu0 0.0
    %2111 = vmatpush1.msra.mxu0 %v2089
    %2112 = vmatprep.subr.mxu0 0.0
    %2113 = vmatpush1.msra.mxu0 %v2090
    %2114 = vmatprep.subr.mxu0 0.0
    %2115 = vmatpush1.msra.mxu0 %v2091
    %2116 = vmatprep.subr.mxu0 0.0
    %2117 = vmatpush1.msra.mxu0 %v2092
    %2118 = vmatprep.subr.mxu0 0.0
    %2119 = vmatpush1.msra.mxu0 %v2093
    %2120 = vmatprep.subr.mxu0 0.0
    %2121 = vmatpush1.msra.mxu0 %v2094
    %2122 = vmatprep.subr.mxu0 0.0
    %2123 = vmatpush1.msra.mxu0 %v2095
    %2124 = vmatprep.subr.mxu0 0.0
    %2125 = vmatpush1.msra.mxu0 %v2096
    %2126 = vmatprep.subr.mxu0 0.0
    %2127 = vmatpush1.msra.mxu0 %v2097
    %2128 = vmatprep.subr.mxu0 0.0
    %2129 = vmatpush1.msra.mxu0 %v2098
    %2130 = vmatprep.subr.mxu0 0.0
    %2131 = vmatpush1.msra.mxu0 %v2099
    %2132 = vmatprep.subr.mxu0 0.0
    %2133 = vmatpush1.msra.mxu0 0.0
    %2134 = vmatprep.subr.mxu0 0.0
    %2135 = vmatpush1.msra.mxu0 0.0
    %2136 = vmatprep.subr.mxu0 0.0
    %2137 = vmatpush1.msra.mxu0 0.0
    %2138 = vmatprep.subr.mxu0 0.0
    %2139 = vmatpush1.msra.mxu0 0.0
    %2140 = vmatprep.subr.mxu0 0.0
    %2141 = vmatpush1.msra.mxu0 0.0
    %2142 = vmatprep.subr.mxu0 0.0
    %2143 = vmatpush1.msra.mxu0 0.0
    %2144 = vmatprep.subr.mxu0 0.0
    %2145 = vmatpush1.msra.mxu0 0.0
    %2146 = vmatprep.subr.mxu0 0.0
    %2147 = vmatpush1.msra.mxu0 0.0
    %2148 = vmatprep.subr.mxu0 0.0
    %2149 = vmatpush1.msra.mxu0 0.0
    %2150 = vmatprep.subr.mxu0 0.0
    %2151 = vmatpush1.msra.mxu0 0.0
    %2152 = vmatprep.subr.mxu0 0.0
    %2153 = vmatpush1.msra.mxu0 0.0
    %2154 = vmatprep.subr.mxu0 0.0
    %2155 = vmatpush1.msra.mxu0 0.0
    %2156 = vmatprep.subr.mxu0 0.0
    %2157 = vmatpush1.msra.mxu0 0.0
    %2158 = vmatprep.subr.mxu0 0.0
    %2159 = vmatpush1.msra.mxu0 0.0
    %2160 = vmatprep.subr.mxu0 0.0
    %2161 = vmatpush1.msra.mxu0 0.0
    %2162 = vmatprep.subr.mxu0 0.0
    %2163 = vmatpush1.msra.mxu0 0.0
    %2164 = vmatprep.mubr.f32.mxu0 0.0
    %2165 = vmatmul.mubr.f32.gmra.mrb[0].mxu0 %v2019
    %v2166 = vpop.f32.mrb[0].mxu0
    %v2167 = vadd.f32 0.0, %v2166
    %v2168 = vpop.f32.mrb[0].mxu0
    %2169 = vmatprep.mubr.f32.mxu0 0.0
    %2170 = vmatmul.mubr.f32.gmra.mrb[0].mxu0 %v2020
    %v2171 = vpop.f32.mrb[0].mxu0
    %v2172 = vadd.f32 0.0, %v2171
    %v2173 = vpop.f32.mrb[0].mxu0
    %2174 = vmatprep.mubr.f32.mxu0 0.0
    %2175 = vmatmul.mubr.f32.gmra.mrb[0].mxu0 %v2021
    %v2176 = vpop.f32.mrb[0].mxu0
    %v2177 = vadd.f32 0.0, %v2176
    %v2178 = vpop.f32.mrb[0].mxu0
    %2179 = vmatprep.mubr.f32.mxu0 0.0
    %2180 = vmatmul.mubr.f32.gmra.mrb[0].mxu0 %v2022
    %v2181 = vpop.f32.mrb[0].mxu0
    %v2182 = vadd.f32 0.0, %v2181
    %v2183 = vpop.f32.mrb[0].mxu0
    %2184 = vmatprep.mubr.f32.mxu0 0.0
    %2185 = vmatmul.mubr.f32.gmra.mrb[0].mxu0 %v2023
    %v2186 = vpop.f32.mrb[0].mxu0
    %v2187 = vadd.f32 0.0, %v2186
    %v2188 = vpop.f32.mrb[0].mxu0
    %2189 = vmatprep.mubr.f32.mxu0 0.0
    %2190 = vmatmul.mubr.f32.gmra.mrb[0].mxu0 %v2024
    %v2191 = vpop.f32.mrb[0].mxu0
    %v2192 = vadd.f32 0.0, %v2191
    %v2193 = vpop.f32.mrb[0].mxu0
    %2194 = vmatprep.mubr.f32.mxu0 0.0
    %2195 = vmatmul.mubr.f32.gmra.mrb[0].mxu0 %v2025
    %v2196 = vpop.f32.mrb[0].mxu0
    %v2197 = vadd.f32 0.0, %v2196
    %v2198 = vpop.f32.mrb[0].mxu0
    %2199 = vmatprep.mubr.f32.mxu0 0.0
    %2200 = vmatmul.mubr.f32.gmra.mrb[0].mxu0 %v2026
    %v2201 = vpop.f32.mrb[0].mxu0
    %v2202 = vadd.f32 0.0, %v2201
    %v2203 = vpop.f32.mrb[0].mxu0
    %2204 = vmatprep.mubr.f32.mxu0 0.0
    %2205 = vmatmul.mubr.f32.gmra.mrb[0].mxu0 %v2027
    %v2206 = vpop.f32.mrb[0].mxu0
    %v2207 = vadd.f32 0.0, %v2206
    %v2208 = vpop.f32.mrb[0].mxu0
    %2209 = vmatprep.mubr.f32.mxu0 0.0
    %2210 = vmatmul.mubr.f32.gmra.mrb[0].mxu0 %v2028
    %v2211 = vpop.f32.mrb[0].mxu0
    %v2212 = vadd.f32 0.0, %v2211
    %v2213 = vpop.f32.mrb[0].mxu0
    %2214 = vmatprep.mubr.f32.mxu0 0.0
    %2215 = vmatmul.mubr.f32.gmra.mrb[0].mxu0 %v2029
    %v2216 = vpop.f32.mrb[0].mxu0
    %v2217 = vadd.f32 0.0, %v2216
    %v2218 = vpop.f32.mrb[0].mxu0
    %2219 = vmatprep.mubr.f32.mxu0 0.0
    %2220 = vmatmul.mubr.f32.gmra.mrb[0].mxu0 %v2030
    %v2221 = vpop.f32.mrb[0].mxu0
    %v2222 = vadd.f32 0.0, %v2221
    %v2223 = vpop.f32.mrb[0].mxu0
    %2224 = vmatprep.mubr.f32.mxu0 0.0
    %2225 = vmatmul.mubr.f32.gmra.mrb[0].mxu0 %v2031
    %v2226 = vpop.f32.mrb[0].mxu0
    %v2227 = vadd.f32 0.0, %v2226
    %v2228 = vpop.f32.mrb[0].mxu0
    %2229 = vmatprep.mubr.f32.mxu0 0.0
    %2230 = vmatmul.mubr.f32.gmra.mrb[0].mxu0 %v2032
    %v2231 = vpop.f32.mrb[0].mxu0
    %v2232 = vadd.f32 0.0, %v2231
    %v2233 = vpop.f32.mrb[0].mxu0
    %2234 = vmatprep.mubr.f32.mxu0 0.0
    %2235 = vmatmul.mubr.f32.gmra.mrb[0].mxu0 %v2033
    %v2236 = vpop.f32.mrb[0].mxu0
    %v2237 = vadd.f32 0.0, %v2236
    %v2238 = vpop.f32.mrb[0].mxu0
    %2239 = vmatprep.mubr.f32.mxu0 0.0
    %2240 = vmatmul.mubr.f32.gmra.mrb[0].mxu0 %v2034
    %v2241 = vpop.f32.mrb[0].mxu0
    %v2242 = vadd.f32 0.0, %v2241
    %v2243 = vpop.f32.mrb[0].mxu0
    %2244 = vmatprep.mubr.f32.mxu0 0.0
    %2245 = vmatmul.mubr.f32.gmra.mrb[0].mxu0 %v2035
    %v2246 = vpop.f32.mrb[0].mxu0
    %v2247 = vadd.f32 0.0, %v2246
    %v2248 = vpop.f32.mrb[0].mxu0
    %2249 = vmatprep.mubr.f32.mxu0 0.0
    %2250 = vmatmul.mubr.f32.gmra.mrb[0].mxu0 %v2036
    %v2251 = vpop.f32.mrb[0].mxu0
    %v2252 = vadd.f32 0.0, %v2251
    %v2253 = vpop.f32.mrb[0].mxu0
    %2254 = vmatprep.mubr.f32.mxu0 0.0
    %2255 = vmatmul.mubr.f32.gmra.mrb[0].mxu0 %v2037
    %v2256 = vpop.f32.mrb[0].mxu0
    %v2257 = vadd.f32 0.0, %v2256
    %v2258 = vpop.f32.mrb[0].mxu0
    %2259 = vmatprep.mubr.f32.mxu0 0.0
    %2260 = vmatmul.mubr.f32.gmra.mrb[0].mxu0 %v2038
    %v2261 = vpop.f32.mrb[0].mxu0
    %v2262 = vadd.f32 0.0, %v2261
    %v2263 = vpop.f32.mrb[0].mxu0
    %2264 = vmatprep.mubr.f32.mxu0 0.0
    %2265 = vmatmul.mubr.f32.gmra.mrb[0].mxu0 %v2039
    %v2266 = vpop.f32.mrb[0].mxu0
    %v2267 = vadd.f32 0.0, %v2266
    %v2268 = vpop.f32.mrb[0].mxu0
    %2269 = vmatprep.mubr.f32.mxu0 0.0
    %2270 = vmatmul.mubr.f32.gmra.mrb[0].mxu0 %v2040
    %v2271 = vpop.f32.mrb[0].mxu0
    %v2272 = vadd.f32 0.0, %v2271
    %v2273 = vpop.f32.mrb[0].mxu0
    %2274 = vmatprep.mubr.f32.mxu0 0.0
    %2275 = vmatmul.mubr.f32.gmra.mrb[0].mxu0 %v2041
    %v2276 = vpop.f32.mrb[0].mxu0
    %v2277 = vadd.f32 0.0, %v2276
    %v2278 = vpop.f32.mrb[0].mxu0
    %2279 = vmatprep.mubr.f32.mxu0 0.0
    %2280 = vmatmul.mubr.f32.gmra.mrb[0].mxu0 %v2042
    %v2281 = vpop.f32.mrb[0].mxu0
    %v2282 = vadd.f32 0.0, %v2281
    %v2283 = vpop.f32.mrb[0].mxu0
    %2284 = vmatprep.mubr.f32.mxu0 0.0
    %2285 = vmatmul.mubr.f32.gmra.mrb[0].mxu0 %v2043
    %v2286 = vpop.f32.mrb[0].mxu0
    %v2287 = vadd.f32 0.0, %v2286
    %v2288 = vpop.f32.mrb[0].mxu0
    %2289 = vmatprep.mubr.f32.mxu0 0.0
    %2290 = vmatmul.mubr.f32.gmra.mrb[0].mxu0 %v2044
    %v2291 = vpop.f32.mrb[0].mxu0
    %v2292 = vadd.f32 0.0, %v2291
    %v2293 = vpop.f32.mrb[0].mxu0
    %2294 = vmatprep.mubr.f32.mxu0 0.0
    %2295 = vmatmul.mubr.f32.gmra.mrb[0].mxu0 %v2045
    %v2296 = vpop.f32.mrb[0].mxu0
    %v2297 = vadd.f32 0.0, %v2296
    %v2298 = vpop.f32.mrb[0].mxu0
    %2299 = vmatprep.mubr.f32.mxu0 0.0
    %2300 = vmatmul.mubr.f32.gmra.mrb[0].mxu0 %v2046
    %v2301 = vpop.f32.mrb[0].mxu0
    %v2302 = vadd.f32 0.0, %v2301
    %v2303 = vpop.f32.mrb[0].mxu0
    %2304 = vmatprep.mubr.f32.mxu0 0.0
    %2305 = vmatmul.mubr.f32.gmra.mrb[0].mxu0 %v2047
    %v2306 = vpop.f32.mrb[0].mxu0
    %v2307 = vadd.f32 0.0, %v2306
    %v2308 = vpop.f32.mrb[0].mxu0
    %2309 = vmatprep.mubr.f32.mxu0 0.0
    %2310 = vmatmul.mubr.f32.gmra.mrb[0].mxu0 %v2048
    %v2311 = vpop.f32.mrb[0].mxu0
    %v2312 = vadd.f32 0.0, %v2311
    %v2313 = vpop.f32.mrb[0].mxu0
    %2314 = vmatprep.mubr.f32.mxu0 0.0
    %2315 = vmatmul.mubr.f32.gmra.mrb[0].mxu0 %v2049
    %v2316 = vpop.f32.mrb[0].mxu0
    %v2317 = vadd.f32 0.0, %v2316
    %v2318 = vpop.f32.mrb[0].mxu0
    %2319 = vmatprep.mubr.f32.mxu0 0.0
    %2320 = vmatmul.mubr.f32.gmra.mrb[0].mxu0 %v2050
    %v2321 = vpop.f32.mrb[0].mxu0
    %v2322 = vadd.f32 0.0, %v2321
    %v2323 = vpop.f32.mrb[0].mxu0
    %2324 = vmatprep.mubr.f32.mxu0 0.0
    %2325 = vmatmul.mubr.f32.gmra.mrb[0].mxu0 %v2051
    %v2326 = vpop.f32.mrb[0].mxu0
    %v2327 = vadd.f32 0.0, %v2326
    %v2328 = vpop.f32.mrb[0].mxu0
    %2329 = vmatprep.mubr.f32.mxu0 0.0
    %2330 = vmatmul.mubr.f32.gmra.mrb[0].mxu0 %v2052
    %v2331 = vpop.f32.mrb[0].mxu0
    %v2332 = vadd.f32 0.0, %v2331
    %v2333 = vpop.f32.mrb[0].mxu0
    %2334 = vmatprep.mubr.f32.mxu0 0.0
    %2335 = vmatmul.mubr.f32.gmra.mrb[0].mxu0 %v2053
    %v2336 = vpop.f32.mrb[0].mxu0
    %v2337 = vadd.f32 0.0, %v2336
    %v2338 = vpop.f32.mrb[0].mxu0
    %2339 = vmatprep.mubr.f32.mxu0 0.0
    %2340 = vmatmul.mubr.f32.gmra.mrb[0].mxu0 %v2054
    %v2341 = vpop.f32.mrb[0].mxu0
    %v2342 = vadd.f32 0.0, %v2341
    %v2343 = vpop.f32.mrb[0].mxu0
    %2344 = vmatprep.mubr.f32.mxu0 0.0
    %2345 = vmatmul.mubr.f32.gmra.mrb[0].mxu0 %v2055
    %v2346 = vpop.f32.mrb[0].mxu0
    %v2347 = vadd.f32 0.0, %v2346
    %v2348 = vpop.f32.mrb[0].mxu0
    %2349 = vmatprep.mubr.f32.mxu0 0.0
    %2350 = vmatmul.mubr.f32.gmra.mrb[0].mxu0 %v2056
    %v2351 = vpop.f32.mrb[0].mxu0
    %v2352 = vadd.f32 0.0, %v2351
    %v2353 = vpop.f32.mrb[0].mxu0
    %2354 = vmatprep.mubr.f32.mxu0 0.0
    %2355 = vmatmul.mubr.f32.gmra.mrb[0].mxu0 %v2057
    %v2356 = vpop.f32.mrb[0].mxu0
    %v2357 = vadd.f32 0.0, %v2356
    %v2358 = vpop.f32.mrb[0].mxu0
    %2359 = vmatprep.mubr.f32.mxu0 0.0
    %2360 = vmatmul.mubr.f32.gmra.mrb[0].mxu0 %v2058
    %v2361 = vpop.f32.mrb[0].mxu0
    %v2362 = vadd.f32 0.0, %v2361
    %v2363 = vpop.f32.mrb[0].mxu0
    %2364 = vmatprep.mubr.f32.mxu0 0.0
    %2365 = vmatmul.mubr.f32.gmra.mrb[0].mxu0 %v2059
    %v2366 = vpop.f32.mrb[0].mxu0
    %v2367 = vadd.f32 0.0, %v2366
    %v2368 = vpop.f32.mrb[0].mxu0
    %2369 = vmatprep.mubr.f32.mxu0 0.0
    %2370 = vmatmul.mubr.f32.gmra.mrb[0].mxu0 %v2060
    %v2371 = vpop.f32.mrb[0].mxu0
    %v2372 = vadd.f32 0.0, %v2371
    %v2373 = vpop.f32.mrb[0].mxu0
    %2374 = vmatprep.mubr.f32.mxu0 0.0
    %2375 = vmatmul.mubr.f32.gmra.mrb[0].mxu0 %v2061
    %v2376 = vpop.f32.mrb[0].mxu0
    %v2377 = vadd.f32 0.0, %v2376
    %v2378 = vpop.f32.mrb[0].mxu0
    %2379 = vmatprep.mubr.f32.mxu0 0.0
    %2380 = vmatmul.mubr.f32.gmra.mrb[0].mxu0 %v2062
    %v2381 = vpop.f32.mrb[0].mxu0
    %v2382 = vadd.f32 0.0, %v2381
    %v2383 = vpop.f32.mrb[0].mxu0
    %2384 = vmatprep.mubr.f32.mxu0 0.0
    %2385 = vmatmul.mubr.f32.gmra.mrb[0].mxu0 %v2063
    %v2386 = vpop.f32.mrb[0].mxu0
    %v2387 = vadd.f32 0.0, %v2386
    %v2388 = vpop.f32.mrb[0].mxu0
    %2389 = vmatprep.mubr.f32.mxu0 0.0
    %2390 = vmatmul.mubr.f32.gmra.mrb[0].mxu0 %v2064
    %v2391 = vpop.f32.mrb[0].mxu0
    %v2392 = vadd.f32 0.0, %v2391
    %v2393 = vpop.f32.mrb[0].mxu0
    %2394 = vmatprep.mubr.f32.mxu0 0.0
    %2395 = vmatmul.mubr.f32.gmra.mrb[0].mxu0 %v2065
    %v2396 = vpop.f32.mrb[0].mxu0
    %v2397 = vadd.f32 0.0, %v2396
    %v2398 = vpop.f32.mrb[0].mxu0
    %2399 = vmatprep.mubr.f32.mxu0 0.0
    %2400 = vmatmul.mubr.f32.gmra.mrb[0].mxu0 %v2066
    %v2401 = vpop.f32.mrb[0].mxu0
    %v2402 = vadd.f32 0.0, %v2401
    %v2403 = vpop.f32.mrb[0].mxu0
    %2404 = vmatprep.mubr.f32.mxu0 0.0
    %2405 = vmatmul.mubr.f32.gmra.mrb[0].mxu0 %v2067
    %v2406 = vpop.f32.mrb[0].mxu0
    %v2407 = vadd.f32 0.0, %v2406
    %v2408 = vpop.f32.mrb[0].mxu0
    %2409 = vmatprep.mubr.f32.mxu0 0.0
    %2410 = vmatmul.mubr.f32.gmra.mrb[0].mxu0 %v2068
    %v2411 = vpop.f32.mrb[0].mxu0
    %v2412 = vadd.f32 0.0, %v2411
    %v2413 = vpop.f32.mrb[0].mxu0
    %2414 = vmatprep.mubr.f32.mxu0 0.0
    %2415 = vmatmul.mubr.f32.gmra.mrb[0].mxu0 %v2069
    %v2416 = vpop.f32.mrb[0].mxu0
    %v2417 = vadd.f32 0.0, %v2416
    %v2418 = vpop.f32.mrb[0].mxu0
    %2419 = vmatprep.mubr.f32.mxu0 0.0
    %2420 = vmatmul.mubr.f32.gmra.mrb[0].mxu0 %v2070
    %v2421 = vpop.f32.mrb[0].mxu0
    %v2422 = vadd.f32 0.0, %v2421
    %v2423 = vpop.f32.mrb[0].mxu0
    %2424 = vmatprep.mubr.f32.mxu0 0.0
    %2425 = vmatmul.mubr.f32.gmra.mrb[0].mxu0 %v2071
    %v2426 = vpop.f32.mrb[0].mxu0
    %v2427 = vadd.f32 0.0, %v2426
    %v2428 = vpop.f32.mrb[0].mxu0
    %2429 = vmatprep.mubr.f32.mxu0 0.0
    %2430 = vmatmul.mubr.f32.gmra.mrb[0].mxu0 %v2072
    %v2431 = vpop.f32.mrb[0].mxu0
    %v2432 = vadd.f32 0.0, %v2431
    %v2433 = vpop.f32.mrb[0].mxu0
    %2434 = vmatprep.mubr.f32.mxu0 0.0
    %2435 = vmatmul.mubr.f32.gmra.mrb[0].mxu0 %v2073
    %v2436 = vpop.f32.mrb[0].mxu0
    %v2437 = vadd.f32 0.0, %v2436
    %v2438 = vpop.f32.mrb[0].mxu0
    %2439 = vmatprep.mubr.f32.mxu0 0.0
    %2440 = vmatmul.mubr.f32.gmra.mrb[0].mxu0 %v2074
    %v2441 = vpop.f32.mrb[0].mxu0
    %v2442 = vadd.f32 0.0, %v2441
    %v2443 = vpop.f32.mrb[0].mxu0
    %2444 = vmatprep.mubr.f32.mxu0 0.0
    %2445 = vmatmul.mubr.f32.gmra.mrb[0].mxu0 %v2075
    %v2446 = vpop.f32.mrb[0].mxu0
    %v2447 = vadd.f32 0.0, %v2446
    %v2448 = vpop.f32.mrb[0].mxu0
    %2449 = vmatprep.mubr.f32.mxu0 0.0
    %2450 = vmatmul.mubr.f32.gmra.mrb[0].mxu0 %v2076
    %v2451 = vpop.f32.mrb[0].mxu0
    %v2452 = vadd.f32 0.0, %v2451
    %v2453 = vpop.f32.mrb[0].mxu0
    %2454 = vmatprep.mubr.f32.mxu0 0.0
    %2455 = vmatmul.mubr.f32.gmra.mrb[0].mxu0 %v2077
    %v2456 = vpop.f32.mrb[0].mxu0
    %v2457 = vadd.f32 0.0, %v2456
    %v2458 = vpop.f32.mrb[0].mxu0
    %2459 = vmatprep.mubr.f32.mxu0 0.0
    %2460 = vmatmul.mubr.f32.gmra.mrb[0].mxu0 %v2078
    %v2461 = vpop.f32.mrb[0].mxu0
    %v2462 = vadd.f32 0.0, %v2461
    %v2463 = vpop.f32.mrb[0].mxu0
    %2464 = vmatprep.mubr.f32.mxu0 0.0
    %2465 = vmatmul.mubr.f32.gmra.mrb[0].mxu0 %v2079
    %v2466 = vpop.f32.mrb[0].mxu0
    %v2467 = vadd.f32 0.0, %v2466
    %v2468 = vpop.f32.mrb[0].mxu0
    %2469 = vmatprep.mubr.f32.mxu0 0.0
    %2470 = vmatmul.mubr.f32.gmra.mrb[0].mxu0 %v2080
    %v2471 = vpop.f32.mrb[0].mxu0
    %v2472 = vadd.f32 0.0, %v2471
    %v2473 = vpop.f32.mrb[0].mxu0
    %2474 = vmatprep.mubr.f32.mxu0 0.0
    %2475 = vmatmul.mubr.f32.gmra.mrb[0].mxu0 %v2081
    %v2476 = vpop.f32.mrb[0].mxu0
    %v2477 = vadd.f32 0.0, %v2476
    %v2478 = vpop.f32.mrb[0].mxu0
    %2479 = vmatprep.mubr.f32.mxu0 0.0
    %2480 = vmatmul.mubr.f32.gmra.mrb[0].mxu0 %v2082
    %v2481 = vpop.f32.mrb[0].mxu0
    %v2482 = vadd.f32 0.0, %v2481
    %v2483 = vpop.f32.mrb[0].mxu0
    %2484 = vdwg.mxu0
    %v2485 = vadd.f32 %v1955, %v2167
    %v2486 = vadd.f32 %v1956, %v2172
    %v2487 = vadd.f32 %v1957, %v2177
    %v2488 = vadd.f32 %v1958, %v2182
    %v2489 = vadd.f32 %v1959, %v2187
    %v2490 = vadd.f32 %v1960, %v2192
    %v2491 = vadd.f32 %v1961, %v2197
    %v2492 = vadd.f32 %v1962, %v2202
    %v2493 = vadd.f32 %v1963, %v2207
    %v2494 = vadd.f32 %v1964, %v2212
    %v2495 = vadd.f32 %v1965, %v2217
    %v2496 = vadd.f32 %v1966, %v2222
    %v2497 = vadd.f32 %v1967, %v2227
    %v2498 = vadd.f32 %v1968, %v2232
    %v2499 = vadd.f32 %v1969, %v2237
    %v2500 = vadd.f32 %v1970, %v2242
    %v2501 = vadd.f32 %v1971, %v2247
    %v2502 = vadd.f32 %v1972, %v2252
    %v2503 = vadd.f32 %v1973, %v2257
    %v2504 = vadd.f32 %v1974, %v2262
    %v2505 = vadd.f32 %v1975, %v2267
    %v2506 = vadd.f32 %v1976, %v2272
    %v2507 = vadd.f32 %v1977, %v2277
    %v2508 = vadd.f32 %v1978, %v2282
    %v2509 = vadd.f32 %v1979, %v2287
    %v2510 = vadd.f32 %v1980, %v2292
    %v2511 = vadd.f32 %v1981, %v2297
    %v2512 = vadd.f32 %v1982, %v2302
    %v2513 = vadd.f32 %v1983, %v2307
    %v2514 = vadd.f32 %v1984, %v2312
    %v2515 = vadd.f32 %v1985, %v2317
    %v2516 = vadd.f32 %v1986, %v2322
    %v2517 = vadd.f32 %v1987, %v2327
    %v2518 = vadd.f32 %v1988, %v2332
    %v2519 = vadd.f32 %v1989, %v2337
    %v2520 = vadd.f32 %v1990, %v2342
    %v2521 = vadd.f32 %v1991, %v2347
    %v2522 = vadd.f32 %v1992, %v2352
    %v2523 = vadd.f32 %v1993, %v2357
    %v2524 = vadd.f32 %v1994, %v2362
    %v2525 = vadd.f32 %v1995, %v2367
    %v2526 = vadd.f32 %v1996, %v2372
    %v2527 = vadd.f32 %v1997, %v2377
    %v2528 = vadd.f32 %v1998, %v2382
    %v2529 = vadd.f32 %v1999, %v2387
    %v2530 = vadd.f32 %v2000, %v2392
    %v2531 = vadd.f32 %v2001, %v2397
    %v2532 = vadd.f32 %v2002, %v2402
    %v2533 = vadd.f32 %v2003, %v2407
    %v2534 = vadd.f32 %v2004, %v2412
    %v2535 = vadd.f32 %v2005, %v2417
    %v2536 = vadd.f32 %v2006, %v2422
    %v2537 = vadd.f32 %v2007, %v2427
    %v2538 = vadd.f32 %v2008, %v2432
    %v2539 = vadd.f32 %v2009, %v2437
    %v2540 = vadd.f32 %v2010, %v2442
    %v2541 = vadd.f32 %v2011, %v2447
    %v2542 = vadd.f32 %v2012, %v2452
    %v2543 = vadd.f32 %v2013, %v2457
    %v2544 = vadd.f32 %v2014, %v2462
    %v2545 = vadd.f32 %v2015, %v2467
    %v2546 = vadd.f32 %v2016, %v2472
    %v2547 = vadd.f32 %v2017, %v2477
    %v2548 = vadd.f32 %v2018, %v2482
    %v2549 = vld [vmem:[%s1488 + $0x2] sm:$0xff]
    %v2550 = vld [vmem:[%s1488 + $0xa] sm:$0xff]
    %v2551 = vld [vmem:[%s1488 + $0x12] sm:$0xff]
    %v2552 = vld [vmem:[%s1488 + $0x1a] sm:$0xff]
    %v2553 = vld [vmem:[%s1488 + $0x2a] sm:$0xff]
    %v2554 = vld [vmem:[%s1488 + $0x32] sm:$0xff]
    %v2555 = vld [vmem:[%s1488 + $0x3a] sm:$0xff]
    %v2556 = vld [vmem:[%s1488 + $0x42] sm:$0xff]
    %v2557 = vld [vmem:[%s1488 + $0x52] sm:$0xff]
    %v2558 = vld [vmem:[%s1488 + $0x5a] sm:$0xff]
    %v2559 = vld [vmem:[%s1488 + $0x62] sm:$0xff]
    %v2560 = vld [vmem:[%s1488 + $0x6a] sm:$0xff]
    %v2561 = vld [vmem:[%s1488 + $0x7a] sm:$0xff]
    %v2562 = vld [vmem:[%s1488 + $0x82] sm:$0xff]
    %v2563 = vld [vmem:[%s1488 + $0x8a] sm:$0xff]
    %v2564 = vld [vmem:[%s1488 + $0x92] sm:$0xff]
    %v2565 = vld [vmem:[%s1488 + $0xa2] sm:$0xff]
    %v2566 = vld [vmem:[%s1488 + $0xaa] sm:$0xff]
    %v2567 = vld [vmem:[%s1488 + $0xb2] sm:$0xff]
    %v2568 = vld [vmem:[%s1488 + $0xba] sm:$0xff]
    %v2569 = vld [vmem:[%s1488 + $0xca] sm:$0xff]
    %v2570 = vld [vmem:[%s1488 + $0xd2] sm:$0xff]
    %v2571 = vld [vmem:[%s1488 + $0xda] sm:$0xff]
    %v2572 = vld [vmem:[%s1488 + $0xe2] sm:$0xff]
    %v2573 = vld [vmem:[%s1488 + $0xf2] sm:$0xff]
    %v2574 = vld [vmem:[%s1488 + $0xfa] sm:$0xff]
    %v2575 = vld [vmem:[%s1488 + $0x102] sm:$0xff]
    %v2576 = vld [vmem:[%s1488 + $0x10a] sm:$0xff]
    %v2577 = vld [vmem:[%s1488 + $0x11a] sm:$0xff]
    %v2578 = vld [vmem:[%s1488 + $0x122] sm:$0xff]
    %v2579 = vld [vmem:[%s1488 + $0x12a] sm:$0xff]
    %v2580 = vld [vmem:[%s1488 + $0x132] sm:$0xff]
    %v2581 = vld [vmem:[%s1488 + $0x192] sm:$0xff]
    %v2582 = vld [vmem:[%s1488 + $0x19a] sm:$0xff]
    %v2583 = vld [vmem:[%s1488 + $0x1a2] sm:$0xff]
    %v2584 = vld [vmem:[%s1488 + $0x1aa] sm:$0xff]
    %v2585 = vld [vmem:[%s1488 + $0x1ba] sm:$0xff]
    %v2586 = vld [vmem:[%s1488 + $0x1c2] sm:$0xff]
    %v2587 = vld [vmem:[%s1488 + $0x1ca] sm:$0xff]
    %v2588 = vld [vmem:[%s1488 + $0x1d2] sm:$0xff]
    %v2589 = vld [vmem:[%s1488 + $0x1e2] sm:$0xff]
    %v2590 = vld [vmem:[%s1488 + $0x1ea] sm:$0xff]
    %v2591 = vld [vmem:[%s1488 + $0x1f2] sm:$0xff]
    %v2592 = vld [vmem:[%s1488 + $0x1fa] sm:$0xff]
    %v2593 = vld [vmem:[%s1488 + $0x20a] sm:$0xff]
    %v2594 = vld [vmem:[%s1488 + $0x212] sm:$0xff]
    %v2595 = vld [vmem:[%s1488 + $0x21a] sm:$0xff]
    %v2596 = vld [vmem:[%s1488 + $0x222] sm:$0xff]
    %v2597 = vld [vmem:[%s1488 + $0x232] sm:$0xff]
    %v2598 = vld [vmem:[%s1488 + $0x23a] sm:$0xff]
    %v2599 = vld [vmem:[%s1488 + $0x242] sm:$0xff]
    %v2600 = vld [vmem:[%s1488 + $0x24a] sm:$0xff]
    %v2601 = vld [vmem:[%s1488 + $0x25a] sm:$0xff]
    %v2602 = vld [vmem:[%s1488 + $0x262] sm:$0xff]
    %v2603 = vld [vmem:[%s1488 + $0x26a] sm:$0xff]
    %v2604 = vld [vmem:[%s1488 + $0x272] sm:$0xff]
    %v2605 = vld [vmem:[%s1488 + $0x282] sm:$0xff]
    %v2606 = vld [vmem:[%s1488 + $0x28a] sm:$0xff]
    %v2607 = vld [vmem:[%s1488 + $0x292] sm:$0xff]
    %v2608 = vld [vmem:[%s1488 + $0x29a] sm:$0xff]
    %v2609 = vld [vmem:[%s1488 + $0x2aa] sm:$0xff]
    %v2610 = vld [vmem:[%s1488 + $0x2b2] sm:$0xff]
    %v2611 = vld [vmem:[%s1488 + $0x2ba] sm:$0xff]
    %v2612 = vld [vmem:[%s1488 + $0x2c2] sm:$0xff]
    %s2613 = scalar_lea.vmem %s2, 640
    %v2614 = vld [vmem:[%s2613] sm:$0xff]
    %v2615 = vld [vmem:[%s2613 + $0x8] sm:$0xff]
    %v2616 = vld [vmem:[%s2613 + $0x10] sm:$0xff]
    %v2617 = vld [vmem:[%s2613 + $0x18] sm:$0xff]
    %v2618 = vld [vmem:[%s2613 + $0x20] sm:$0xff]
    %v2619 = vld [vmem:[%s2613 + $0x28] sm:$0xff]
    %v2620 = vld [vmem:[%s2613 + $0x30] sm:$0xff]
    %v2621 = vld [vmem:[%s2613 + $0x38] sm:$0xff]
    %v2622 = vld [vmem:[%s2613 + $0x40] sm:$0xff]
    %v2623 = vld [vmem:[%s2613 + $0x48] sm:$0xff]
    %v2624 = vld [vmem:[%s2613 + $0x50] sm:$0xff]
    %v2625 = vld [vmem:[%s2613 + $0x58] sm:$0xff]
    %v2626 = vld [vmem:[%s2613 + $0x60] sm:$0xff]
    %v2627 = vld [vmem:[%s2613 + $0x68] sm:$0xff]
    %v2628 = vld [vmem:[%s2613 + $0x70] sm:$0xff]
    %v2629 = vld [vmem:[%s2613 + $0x78] sm:$0xff]
    %2630 = vmatprep.subr.mxu0 0.0
    %2631 = vmatpush1.msra.mxu0 %v2614
    %2632 = vmatprep.subr.mxu0 0.0
    %2633 = vmatpush1.msra.mxu0 %v2615
    %2634 = vmatprep.subr.mxu0 0.0
    %2635 = vmatpush1.msra.mxu0 %v2616
    %2636 = vmatprep.subr.mxu0 0.0
    %2637 = vmatpush1.msra.mxu0 %v2617
    %2638 = vmatprep.subr.mxu0 0.0
    %2639 = vmatpush1.msra.mxu0 %v2618
    %2640 = vmatprep.subr.mxu0 0.0
    %2641 = vmatpush1.msra.mxu0 %v2619
    %2642 = vmatprep.subr.mxu0 0.0
    %2643 = vmatpush1.msra.mxu0 %v2620
    %2644 = vmatprep.subr.mxu0 0.0
    %2645 = vmatpush1.msra.mxu0 %v2621
    %2646 = vmatprep.subr.mxu0 0.0
    %2647 = vmatpush1.msra.mxu0 %v2622
    %2648 = vmatprep.subr.mxu0 0.0
    %2649 = vmatpush1.msra.mxu0 %v2623
    %2650 = vmatprep.subr.mxu0 0.0
    %2651 = vmatpush1.msra.mxu0 %v2624
    %2652 = vmatprep.subr.mxu0 0.0
    %2653 = vmatpush1.msra.mxu0 %v2625
    %2654 = vmatprep.subr.mxu0 0.0
    %2655 = vmatpush1.msra.mxu0 %v2626
    %2656 = vmatprep.subr.mxu0 0.0
    %2657 = vmatpush1.msra.mxu0 %v2627
    %2658 = vmatprep.subr.mxu0 0.0
    %2659 = vmatpush1.msra.mxu0 %v2628
    %2660 = vmatprep.subr.mxu0 0.0
    %2661 = vmatpush1.msra.mxu0 %v2629
    %2662 = vmatprep.subr.mxu0 0.0
    %2663 = vmatpush1.msra.mxu0 0.0
    %2664 = vmatprep.subr.mxu0 0.0
    %2665 = vmatpush1.msra.mxu0 0.0
    %2666 = vmatprep.subr.mxu0 0.0
    %2667 = vmatpush1.msra.mxu0 0.0
    %2668 = vmatprep.subr.mxu0 0.0
    %2669 = vmatpush1.msra.mxu0 0.0
    %2670 = vmatprep.subr.mxu0 0.0
    %2671 = vmatpush1.msra.mxu0 0.0
    %2672 = vmatprep.subr.mxu0 0.0
    %2673 = vmatpush1.msra.mxu0 0.0
    %2674 = vmatprep.subr.mxu0 0.0
    %2675 = vmatpush1.msra.mxu0 0.0
    %2676 = vmatprep.subr.mxu0 0.0
    %2677 = vmatpush1.msra.mxu0 0.0
    %2678 = vmatprep.subr.mxu0 0.0
    %2679 = vmatpush1.msra.mxu0 0.0
    %2680 = vmatprep.subr.mxu0 0.0
    %2681 = vmatpush1.msra.mxu0 0.0
    %2682 = vmatprep.subr.mxu0 0.0
    %2683 = vmatpush1.msra.mxu0 0.0
    %2684 = vmatprep.subr.mxu0 0.0
    %2685 = vmatpush1.msra.mxu0 0.0
    %2686 = vmatprep.subr.mxu0 0.0
    %2687 = vmatpush1.msra.mxu0 0.0
    %2688 = vmatprep.subr.mxu0 0.0
    %2689 = vmatpush1.msra.mxu0 0.0
    %2690 = vmatprep.subr.mxu0 0.0
    %2691 = vmatpush1.msra.mxu0 0.0
    %2692 = vmatprep.subr.mxu0 0.0
    %2693 = vmatpush1.msra.mxu0 0.0
    %2694 = vmatprep.mubr.f32.mxu0 0.0
    %2695 = vmatmul.mubr.f32.gmra.mrb[0].mxu0 %v2549
    %v2696 = vpop.f32.mrb[0].mxu0
    %v2697 = vadd.f32 0.0, %v2696
    %v2698 = vpop.f32.mrb[0].mxu0
    %2699 = vmatprep.mubr.f32.mxu0 0.0
    %2700 = vmatmul.mubr.f32.gmra.mrb[0].mxu0 %v2550
    %v2701 = vpop.f32.mrb[0].mxu0
    %v2702 = vadd.f32 0.0, %v2701
    %v2703 = vpop.f32.mrb[0].mxu0
    %2704 = vmatprep.mubr.f32.mxu0 0.0
    %2705 = vmatmul.mubr.f32.gmra.mrb[0].mxu0 %v2551
    %v2706 = vpop.f32.mrb[0].mxu0
    %v2707 = vadd.f32 0.0, %v2706
    %v2708 = vpop.f32.mrb[0].mxu0
    %2709 = vmatprep.mubr.f32.mxu0 0.0
    %2710 = vmatmul.mubr.f32.gmra.mrb[0].mxu0 %v2552
    %v2711 = vpop.f32.mrb[0].mxu0
    %v2712 = vadd.f32 0.0, %v2711
    %v2713 = vpop.f32.mrb[0].mxu0
    %2714 = vmatprep.mubr.f32.mxu0 0.0
    %2715 = vmatmul.mubr.f32.gmra.mrb[0].mxu0 %v2553
    %v2716 = vpop.f32.mrb[0].mxu0
    %v2717 = vadd.f32 0.0, %v2716
    %v2718 = vpop.f32.mrb[0].mxu0
    %2719 = vmatprep.mubr.f32.mxu0 0.0
    %2720 = vmatmul.mubr.f32.gmra.mrb[0].mxu0 %v2554
    %v2721 = vpop.f32.mrb[0].mxu0
    %v2722 = vadd.f32 0.0, %v2721
    %v2723 = vpop.f32.mrb[0].mxu0
    %2724 = vmatprep.mubr.f32.mxu0 0.0
    %2725 = vmatmul.mubr.f32.gmra.mrb[0].mxu0 %v2555
    %v2726 = vpop.f32.mrb[0].mxu0
    %v2727 = vadd.f32 0.0, %v2726
    %v2728 = vpop.f32.mrb[0].mxu0
    %2729 = vmatprep.mubr.f32.mxu0 0.0
    %2730 = vmatmul.mubr.f32.gmra.mrb[0].mxu0 %v2556
    %v2731 = vpop.f32.mrb[0].mxu0
    %v2732 = vadd.f32 0.0, %v2731
    %v2733 = vpop.f32.mrb[0].mxu0
    %2734 = vmatprep.mubr.f32.mxu0 0.0
    %2735 = vmatmul.mubr.f32.gmra.mrb[0].mxu0 %v2557
    %v2736 = vpop.f32.mrb[0].mxu0
    %v2737 = vadd.f32 0.0, %v2736
    %v2738 = vpop.f32.mrb[0].mxu0
    %2739 = vmatprep.mubr.f32.mxu0 0.0
    %2740 = vmatmul.mubr.f32.gmra.mrb[0].mxu0 %v2558
    %v2741 = vpop.f32.mrb[0].mxu0
    %v2742 = vadd.f32 0.0, %v2741
    %v2743 = vpop.f32.mrb[0].mxu0
    %2744 = vmatprep.mubr.f32.mxu0 0.0
    %2745 = vmatmul.mubr.f32.gmra.mrb[0].mxu0 %v2559
    %v2746 = vpop.f32.mrb[0].mxu0
    %v2747 = vadd.f32 0.0, %v2746
    %v2748 = vpop.f32.mrb[0].mxu0
    %2749 = vmatprep.mubr.f32.mxu0 0.0
    %2750 = vmatmul.mubr.f32.gmra.mrb[0].mxu0 %v2560
    %v2751 = vpop.f32.mrb[0].mxu0
    %v2752 = vadd.f32 0.0, %v2751
    %v2753 = vpop.f32.mrb[0].mxu0
    %2754 = vmatprep.mubr.f32.mxu0 0.0
    %2755 = vmatmul.mubr.f32.gmra.mrb[0].mxu0 %v2561
    %v2756 = vpop.f32.mrb[0].mxu0
    %v2757 = vadd.f32 0.0, %v2756
    %v2758 = vpop.f32.mrb[0].mxu0
    %2759 = vmatprep.mubr.f32.mxu0 0.0
    %2760 = vmatmul.mubr.f32.gmra.mrb[0].mxu0 %v2562
    %v2761 = vpop.f32.mrb[0].mxu0
    %v2762 = vadd.f32 0.0, %v2761
    %v2763 = vpop.f32.mrb[0].mxu0
    %2764 = vmatprep.mubr.f32.mxu0 0.0
    %2765 = vmatmul.mubr.f32.gmra.mrb[0].mxu0 %v2563
    %v2766 = vpop.f32.mrb[0].mxu0
    %v2767 = vadd.f32 0.0, %v2766
    %v2768 = vpop.f32.mrb[0].mxu0
    %2769 = vmatprep.mubr.f32.mxu0 0.0
    %2770 = vmatmul.mubr.f32.gmra.mrb[0].mxu0 %v2564
    %v2771 = vpop.f32.mrb[0].mxu0
    %v2772 = vadd.f32 0.0, %v2771
    %v2773 = vpop.f32.mrb[0].mxu0
    %2774 = vmatprep.mubr.f32.mxu0 0.0
    %2775 = vmatmul.mubr.f32.gmra.mrb[0].mxu0 %v2565
    %v2776 = vpop.f32.mrb[0].mxu0
    %v2777 = vadd.f32 0.0, %v2776
    %v2778 = vpop.f32.mrb[0].mxu0
    %2779 = vmatprep.mubr.f32.mxu0 0.0
    %2780 = vmatmul.mubr.f32.gmra.mrb[0].mxu0 %v2566
    %v2781 = vpop.f32.mrb[0].mxu0
    %v2782 = vadd.f32 0.0, %v2781
    %v2783 = vpop.f32.mrb[0].mxu0
    %2784 = vmatprep.mubr.f32.mxu0 0.0
    %2785 = vmatmul.mubr.f32.gmra.mrb[0].mxu0 %v2567
    %v2786 = vpop.f32.mrb[0].mxu0
    %v2787 = vadd.f32 0.0, %v2786
    %v2788 = vpop.f32.mrb[0].mxu0
    %2789 = vmatprep.mubr.f32.mxu0 0.0
    %2790 = vmatmul.mubr.f32.gmra.mrb[0].mxu0 %v2568
    %v2791 = vpop.f32.mrb[0].mxu0
    %v2792 = vadd.f32 0.0, %v2791
    %v2793 = vpop.f32.mrb[0].mxu0
    %2794 = vmatprep.mubr.f32.mxu0 0.0
    %2795 = vmatmul.mubr.f32.gmra.mrb[0].mxu0 %v2569
    %v2796 = vpop.f32.mrb[0].mxu0
    %v2797 = vadd.f32 0.0, %v2796
    %v2798 = vpop.f32.mrb[0].mxu0
    %2799 = vmatprep.mubr.f32.mxu0 0.0
    %2800 = vmatmul.mubr.f32.gmra.mrb[0].mxu0 %v2570
    %v2801 = vpop.f32.mrb[0].mxu0
    %v2802 = vadd.f32 0.0, %v2801
    %v2803 = vpop.f32.mrb[0].mxu0
    %2804 = vmatprep.mubr.f32.mxu0 0.0
    %2805 = vmatmul.mubr.f32.gmra.mrb[0].mxu0 %v2571
    %v2806 = vpop.f32.mrb[0].mxu0
    %v2807 = vadd.f32 0.0, %v2806
    %v2808 = vpop.f32.mrb[0].mxu0
    %2809 = vmatprep.mubr.f32.mxu0 0.0
    %2810 = vmatmul.mubr.f32.gmra.mrb[0].mxu0 %v2572
    %v2811 = vpop.f32.mrb[0].mxu0
    %v2812 = vadd.f32 0.0, %v2811
    %v2813 = vpop.f32.mrb[0].mxu0
    %2814 = vmatprep.mubr.f32.mxu0 0.0
    %2815 = vmatmul.mubr.f32.gmra.mrb[0].mxu0 %v2573
    %v2816 = vpop.f32.mrb[0].mxu0
    %v2817 = vadd.f32 0.0, %v2816
    %v2818 = vpop.f32.mrb[0].mxu0
    %2819 = vmatprep.mubr.f32.mxu0 0.0
    %2820 = vmatmul.mubr.f32.gmra.mrb[0].mxu0 %v2574
    %v2821 = vpop.f32.mrb[0].mxu0
    %v2822 = vadd.f32 0.0, %v2821
    %v2823 = vpop.f32.mrb[0].mxu0
    %2824 = vmatprep.mubr.f32.mxu0 0.0
    %2825 = vmatmul.mubr.f32.gmra.mrb[0].mxu0 %v2575
    %v2826 = vpop.f32.mrb[0].mxu0
    %v2827 = vadd.f32 0.0, %v2826
    %v2828 = vpop.f32.mrb[0].mxu0
    %2829 = vmatprep.mubr.f32.mxu0 0.0
    %2830 = vmatmul.mubr.f32.gmra.mrb[0].mxu0 %v2576
    %v2831 = vpop.f32.mrb[0].mxu0
    %v2832 = vadd.f32 0.0, %v2831
    %v2833 = vpop.f32.mrb[0].mxu0
    %2834 = vmatprep.mubr.f32.mxu0 0.0
    %2835 = vmatmul.mubr.f32.gmra.mrb[0].mxu0 %v2577
    %v2836 = vpop.f32.mrb[0].mxu0
    %v2837 = vadd.f32 0.0, %v2836
    %v2838 = vpop.f32.mrb[0].mxu0
    %2839 = vmatprep.mubr.f32.mxu0 0.0
    %2840 = vmatmul.mubr.f32.gmra.mrb[0].mxu0 %v2578
    %v2841 = vpop.f32.mrb[0].mxu0
    %v2842 = vadd.f32 0.0, %v2841
    %v2843 = vpop.f32.mrb[0].mxu0
    %2844 = vmatprep.mubr.f32.mxu0 0.0
    %2845 = vmatmul.mubr.f32.gmra.mrb[0].mxu0 %v2579
    %v2846 = vpop.f32.mrb[0].mxu0
    %v2847 = vadd.f32 0.0, %v2846
    %v2848 = vpop.f32.mrb[0].mxu0
    %2849 = vmatprep.mubr.f32.mxu0 0.0
    %2850 = vmatmul.mubr.f32.gmra.mrb[0].mxu0 %v2580
    %v2851 = vpop.f32.mrb[0].mxu0
    %v2852 = vadd.f32 0.0, %v2851
    %v2853 = vpop.f32.mrb[0].mxu0
    %2854 = vmatprep.mubr.f32.mxu0 0.0
    %2855 = vmatmul.mubr.f32.gmra.mrb[0].mxu0 %v2581
    %v2856 = vpop.f32.mrb[0].mxu0
    %v2857 = vadd.f32 0.0, %v2856
    %v2858 = vpop.f32.mrb[0].mxu0
    %2859 = vmatprep.mubr.f32.mxu0 0.0
    %2860 = vmatmul.mubr.f32.gmra.mrb[0].mxu0 %v2582
    %v2861 = vpop.f32.mrb[0].mxu0
    %v2862 = vadd.f32 0.0, %v2861
    %v2863 = vpop.f32.mrb[0].mxu0
    %2864 = vmatprep.mubr.f32.mxu0 0.0
    %2865 = vmatmul.mubr.f32.gmra.mrb[0].mxu0 %v2583
    %v2866 = vpop.f32.mrb[0].mxu0
    %v2867 = vadd.f32 0.0, %v2866
    %v2868 = vpop.f32.mrb[0].mxu0
    %2869 = vmatprep.mubr.f32.mxu0 0.0
    %2870 = vmatmul.mubr.f32.gmra.mrb[0].mxu0 %v2584
    %v2871 = vpop.f32.mrb[0].mxu0
    %v2872 = vadd.f32 0.0, %v2871
    %v2873 = vpop.f32.mrb[0].mxu0
    %2874 = vmatprep.mubr.f32.mxu0 0.0
    %2875 = vmatmul.mubr.f32.gmra.mrb[0].mxu0 %v2585
    %v2876 = vpop.f32.mrb[0].mxu0
    %v2877 = vadd.f32 0.0, %v2876
    %v2878 = vpop.f32.mrb[0].mxu0
    %2879 = vmatprep.mubr.f32.mxu0 0.0
    %2880 = vmatmul.mubr.f32.gmra.mrb[0].mxu0 %v2586
    %v2881 = vpop.f32.mrb[0].mxu0
    %v2882 = vadd.f32 0.0, %v2881
    %v2883 = vpop.f32.mrb[0].mxu0
    %2884 = vmatprep.mubr.f32.mxu0 0.0
    %2885 = vmatmul.mubr.f32.gmra.mrb[0].mxu0 %v2587
    %v2886 = vpop.f32.mrb[0].mxu0
    %v2887 = vadd.f32 0.0, %v2886
    %v2888 = vpop.f32.mrb[0].mxu0
    %2889 = vmatprep.mubr.f32.mxu0 0.0
    %2890 = vmatmul.mubr.f32.gmra.mrb[0].mxu0 %v2588
    %v2891 = vpop.f32.mrb[0].mxu0
    %v2892 = vadd.f32 0.0, %v2891
    %v2893 = vpop.f32.mrb[0].mxu0
    %2894 = vmatprep.mubr.f32.mxu0 0.0
    %2895 = vmatmul.mubr.f32.gmra.mrb[0].mxu0 %v2589
    %v2896 = vpop.f32.mrb[0].mxu0
    %v2897 = vadd.f32 0.0, %v2896
    %v2898 = vpop.f32.mrb[0].mxu0
    %2899 = vmatprep.mubr.f32.mxu0 0.0
    %2900 = vmatmul.mubr.f32.gmra.mrb[0].mxu0 %v2590
    %v2901 = vpop.f32.mrb[0].mxu0
    %v2902 = vadd.f32 0.0, %v2901
    %v2903 = vpop.f32.mrb[0].mxu0
    %2904 = vmatprep.mubr.f32.mxu0 0.0
    %2905 = vmatmul.mubr.f32.gmra.mrb[0].mxu0 %v2591
    %v2906 = vpop.f32.mrb[0].mxu0
    %v2907 = vadd.f32 0.0, %v2906
    %v2908 = vpop.f32.mrb[0].mxu0
    %2909 = vmatprep.mubr.f32.mxu0 0.0
    %2910 = vmatmul.mubr.f32.gmra.mrb[0].mxu0 %v2592
    %v2911 = vpop.f32.mrb[0].mxu0
    %v2912 = vadd.f32 0.0, %v2911
    %v2913 = vpop.f32.mrb[0].mxu0
    %2914 = vmatprep.mubr.f32.mxu0 0.0
    %2915 = vmatmul.mubr.f32.gmra.mrb[0].mxu0 %v2593
    %v2916 = vpop.f32.mrb[0].mxu0
    %v2917 = vadd.f32 0.0, %v2916
    %v2918 = vpop.f32.mrb[0].mxu0
    %2919 = vmatprep.mubr.f32.mxu0 0.0
    %2920 = vmatmul.mubr.f32.gmra.mrb[0].mxu0 %v2594
    %v2921 = vpop.f32.mrb[0].mxu0
    %v2922 = vadd.f32 0.0, %v2921
    %v2923 = vpop.f32.mrb[0].mxu0
    %2924 = vmatprep.mubr.f32.mxu0 0.0
    %2925 = vmatmul.mubr.f32.gmra.mrb[0].mxu0 %v2595
    %v2926 = vpop.f32.mrb[0].mxu0
    %v2927 = vadd.f32 0.0, %v2926
    %v2928 = vpop.f32.mrb[0].mxu0
    %2929 = vmatprep.mubr.f32.mxu0 0.0
    %2930 = vmatmul.mubr.f32.gmra.mrb[0].mxu0 %v2596
    %v2931 = vpop.f32.mrb[0].mxu0
    %v2932 = vadd.f32 0.0, %v2931
    %v2933 = vpop.f32.mrb[0].mxu0
    %2934 = vmatprep.mubr.f32.mxu0 0.0
    %2935 = vmatmul.mubr.f32.gmra.mrb[0].mxu0 %v2597
    %v2936 = vpop.f32.mrb[0].mxu0
    %v2937 = vadd.f32 0.0, %v2936
    %v2938 = vpop.f32.mrb[0].mxu0
    %2939 = vmatprep.mubr.f32.mxu0 0.0
    %2940 = vmatmul.mubr.f32.gmra.mrb[0].mxu0 %v2598
    %v2941 = vpop.f32.mrb[0].mxu0
    %v2942 = vadd.f32 0.0, %v2941
    %v2943 = vpop.f32.mrb[0].mxu0
    %2944 = vmatprep.mubr.f32.mxu0 0.0
    %2945 = vmatmul.mubr.f32.gmra.mrb[0].mxu0 %v2599
    %v2946 = vpop.f32.mrb[0].mxu0
    %v2947 = vadd.f32 0.0, %v2946
    %v2948 = vpop.f32.mrb[0].mxu0
    %2949 = vmatprep.mubr.f32.mxu0 0.0
    %2950 = vmatmul.mubr.f32.gmra.mrb[0].mxu0 %v2600
    %v2951 = vpop.f32.mrb[0].mxu0
    %v2952 = vadd.f32 0.0, %v2951
    %v2953 = vpop.f32.mrb[0].mxu0
    %2954 = vmatprep.mubr.f32.mxu0 0.0
    %2955 = vmatmul.mubr.f32.gmra.mrb[0].mxu0 %v2601
    %v2956 = vpop.f32.mrb[0].mxu0
    %v2957 = vadd.f32 0.0, %v2956
    %v2958 = vpop.f32.mrb[0].mxu0
    %2959 = vmatprep.mubr.f32.mxu0 0.0
    %2960 = vmatmul.mubr.f32.gmra.mrb[0].mxu0 %v2602
    %v2961 = vpop.f32.mrb[0].mxu0
    %v2962 = vadd.f32 0.0, %v2961
    %v2963 = vpop.f32.mrb[0].mxu0
    %2964 = vmatprep.mubr.f32.mxu0 0.0
    %2965 = vmatmul.mubr.f32.gmra.mrb[0].mxu0 %v2603
    %v2966 = vpop.f32.mrb[0].mxu0
    %v2967 = vadd.f32 0.0, %v2966
    %v2968 = vpop.f32.mrb[0].mxu0
    %2969 = vmatprep.mubr.f32.mxu0 0.0
    %2970 = vmatmul.mubr.f32.gmra.mrb[0].mxu0 %v2604
    %v2971 = vpop.f32.mrb[0].mxu0
    %v2972 = vadd.f32 0.0, %v2971
    %v2973 = vpop.f32.mrb[0].mxu0
    %2974 = vmatprep.mubr.f32.mxu0 0.0
    %2975 = vmatmul.mubr.f32.gmra.mrb[0].mxu0 %v2605
    %v2976 = vpop.f32.mrb[0].mxu0
    %v2977 = vadd.f32 0.0, %v2976
    %v2978 = vpop.f32.mrb[0].mxu0
    %2979 = vmatprep.mubr.f32.mxu0 0.0
    %2980 = vmatmul.mubr.f32.gmra.mrb[0].mxu0 %v2606
    %v2981 = vpop.f32.mrb[0].mxu0
    %v2982 = vadd.f32 0.0, %v2981
    %v2983 = vpop.f32.mrb[0].mxu0
    %2984 = vmatprep.mubr.f32.mxu0 0.0
    %2985 = vmatmul.mubr.f32.gmra.mrb[0].mxu0 %v2607
    %v2986 = vpop.f32.mrb[0].mxu0
    %v2987 = vadd.f32 0.0, %v2986
    %v2988 = vpop.f32.mrb[0].mxu0
    %2989 = vmatprep.mubr.f32.mxu0 0.0
    %2990 = vmatmul.mubr.f32.gmra.mrb[0].mxu0 %v2608
    %v2991 = vpop.f32.mrb[0].mxu0
    %v2992 = vadd.f32 0.0, %v2991
    %v2993 = vpop.f32.mrb[0].mxu0
    %2994 = vmatprep.mubr.f32.mxu0 0.0
    %2995 = vmatmul.mubr.f32.gmra.mrb[0].mxu0 %v2609
    %v2996 = vpop.f32.mrb[0].mxu0
    %v2997 = vadd.f32 0.0, %v2996
    %v2998 = vpop.f32.mrb[0].mxu0
    %2999 = vmatprep.mubr.f32.mxu0 0.0
    %3000 = vmatmul.mubr.f32.gmra.mrb[0].mxu0 %v2610
    %v3001 = vpop.f32.mrb[0].mxu0
    %v3002 = vadd.f32 0.0, %v3001
    %v3003 = vpop.f32.mrb[0].mxu0
    %3004 = vmatprep.mubr.f32.mxu0 0.0
    %3005 = vmatmul.mubr.f32.gmra.mrb[0].mxu0 %v2611
    %v3006 = vpop.f32.mrb[0].mxu0
    %v3007 = vadd.f32 0.0, %v3006
    %v3008 = vpop.f32.mrb[0].mxu0
    %3009 = vmatprep.mubr.f32.mxu0 0.0
    %3010 = vmatmul.mubr.f32.gmra.mrb[0].mxu0 %v2612
    %v3011 = vpop.f32.mrb[0].mxu0
    %v3012 = vadd.f32 0.0, %v3011
    %v3013 = vpop.f32.mrb[0].mxu0
    %3014 = vdwg.mxu0
    %v3015 = vadd.f32 %v2485, %v2697
    %v3016 = vadd.f32 %v2486, %v2702
    %v3017 = vadd.f32 %v2487, %v2707
    %v3018 = vadd.f32 %v2488, %v2712
    %v3019 = vadd.f32 %v2489, %v2717
    %v3020 = vadd.f32 %v2490, %v2722
    %v3021 = vadd.f32 %v2491, %v2727
    %v3022 = vadd.f32 %v2492, %v2732
    %v3023 = vadd.f32 %v2493, %v2737
    %v3024 = vadd.f32 %v2494, %v2742
    %v3025 = vadd.f32 %v2495, %v2747
    %v3026 = vadd.f32 %v2496, %v2752
    %v3027 = vadd.f32 %v2497, %v2757
    %v3028 = vadd.f32 %v2498, %v2762
    %v3029 = vadd.f32 %v2499, %v2767
    %v3030 = vadd.f32 %v2500, %v2772
    %v3031 = vadd.f32 %v2501, %v2777
    %v3032 = vadd.f32 %v2502, %v2782
    %v3033 = vadd.f32 %v2503, %v2787
    %v3034 = vadd.f32 %v2504, %v2792
    %v3035 = vadd.f32 %v2505, %v2797
    %v3036 = vadd.f32 %v2506, %v2802
    %v3037 = vadd.f32 %v2507, %v2807
    %v3038 = vadd.f32 %v2508, %v2812
    %v3039 = vadd.f32 %v2509, %v2817
    %v3040 = vadd.f32 %v2510, %v2822
    %v3041 = vadd.f32 %v2511, %v2827
    %v3042 = vadd.f32 %v2512, %v2832
    %v3043 = vadd.f32 %v2513, %v2837
    %v3044 = vadd.f32 %v2514, %v2842
    %v3045 = vadd.f32 %v2515, %v2847
    %v3046 = vadd.f32 %v2516, %v2852
    %v3047 = vadd.f32 %v2517, %v2857
    %v3048 = vadd.f32 %v2518, %v2862
    %v3049 = vadd.f32 %v2519, %v2867
    %v3050 = vadd.f32 %v2520, %v2872
    %v3051 = vadd.f32 %v2521, %v2877
    %v3052 = vadd.f32 %v2522, %v2882
    %v3053 = vadd.f32 %v2523, %v2887
    %v3054 = vadd.f32 %v2524, %v2892
    %v3055 = vadd.f32 %v2525, %v2897
    %v3056 = vadd.f32 %v2526, %v2902
    %v3057 = vadd.f32 %v2527, %v2907
    %v3058 = vadd.f32 %v2528, %v2912
    %v3059 = vadd.f32 %v2529, %v2917
    %v3060 = vadd.f32 %v2530, %v2922
    %v3061 = vadd.f32 %v2531, %v2927
    %v3062 = vadd.f32 %v2532, %v2932
    %v3063 = vadd.f32 %v2533, %v2937
    %v3064 = vadd.f32 %v2534, %v2942
    %v3065 = vadd.f32 %v2535, %v2947
    %v3066 = vadd.f32 %v2536, %v2952
    %v3067 = vadd.f32 %v2537, %v2957
    %v3068 = vadd.f32 %v2538, %v2962
    %v3069 = vadd.f32 %v2539, %v2967
    %v3070 = vadd.f32 %v2540, %v2972
    %v3071 = vadd.f32 %v2541, %v2977
    %v3072 = vadd.f32 %v2542, %v2982
    %v3073 = vadd.f32 %v2543, %v2987
    %v3074 = vadd.f32 %v2544, %v2992
    %v3075 = vadd.f32 %v2545, %v2997
    %v3076 = vadd.f32 %v2546, %v3002
    %v3077 = vadd.f32 %v2547, %v3007
    %v3078 = vadd.f32 %v2548, %v3012
    %s3079 = scalar_lea.vmem %s0, 80
    %v3080 = vld [vmem:[%s3079] sm:$0xff]
    %v3081 = vld [vmem:[%s3079 + $0x8] sm:$0xff]
    %v3082 = vld [vmem:[%s3079 + $0x10] sm:$0xff]
    %v3083 = vld [vmem:[%s3079 + $0x18] sm:$0xff]
    %v3084 = vld [vmem:[%s3079 + $0x28] sm:$0xff]
    %v3085 = vld [vmem:[%s3079 + $0x30] sm:$0xff]
    %v3086 = vld [vmem:[%s3079 + $0x38] sm:$0xff]
    %v3087 = vld [vmem:[%s3079 + $0x40] sm:$0xff]
    %v3088 = vld [vmem:[%s3079 + $0x50] sm:$0xff]
    %v3089 = vld [vmem:[%s3079 + $0x58] sm:$0xff]
    %v3090 = vld [vmem:[%s3079 + $0x60] sm:$0xff]
    %v3091 = vld [vmem:[%s3079 + $0x68] sm:$0xff]
    %v3092 = vld [vmem:[%s3079 + $0x78] sm:$0xff]
    %v3093 = vld [vmem:[%s3079 + $0x80] sm:$0xff]
    %v3094 = vld [vmem:[%s3079 + $0x88] sm:$0xff]
    %v3095 = vld [vmem:[%s3079 + $0x90] sm:$0xff]
    %v3096 = vld [vmem:[%s3079 + $0xa0] sm:$0xff]
    %v3097 = vld [vmem:[%s3079 + $0xa8] sm:$0xff]
    %v3098 = vld [vmem:[%s3079 + $0xb0] sm:$0xff]
    %v3099 = vld [vmem:[%s3079 + $0xb8] sm:$0xff]
    %v3100 = vld [vmem:[%s3079 + $0xc8] sm:$0xff]
    %v3101 = vld [vmem:[%s3079 + $0xd0] sm:$0xff]
    %v3102 = vld [vmem:[%s3079 + $0xd8] sm:$0xff]
    %v3103 = vld [vmem:[%s3079 + $0xe0] sm:$0xff]
    %v3104 = vld [vmem:[%s3079 + $0xf0] sm:$0xff]
    %v3105 = vld [vmem:[%s3079 + $0xf8] sm:$0xff]
    %v3106 = vld [vmem:[%s3079 + $0x100] sm:$0xff]
    %v3107 = vld [vmem:[%s3079 + $0x108] sm:$0xff]
    %v3108 = vld [vmem:[%s3079 + $0x118] sm:$0xff]
    %v3109 = vld [vmem:[%s3079 + $0x120] sm:$0xff]
    %v3110 = vld [vmem:[%s3079 + $0x128] sm:$0xff]
    %v3111 = vld [vmem:[%s3079 + $0x130] sm:$0xff]
    %v3112 = vld [vmem:[%s3079 + $0x190] sm:$0xff]
    %v3113 = vld [vmem:[%s3079 + $0x198] sm:$0xff]
    %v3114 = vld [vmem:[%s3079 + $0x1a0] sm:$0xff]
    %v3115 = vld [vmem:[%s3079 + $0x1a8] sm:$0xff]
    %v3116 = vld [vmem:[%s3079 + $0x1b8] sm:$0xff]
    %v3117 = vld [vmem:[%s3079 + $0x1c0] sm:$0xff]
    %v3118 = vld [vmem:[%s3079 + $0x1c8] sm:$0xff]
    %v3119 = vld [vmem:[%s3079 + $0x1d0] sm:$0xff]
    %v3120 = vld [vmem:[%s3079 + $0x1e0] sm:$0xff]
    %v3121 = vld [vmem:[%s3079 + $0x1e8] sm:$0xff]
    %v3122 = vld [vmem:[%s3079 + $0x1f0] sm:$0xff]
    %v3123 = vld [vmem:[%s3079 + $0x1f8] sm:$0xff]
    %v3124 = vld [vmem:[%s3079 + $0x208] sm:$0xff]
    %v3125 = vld [vmem:[%s3079 + $0x210] sm:$0xff]
    %v3126 = vld [vmem:[%s3079 + $0x218] sm:$0xff]
    %v3127 = vld [vmem:[%s3079 + $0x220] sm:$0xff]
    %v3128 = vld [vmem:[%s3079 + $0x230] sm:$0xff]
    %v3129 = vld [vmem:[%s3079 + $0x238] sm:$0xff]
    %v3130 = vld [vmem:[%s3079 + $0x240] sm:$0xff]
    %v3131 = vld [vmem:[%s3079 + $0x248] sm:$0xff]
    %v3132 = vld [vmem:[%s3079 + $0x258] sm:$0xff]
    %v3133 = vld [vmem:[%s3079 + $0x260] sm:$0xff]
    %v3134 = vld [vmem:[%s3079 + $0x268] sm:$0xff]
    %v3135 = vld [vmem:[%s3079 + $0x270] sm:$0xff]
    %v3136 = vld [vmem:[%s3079 + $0x280] sm:$0xff]
    %v3137 = vld [vmem:[%s3079 + $0x288] sm:$0xff]
    %v3138 = vld [vmem:[%s3079 + $0x290] sm:$0xff]
    %v3139 = vld [vmem:[%s3079 + $0x298] sm:$0xff]
    %v3140 = vld [vmem:[%s3079 + $0x2a8] sm:$0xff]
    %v3141 = vld [vmem:[%s3079 + $0x2b0] sm:$0xff]
    %v3142 = vld [vmem:[%s3079 + $0x2b8] sm:$0xff]
    %v3143 = vld [vmem:[%s3079 + $0x2c0] sm:$0xff]
    %s3144 = scalar_lea.vmem %s2, 768
    %v3145 = vld [vmem:[%s3144] sm:$0xff]
    %v3146 = vld [vmem:[%s3144 + $0x8] sm:$0xff]
    %v3147 = vld [vmem:[%s3144 + $0x10] sm:$0xff]
    %v3148 = vld [vmem:[%s3144 + $0x18] sm:$0xff]
    %v3149 = vld [vmem:[%s3144 + $0x20] sm:$0xff]
    %v3150 = vld [vmem:[%s3144 + $0x28] sm:$0xff]
    %v3151 = vld [vmem:[%s3144 + $0x30] sm:$0xff]
    %v3152 = vld [vmem:[%s3144 + $0x38] sm:$0xff]
    %v3153 = vld [vmem:[%s3144 + $0x40] sm:$0xff]
    %v3154 = vld [vmem:[%s3144 + $0x48] sm:$0xff]
    %v3155 = vld [vmem:[%s3144 + $0x50] sm:$0xff]
    %v3156 = vld [vmem:[%s3144 + $0x58] sm:$0xff]
    %v3157 = vld [vmem:[%s3144 + $0x60] sm:$0xff]
    %v3158 = vld [vmem:[%s3144 + $0x68] sm:$0xff]
    %v3159 = vld [vmem:[%s3144 + $0x70] sm:$0xff]
    %v3160 = vld [vmem:[%s3144 + $0x78] sm:$0xff]
    %3161 = vmatprep.subr.mxu0 0.0
    %3162 = vmatpush1.msra.mxu0 %v3145
    %3163 = vmatprep.subr.mxu0 0.0
    %3164 = vmatpush1.msra.mxu0 %v3146
    %3165 = vmatprep.subr.mxu0 0.0
    %3166 = vmatpush1.msra.mxu0 %v3147
    %3167 = vmatprep.subr.mxu0 0.0
    %3168 = vmatpush1.msra.mxu0 %v3148
    %3169 = vmatprep.subr.mxu0 0.0
    %3170 = vmatpush1.msra.mxu0 %v3149
    %3171 = vmatprep.subr.mxu0 0.0
    %3172 = vmatpush1.msra.mxu0 %v3150
    %3173 = vmatprep.subr.mxu0 0.0
    %3174 = vmatpush1.msra.mxu0 %v3151
    %3175 = vmatprep.subr.mxu0 0.0
    %3176 = vmatpush1.msra.mxu0 %v3152
    %3177 = vmatprep.subr.mxu0 0.0
    %3178 = vmatpush1.msra.mxu0 %v3153
    %3179 = vmatprep.subr.mxu0 0.0
    %3180 = vmatpush1.msra.mxu0 %v3154
    %3181 = vmatprep.subr.mxu0 0.0
    %3182 = vmatpush1.msra.mxu0 %v3155
    %3183 = vmatprep.subr.mxu0 0.0
    %3184 = vmatpush1.msra.mxu0 %v3156
    %3185 = vmatprep.subr.mxu0 0.0
    %3186 = vmatpush1.msra.mxu0 %v3157
    %3187 = vmatprep.subr.mxu0 0.0
    %3188 = vmatpush1.msra.mxu0 %v3158
    %3189 = vmatprep.subr.mxu0 0.0
    %3190 = vmatpush1.msra.mxu0 %v3159
    %3191 = vmatprep.subr.mxu0 0.0
    %3192 = vmatpush1.msra.mxu0 %v3160
    %3193 = vmatprep.subr.mxu0 0.0
    %3194 = vmatpush1.msra.mxu0 0.0
    %3195 = vmatprep.subr.mxu0 0.0
    %3196 = vmatpush1.msra.mxu0 0.0
    %3197 = vmatprep.subr.mxu0 0.0
    %3198 = vmatpush1.msra.mxu0 0.0
    %3199 = vmatprep.subr.mxu0 0.0
    %3200 = vmatpush1.msra.mxu0 0.0
    %3201 = vmatprep.subr.mxu0 0.0
    %3202 = vmatpush1.msra.mxu0 0.0
    %3203 = vmatprep.subr.mxu0 0.0
    %3204 = vmatpush1.msra.mxu0 0.0
    %3205 = vmatprep.subr.mxu0 0.0
    %3206 = vmatpush1.msra.mxu0 0.0
    %3207 = vmatprep.subr.mxu0 0.0
    %3208 = vmatpush1.msra.mxu0 0.0
    %3209 = vmatprep.subr.mxu0 0.0
    %3210 = vmatpush1.msra.mxu0 0.0
    %3211 = vmatprep.subr.mxu0 0.0
    %3212 = vmatpush1.msra.mxu0 0.0
    %3213 = vmatprep.subr.mxu0 0.0
    %3214 = vmatpush1.msra.mxu0 0.0
    %3215 = vmatprep.subr.mxu0 0.0
    %3216 = vmatpush1.msra.mxu0 0.0
    %3217 = vmatprep.subr.mxu0 0.0
    %3218 = vmatpush1.msra.mxu0 0.0
    %3219 = vmatprep.subr.mxu0 0.0
    %3220 = vmatpush1.msra.mxu0 0.0
    %3221 = vmatprep.subr.mxu0 0.0
    %3222 = vmatpush1.msra.mxu0 0.0
    %3223 = vmatprep.subr.mxu0 0.0
    %3224 = vmatpush1.msra.mxu0 0.0
    %3225 = vmatprep.mubr.f32.mxu0 0.0
    %3226 = vmatmul.mubr.f32.gmra.mrb[0].mxu0 %v3080
    %v3227 = vpop.f32.mrb[0].mxu0
    %v3228 = vadd.f32 0.0, %v3227
    %v3229 = vpop.f32.mrb[0].mxu0
    %3230 = vmatprep.mubr.f32.mxu0 0.0
    %3231 = vmatmul.mubr.f32.gmra.mrb[0].mxu0 %v3081
    %v3232 = vpop.f32.mrb[0].mxu0
    %v3233 = vadd.f32 0.0, %v3232
    %v3234 = vpop.f32.mrb[0].mxu0
    %3235 = vmatprep.mubr.f32.mxu0 0.0
    %3236 = vmatmul.mubr.f32.gmra.mrb[0].mxu0 %v3082
    %v3237 = vpop.f32.mrb[0].mxu0
    %v3238 = vadd.f32 0.0, %v3237
    %v3239 = vpop.f32.mrb[0].mxu0
    %3240 = vmatprep.mubr.f32.mxu0 0.0
    %3241 = vmatmul.mubr.f32.gmra.mrb[0].mxu0 %v3083
    %v3242 = vpop.f32.mrb[0].mxu0
    %v3243 = vadd.f32 0.0, %v3242
    %v3244 = vpop.f32.mrb[0].mxu0
    %3245 = vmatprep.mubr.f32.mxu0 0.0
    %3246 = vmatmul.mubr.f32.gmra.mrb[0].mxu0 %v3084
    %v3247 = vpop.f32.mrb[0].mxu0
    %v3248 = vadd.f32 0.0, %v3247
    %v3249 = vpop.f32.mrb[0].mxu0
    %3250 = vmatprep.mubr.f32.mxu0 0.0
    %3251 = vmatmul.mubr.f32.gmra.mrb[0].mxu0 %v3085
    %v3252 = vpop.f32.mrb[0].mxu0
    %v3253 = vadd.f32 0.0, %v3252
    %v3254 = vpop.f32.mrb[0].mxu0
    %3255 = vmatprep.mubr.f32.mxu0 0.0
    %3256 = vmatmul.mubr.f32.gmra.mrb[0].mxu0 %v3086
    %v3257 = vpop.f32.mrb[0].mxu0
    %v3258 = vadd.f32 0.0, %v3257
    %v3259 = vpop.f32.mrb[0].mxu0
    %3260 = vmatprep.mubr.f32.mxu0 0.0
    %3261 = vmatmul.mubr.f32.gmra.mrb[0].mxu0 %v3087
    %v3262 = vpop.f32.mrb[0].mxu0
    %v3263 = vadd.f32 0.0, %v3262
    %v3264 = vpop.f32.mrb[0].mxu0
    %3265 = vmatprep.mubr.f32.mxu0 0.0
    %3266 = vmatmul.mubr.f32.gmra.mrb[0].mxu0 %v3088
    %v3267 = vpop.f32.mrb[0].mxu0
    %v3268 = vadd.f32 0.0, %v3267
    %v3269 = vpop.f32.mrb[0].mxu0
    %3270 = vmatprep.mubr.f32.mxu0 0.0
    %3271 = vmatmul.mubr.f32.gmra.mrb[0].mxu0 %v3089
    %v3272 = vpop.f32.mrb[0].mxu0
    %v3273 = vadd.f32 0.0, %v3272
    %v3274 = vpop.f32.mrb[0].mxu0
    %3275 = vmatprep.mubr.f32.mxu0 0.0
    %3276 = vmatmul.mubr.f32.gmra.mrb[0].mxu0 %v3090
    %v3277 = vpop.f32.mrb[0].mxu0
    %v3278 = vadd.f32 0.0, %v3277
    %v3279 = vpop.f32.mrb[0].mxu0
    %3280 = vmatprep.mubr.f32.mxu0 0.0
    %3281 = vmatmul.mubr.f32.gmra.mrb[0].mxu0 %v3091
    %v3282 = vpop.f32.mrb[0].mxu0
    %v3283 = vadd.f32 0.0, %v3282
    %v3284 = vpop.f32.mrb[0].mxu0
    %3285 = vmatprep.mubr.f32.mxu0 0.0
    %3286 = vmatmul.mubr.f32.gmra.mrb[0].mxu0 %v3092
    %v3287 = vpop.f32.mrb[0].mxu0
    %v3288 = vadd.f32 0.0, %v3287
    %v3289 = vpop.f32.mrb[0].mxu0
    %3290 = vmatprep.mubr.f32.mxu0 0.0
    %3291 = vmatmul.mubr.f32.gmra.mrb[0].mxu0 %v3093
    %v3292 = vpop.f32.mrb[0].mxu0
    %v3293 = vadd.f32 0.0, %v3292
    %v3294 = vpop.f32.mrb[0].mxu0
    %3295 = vmatprep.mubr.f32.mxu0 0.0
    %3296 = vmatmul.mubr.f32.gmra.mrb[0].mxu0 %v3094
    %v3297 = vpop.f32.mrb[0].mxu0
    %v3298 = vadd.f32 0.0, %v3297
    %v3299 = vpop.f32.mrb[0].mxu0
    %3300 = vmatprep.mubr.f32.mxu0 0.0
    %3301 = vmatmul.mubr.f32.gmra.mrb[0].mxu0 %v3095
    %v3302 = vpop.f32.mrb[0].mxu0
    %v3303 = vadd.f32 0.0, %v3302
    %v3304 = vpop.f32.mrb[0].mxu0
    %3305 = vmatprep.mubr.f32.mxu0 0.0
    %3306 = vmatmul.mubr.f32.gmra.mrb[0].mxu0 %v3096
    %v3307 = vpop.f32.mrb[0].mxu0
    %v3308 = vadd.f32 0.0, %v3307
    %v3309 = vpop.f32.mrb[0].mxu0
    %3310 = vmatprep.mubr.f32.mxu0 0.0
    %3311 = vmatmul.mubr.f32.gmra.mrb[0].mxu0 %v3097
    %v3312 = vpop.f32.mrb[0].mxu0
    %v3313 = vadd.f32 0.0, %v3312
    %v3314 = vpop.f32.mrb[0].mxu0
    %3315 = vmatprep.mubr.f32.mxu0 0.0
    %3316 = vmatmul.mubr.f32.gmra.mrb[0].mxu0 %v3098
    %v3317 = vpop.f32.mrb[0].mxu0
    %v3318 = vadd.f32 0.0, %v3317
    %v3319 = vpop.f32.mrb[0].mxu0
    %3320 = vmatprep.mubr.f32.mxu0 0.0
    %3321 = vmatmul.mubr.f32.gmra.mrb[0].mxu0 %v3099
    %v3322 = vpop.f32.mrb[0].mxu0
    %v3323 = vadd.f32 0.0, %v3322
    %v3324 = vpop.f32.mrb[0].mxu0
    %3325 = vmatprep.mubr.f32.mxu0 0.0
    %3326 = vmatmul.mubr.f32.gmra.mrb[0].mxu0 %v3100
    %v3327 = vpop.f32.mrb[0].mxu0
    %v3328 = vadd.f32 0.0, %v3327
    %v3329 = vpop.f32.mrb[0].mxu0
    %3330 = vmatprep.mubr.f32.mxu0 0.0
    %3331 = vmatmul.mubr.f32.gmra.mrb[0].mxu0 %v3101
    %v3332 = vpop.f32.mrb[0].mxu0
    %v3333 = vadd.f32 0.0, %v3332
    %v3334 = vpop.f32.mrb[0].mxu0
    %3335 = vmatprep.mubr.f32.mxu0 0.0
    %3336 = vmatmul.mubr.f32.gmra.mrb[0].mxu0 %v3102
    %v3337 = vpop.f32.mrb[0].mxu0
    %v3338 = vadd.f32 0.0, %v3337
    %v3339 = vpop.f32.mrb[0].mxu0
    %3340 = vmatprep.mubr.f32.mxu0 0.0
    %3341 = vmatmul.mubr.f32.gmra.mrb[0].mxu0 %v3103
    %v3342 = vpop.f32.mrb[0].mxu0
    %v3343 = vadd.f32 0.0, %v3342
    %v3344 = vpop.f32.mrb[0].mxu0
    %3345 = vmatprep.mubr.f32.mxu0 0.0
    %3346 = vmatmul.mubr.f32.gmra.mrb[0].mxu0 %v3104
    %v3347 = vpop.f32.mrb[0].mxu0
    %v3348 = vadd.f32 0.0, %v3347
    %v3349 = vpop.f32.mrb[0].mxu0
    %3350 = vmatprep.mubr.f32.mxu0 0.0
    %3351 = vmatmul.mubr.f32.gmra.mrb[0].mxu0 %v3105
    %v3352 = vpop.f32.mrb[0].mxu0
    %v3353 = vadd.f32 0.0, %v3352
    %v3354 = vpop.f32.mrb[0].mxu0
    %3355 = vmatprep.mubr.f32.mxu0 0.0
    %3356 = vmatmul.mubr.f32.gmra.mrb[0].mxu0 %v3106
    %v3357 = vpop.f32.mrb[0].mxu0
    %v3358 = vadd.f32 0.0, %v3357
    %v3359 = vpop.f32.mrb[0].mxu0
    %3360 = vmatprep.mubr.f32.mxu0 0.0
    %3361 = vmatmul.mubr.f32.gmra.mrb[0].mxu0 %v3107
    %v3362 = vpop.f32.mrb[0].mxu0
    %v3363 = vadd.f32 0.0, %v3362
    %v3364 = vpop.f32.mrb[0].mxu0
    %3365 = vmatprep.mubr.f32.mxu0 0.0
    %3366 = vmatmul.mubr.f32.gmra.mrb[0].mxu0 %v3108
    %v3367 = vpop.f32.mrb[0].mxu0
    %v3368 = vadd.f32 0.0, %v3367
    %v3369 = vpop.f32.mrb[0].mxu0
    %3370 = vmatprep.mubr.f32.mxu0 0.0
    %3371 = vmatmul.mubr.f32.gmra.mrb[0].mxu0 %v3109
    %v3372 = vpop.f32.mrb[0].mxu0
    %v3373 = vadd.f32 0.0, %v3372
    %v3374 = vpop.f32.mrb[0].mxu0
    %3375 = vmatprep.mubr.f32.mxu0 0.0
    %3376 = vmatmul.mubr.f32.gmra.mrb[0].mxu0 %v3110
    %v3377 = vpop.f32.mrb[0].mxu0
    %v3378 = vadd.f32 0.0, %v3377
    %v3379 = vpop.f32.mrb[0].mxu0
    %3380 = vmatprep.mubr.f32.mxu0 0.0
    %3381 = vmatmul.mubr.f32.gmra.mrb[0].mxu0 %v3111
    %v3382 = vpop.f32.mrb[0].mxu0
    %v3383 = vadd.f32 0.0, %v3382
    %v3384 = vpop.f32.mrb[0].mxu0
    %3385 = vmatprep.mubr.f32.mxu0 0.0
    %3386 = vmatmul.mubr.f32.gmra.mrb[0].mxu0 %v3112
    %v3387 = vpop.f32.mrb[0].mxu0
    %v3388 = vadd.f32 0.0, %v3387
    %v3389 = vpop.f32.mrb[0].mxu0
    %3390 = vmatprep.mubr.f32.mxu0 0.0
    %3391 = vmatmul.mubr.f32.gmra.mrb[0].mxu0 %v3113
    %v3392 = vpop.f32.mrb[0].mxu0
    %v3393 = vadd.f32 0.0, %v3392
    %v3394 = vpop.f32.mrb[0].mxu0
    %3395 = vmatprep.mubr.f32.mxu0 0.0
    %3396 = vmatmul.mubr.f32.gmra.mrb[0].mxu0 %v3114
    %v3397 = vpop.f32.mrb[0].mxu0
    %v3398 = vadd.f32 0.0, %v3397
    %v3399 = vpop.f32.mrb[0].mxu0
    %3400 = vmatprep.mubr.f32.mxu0 0.0
    %3401 = vmatmul.mubr.f32.gmra.mrb[0].mxu0 %v3115
    %v3402 = vpop.f32.mrb[0].mxu0
    %v3403 = vadd.f32 0.0, %v3402
    %v3404 = vpop.f32.mrb[0].mxu0
    %3405 = vmatprep.mubr.f32.mxu0 0.0
    %3406 = vmatmul.mubr.f32.gmra.mrb[0].mxu0 %v3116
    %v3407 = vpop.f32.mrb[0].mxu0
    %v3408 = vadd.f32 0.0, %v3407
    %v3409 = vpop.f32.mrb[0].mxu0
    %3410 = vmatprep.mubr.f32.mxu0 0.0
    %3411 = vmatmul.mubr.f32.gmra.mrb[0].mxu0 %v3117
    %v3412 = vpop.f32.mrb[0].mxu0
    %v3413 = vadd.f32 0.0, %v3412
    %v3414 = vpop.f32.mrb[0].mxu0
    %3415 = vmatprep.mubr.f32.mxu0 0.0
    %3416 = vmatmul.mubr.f32.gmra.mrb[0].mxu0 %v3118
    %v3417 = vpop.f32.mrb[0].mxu0
    %v3418 = vadd.f32 0.0, %v3417
    %v3419 = vpop.f32.mrb[0].mxu0
    %3420 = vmatprep.mubr.f32.mxu0 0.0
    %3421 = vmatmul.mubr.f32.gmra.mrb[0].mxu0 %v3119
    %v3422 = vpop.f32.mrb[0].mxu0
    %v3423 = vadd.f32 0.0, %v3422
    %v3424 = vpop.f32.mrb[0].mxu0
    %3425 = vmatprep.mubr.f32.mxu0 0.0
    %3426 = vmatmul.mubr.f32.gmra.mrb[0].mxu0 %v3120
    %v3427 = vpop.f32.mrb[0].mxu0
    %v3428 = vadd.f32 0.0, %v3427
    %v3429 = vpop.f32.mrb[0].mxu0
    %3430 = vmatprep.mubr.f32.mxu0 0.0
    %3431 = vmatmul.mubr.f32.gmra.mrb[0].mxu0 %v3121
    %v3432 = vpop.f32.mrb[0].mxu0
    %v3433 = vadd.f32 0.0, %v3432
    %v3434 = vpop.f32.mrb[0].mxu0
    %3435 = vmatprep.mubr.f32.mxu0 0.0
    %3436 = vmatmul.mubr.f32.gmra.mrb[0].mxu0 %v3122
    %v3437 = vpop.f32.mrb[0].mxu0
    %v3438 = vadd.f32 0.0, %v3437
    %v3439 = vpop.f32.mrb[0].mxu0
    %3440 = vmatprep.mubr.f32.mxu0 0.0
    %3441 = vmatmul.mubr.f32.gmra.mrb[0].mxu0 %v3123
    %v3442 = vpop.f32.mrb[0].mxu0
    %v3443 = vadd.f32 0.0, %v3442
    %v3444 = vpop.f32.mrb[0].mxu0
    %3445 = vmatprep.mubr.f32.mxu0 0.0
    %3446 = vmatmul.mubr.f32.gmra.mrb[0].mxu0 %v3124
    %v3447 = vpop.f32.mrb[0].mxu0
    %v3448 = vadd.f32 0.0, %v3447
    %v3449 = vpop.f32.mrb[0].mxu0
    %3450 = vmatprep.mubr.f32.mxu0 0.0
    %3451 = vmatmul.mubr.f32.gmra.mrb[0].mxu0 %v3125
    %v3452 = vpop.f32.mrb[0].mxu0
    %v3453 = vadd.f32 0.0, %v3452
    %v3454 = vpop.f32.mrb[0].mxu0
    %3455 = vmatprep.mubr.f32.mxu0 0.0
    %3456 = vmatmul.mubr.f32.gmra.mrb[0].mxu0 %v3126
    %v3457 = vpop.f32.mrb[0].mxu0
    %v3458 = vadd.f32 0.0, %v3457
    %v3459 = vpop.f32.mrb[0].mxu0
    %3460 = vmatprep.mubr.f32.mxu0 0.0
    %3461 = vmatmul.mubr.f32.gmra.mrb[0].mxu0 %v3127
    %v3462 = vpop.f32.mrb[0].mxu0
    %v3463 = vadd.f32 0.0, %v3462
    %v3464 = vpop.f32.mrb[0].mxu0
    %3465 = vmatprep.mubr.f32.mxu0 0.0
    %3466 = vmatmul.mubr.f32.gmra.mrb[0].mxu0 %v3128
    %v3467 = vpop.f32.mrb[0].mxu0
    %v3468 = vadd.f32 0.0, %v3467
    %v3469 = vpop.f32.mrb[0].mxu0
    %3470 = vmatprep.mubr.f32.mxu0 0.0
    %3471 = vmatmul.mubr.f32.gmra.mrb[0].mxu0 %v3129
    %v3472 = vpop.f32.mrb[0].mxu0
    %v3473 = vadd.f32 0.0, %v3472
    %v3474 = vpop.f32.mrb[0].mxu0
    %3475 = vmatprep.mubr.f32.mxu0 0.0
    %3476 = vmatmul.mubr.f32.gmra.mrb[0].mxu0 %v3130
    %v3477 = vpop.f32.mrb[0].mxu0
    %v3478 = vadd.f32 0.0, %v3477
    %v3479 = vpop.f32.mrb[0].mxu0
    %3480 = vmatprep.mubr.f32.mxu0 0.0
    %3481 = vmatmul.mubr.f32.gmra.mrb[0].mxu0 %v3131
    %v3482 = vpop.f32.mrb[0].mxu0
    %v3483 = vadd.f32 0.0, %v3482
    %v3484 = vpop.f32.mrb[0].mxu0
    %3485 = vmatprep.mubr.f32.mxu0 0.0
    %3486 = vmatmul.mubr.f32.gmra.mrb[0].mxu0 %v3132
    %v3487 = vpop.f32.mrb[0].mxu0
    %v3488 = vadd.f32 0.0, %v3487
    %v3489 = vpop.f32.mrb[0].mxu0
    %3490 = vmatprep.mubr.f32.mxu0 0.0
    %3491 = vmatmul.mubr.f32.gmra.mrb[0].mxu0 %v3133
    %v3492 = vpop.f32.mrb[0].mxu0
    %v3493 = vadd.f32 0.0, %v3492
    %v3494 = vpop.f32.mrb[0].mxu0
    %3495 = vmatprep.mubr.f32.mxu0 0.0
    %3496 = vmatmul.mubr.f32.gmra.mrb[0].mxu0 %v3134
    %v3497 = vpop.f32.mrb[0].mxu0
    %v3498 = vadd.f32 0.0, %v3497
    %v3499 = vpop.f32.mrb[0].mxu0
    %3500 = vmatprep.mubr.f32.mxu0 0.0
    %3501 = vmatmul.mubr.f32.gmra.mrb[0].mxu0 %v3135
    %v3502 = vpop.f32.mrb[0].mxu0
    %v3503 = vadd.f32 0.0, %v3502
    %v3504 = vpop.f32.mrb[0].mxu0
    %3505 = vmatprep.mubr.f32.mxu0 0.0
    %3506 = vmatmul.mubr.f32.gmra.mrb[0].mxu0 %v3136
    %v3507 = vpop.f32.mrb[0].mxu0
    %v3508 = vadd.f32 0.0, %v3507
    %v3509 = vpop.f32.mrb[0].mxu0
    %3510 = vmatprep.mubr.f32.mxu0 0.0
    %3511 = vmatmul.mubr.f32.gmra.mrb[0].mxu0 %v3137
    %v3512 = vpop.f32.mrb[0].mxu0
    %v3513 = vadd.f32 0.0, %v3512
    %v3514 = vpop.f32.mrb[0].mxu0
    %3515 = vmatprep.mubr.f32.mxu0 0.0
    %3516 = vmatmul.mubr.f32.gmra.mrb[0].mxu0 %v3138
    %v3517 = vpop.f32.mrb[0].mxu0
    %v3518 = vadd.f32 0.0, %v3517
    %v3519 = vpop.f32.mrb[0].mxu0
    %3520 = vmatprep.mubr.f32.mxu0 0.0
    %3521 = vmatmul.mubr.f32.gmra.mrb[0].mxu0 %v3139
    %v3522 = vpop.f32.mrb[0].mxu0
    %v3523 = vadd.f32 0.0, %v3522
    %v3524 = vpop.f32.mrb[0].mxu0
    %3525 = vmatprep.mubr.f32.mxu0 0.0
    %3526 = vmatmul.mubr.f32.gmra.mrb[0].mxu0 %v3140
    %v3527 = vpop.f32.mrb[0].mxu0
    %v3528 = vadd.f32 0.0, %v3527
    %v3529 = vpop.f32.mrb[0].mxu0
    %3530 = vmatprep.mubr.f32.mxu0 0.0
    %3531 = vmatmul.mubr.f32.gmra.mrb[0].mxu0 %v3141
    %v3532 = vpop.f32.mrb[0].mxu0
    %v3533 = vadd.f32 0.0, %v3532
    %v3534 = vpop.f32.mrb[0].mxu0
    %3535 = vmatprep.mubr.f32.mxu0 0.0
    %3536 = vmatmul.mubr.f32.gmra.mrb[0].mxu0 %v3142
    %v3537 = vpop.f32.mrb[0].mxu0
    %v3538 = vadd.f32 0.0, %v3537
    %v3539 = vpop.f32.mrb[0].mxu0
    %3540 = vmatprep.mubr.f32.mxu0 0.0
    %3541 = vmatmul.mubr.f32.gmra.mrb[0].mxu0 %v3143
    %v3542 = vpop.f32.mrb[0].mxu0
    %v3543 = vadd.f32 0.0, %v3542
    %v3544 = vpop.f32.mrb[0].mxu0
    %3545 = vdwg.mxu0
    %v3546 = vadd.f32 %v3015, %v3228
    %v3547 = vadd.f32 %v3016, %v3233
    %v3548 = vadd.f32 %v3017, %v3238
    %v3549 = vadd.f32 %v3018, %v3243
    %v3550 = vadd.f32 %v3019, %v3248
    %v3551 = vadd.f32 %v3020, %v3253
    %v3552 = vadd.f32 %v3021, %v3258
    %v3553 = vadd.f32 %v3022, %v3263
    %v3554 = vadd.f32 %v3023, %v3268
    %v3555 = vadd.f32 %v3024, %v3273
    %v3556 = vadd.f32 %v3025, %v3278
    %v3557 = vadd.f32 %v3026, %v3283
    %v3558 = vadd.f32 %v3027, %v3288
    %v3559 = vadd.f32 %v3028, %v3293
    %v3560 = vadd.f32 %v3029, %v3298
    %v3561 = vadd.f32 %v3030, %v3303
    %v3562 = vadd.f32 %v3031, %v3308
    %v3563 = vadd.f32 %v3032, %v3313
    %v3564 = vadd.f32 %v3033, %v3318
    %v3565 = vadd.f32 %v3034, %v3323
    %v3566 = vadd.f32 %v3035, %v3328
    %v3567 = vadd.f32 %v3036, %v3333
    %v3568 = vadd.f32 %v3037, %v3338
    %v3569 = vadd.f32 %v3038, %v3343
    %v3570 = vadd.f32 %v3039, %v3348
    %v3571 = vadd.f32 %v3040, %v3353
    %v3572 = vadd.f32 %v3041, %v3358
    %v3573 = vadd.f32 %v3042, %v3363
    %v3574 = vadd.f32 %v3043, %v3368
    %v3575 = vadd.f32 %v3044, %v3373
    %v3576 = vadd.f32 %v3045, %v3378
    %v3577 = vadd.f32 %v3046, %v3383
    %v3578 = vadd.f32 %v3047, %v3388
    %v3579 = vadd.f32 %v3048, %v3393
    %v3580 = vadd.f32 %v3049, %v3398
    %v3581 = vadd.f32 %v3050, %v3403
    %v3582 = vadd.f32 %v3051, %v3408
    %v3583 = vadd.f32 %v3052, %v3413
    %v3584 = vadd.f32 %v3053, %v3418
    %v3585 = vadd.f32 %v3054, %v3423
    %v3586 = vadd.f32 %v3055, %v3428
    %v3587 = vadd.f32 %v3056, %v3433
    %v3588 = vadd.f32 %v3057, %v3438
    %v3589 = vadd.f32 %v3058, %v3443
    %v3590 = vadd.f32 %v3059, %v3448
    %v3591 = vadd.f32 %v3060, %v3453
    %v3592 = vadd.f32 %v3061, %v3458
    %v3593 = vadd.f32 %v3062, %v3463
    %v3594 = vadd.f32 %v3063, %v3468
    %v3595 = vadd.f32 %v3064, %v3473
    %v3596 = vadd.f32 %v3065, %v3478
    %v3597 = vadd.f32 %v3066, %v3483
    %v3598 = vadd.f32 %v3067, %v3488
    %v3599 = vadd.f32 %v3068, %v3493
    %v3600 = vadd.f32 %v3069, %v3498
    %v3601 = vadd.f32 %v3070, %v3503
    %v3602 = vadd.f32 %v3071, %v3508
    %v3603 = vadd.f32 %v3072, %v3513
    %v3604 = vadd.f32 %v3073, %v3518
    %v3605 = vadd.f32 %v3074, %v3523
    %v3606 = vadd.f32 %v3075, %v3528
    %v3607 = vadd.f32 %v3076, %v3533
    %v3608 = vadd.f32 %v3077, %v3538
    %v3609 = vadd.f32 %v3078, %v3543
    %v3610 = vld [vmem:[%s3079 + $0x1] sm:$0xff]
    %v3611 = vld [vmem:[%s3079 + $0x9] sm:$0xff]
    %v3612 = vld [vmem:[%s3079 + $0x11] sm:$0xff]
    %v3613 = vld [vmem:[%s3079 + $0x19] sm:$0xff]
    %v3614 = vld [vmem:[%s3079 + $0x29] sm:$0xff]
    %v3615 = vld [vmem:[%s3079 + $0x31] sm:$0xff]
    %v3616 = vld [vmem:[%s3079 + $0x39] sm:$0xff]
    %v3617 = vld [vmem:[%s3079 + $0x41] sm:$0xff]
    %v3618 = vld [vmem:[%s3079 + $0x51] sm:$0xff]
    %v3619 = vld [vmem:[%s3079 + $0x59] sm:$0xff]
    %v3620 = vld [vmem:[%s3079 + $0x61] sm:$0xff]
    %v3621 = vld [vmem:[%s3079 + $0x69] sm:$0xff]
    %v3622 = vld [vmem:[%s3079 + $0x79] sm:$0xff]
    %v3623 = vld [vmem:[%s3079 + $0x81] sm:$0xff]
    %v3624 = vld [vmem:[%s3079 + $0x89] sm:$0xff]
    %v3625 = vld [vmem:[%s3079 + $0x91] sm:$0xff]
    %v3626 = vld [vmem:[%s3079 + $0xa1] sm:$0xff]
    %v3627 = vld [vmem:[%s3079 + $0xa9] sm:$0xff]
    %v3628 = vld [vmem:[%s3079 + $0xb1] sm:$0xff]
    %v3629 = vld [vmem:[%s3079 + $0xb9] sm:$0xff]
    %v3630 = vld [vmem:[%s3079 + $0xc9] sm:$0xff]
    %v3631 = vld [vmem:[%s3079 + $0xd1] sm:$0xff]
    %v3632 = vld [vmem:[%s3079 + $0xd9] sm:$0xff]
    %v3633 = vld [vmem:[%s3079 + $0xe1] sm:$0xff]
    %v3634 = vld [vmem:[%s3079 + $0xf1] sm:$0xff]
    %v3635 = vld [vmem:[%s3079 + $0xf9] sm:$0xff]
    %v3636 = vld [vmem:[%s3079 + $0x101] sm:$0xff]
    %v3637 = vld [vmem:[%s3079 + $0x109] sm:$0xff]
    %v3638 = vld [vmem:[%s3079 + $0x119] sm:$0xff]
    %v3639 = vld [vmem:[%s3079 + $0x121] sm:$0xff]
    %v3640 = vld [vmem:[%s3079 + $0x129] sm:$0xff]
    %v3641 = vld [vmem:[%s3079 + $0x131] sm:$0xff]
    %v3642 = vld [vmem:[%s3079 + $0x191] sm:$0xff]
    %v3643 = vld [vmem:[%s3079 + $0x199] sm:$0xff]
    %v3644 = vld [vmem:[%s3079 + $0x1a1] sm:$0xff]
    %v3645 = vld [vmem:[%s3079 + $0x1a9] sm:$0xff]
    %v3646 = vld [vmem:[%s3079 + $0x1b9] sm:$0xff]
    %v3647 = vld [vmem:[%s3079 + $0x1c1] sm:$0xff]
    %v3648 = vld [vmem:[%s3079 + $0x1c9] sm:$0xff]
    %v3649 = vld [vmem:[%s3079 + $0x1d1] sm:$0xff]
    %v3650 = vld [vmem:[%s3079 + $0x1e1] sm:$0xff]
    %v3651 = vld [vmem:[%s3079 + $0x1e9] sm:$0xff]
    %v3652 = vld [vmem:[%s3079 + $0x1f1] sm:$0xff]
    %v3653 = vld [vmem:[%s3079 + $0x1f9] sm:$0xff]
    %v3654 = vld [vmem:[%s3079 + $0x209] sm:$0xff]
    %v3655 = vld [vmem:[%s3079 + $0x211] sm:$0xff]
    %v3656 = vld [vmem:[%s3079 + $0x219] sm:$0xff]
    %v3657 = vld [vmem:[%s3079 + $0x221] sm:$0xff]
    %v3658 = vld [vmem:[%s3079 + $0x231] sm:$0xff]
    %v3659 = vld [vmem:[%s3079 + $0x239] sm:$0xff]
    %v3660 = vld [vmem:[%s3079 + $0x241] sm:$0xff]
    %v3661 = vld [vmem:[%s3079 + $0x249] sm:$0xff]
    %v3662 = vld [vmem:[%s3079 + $0x259] sm:$0xff]
    %v3663 = vld [vmem:[%s3079 + $0x261] sm:$0xff]
    %v3664 = vld [vmem:[%s3079 + $0x269] sm:$0xff]
    %v3665 = vld [vmem:[%s3079 + $0x271] sm:$0xff]
    %v3666 = vld [vmem:[%s3079 + $0x281] sm:$0xff]
    %v3667 = vld [vmem:[%s3079 + $0x289] sm:$0xff]
    %v3668 = vld [vmem:[%s3079 + $0x291] sm:$0xff]
    %v3669 = vld [vmem:[%s3079 + $0x299] sm:$0xff]
    %v3670 = vld [vmem:[%s3079 + $0x2a9] sm:$0xff]
    %v3671 = vld [vmem:[%s3079 + $0x2b1] sm:$0xff]
    %v3672 = vld [vmem:[%s3079 + $0x2b9] sm:$0xff]
    %v3673 = vld [vmem:[%s3079 + $0x2c1] sm:$0xff]
    %s3674 = scalar_lea.vmem %s2, 896
    %v3675 = vld [vmem:[%s3674] sm:$0xff]
    %v3676 = vld [vmem:[%s3674 + $0x8] sm:$0xff]
    %v3677 = vld [vmem:[%s3674 + $0x10] sm:$0xff]
    %v3678 = vld [vmem:[%s3674 + $0x18] sm:$0xff]
    %v3679 = vld [vmem:[%s3674 + $0x20] sm:$0xff]
    %v3680 = vld [vmem:[%s3674 + $0x28] sm:$0xff]
    %v3681 = vld [vmem:[%s3674 + $0x30] sm:$0xff]
    %v3682 = vld [vmem:[%s3674 + $0x38] sm:$0xff]
    %v3683 = vld [vmem:[%s3674 + $0x40] sm:$0xff]
    %v3684 = vld [vmem:[%s3674 + $0x48] sm:$0xff]
    %v3685 = vld [vmem:[%s3674 + $0x50] sm:$0xff]
    %v3686 = vld [vmem:[%s3674 + $0x58] sm:$0xff]
    %v3687 = vld [vmem:[%s3674 + $0x60] sm:$0xff]
    %v3688 = vld [vmem:[%s3674 + $0x68] sm:$0xff]
    %v3689 = vld [vmem:[%s3674 + $0x70] sm:$0xff]
    %v3690 = vld [vmem:[%s3674 + $0x78] sm:$0xff]
    %3691 = vmatprep.subr.mxu0 0.0
    %3692 = vmatpush1.msra.mxu0 %v3675
    %3693 = vmatprep.subr.mxu0 0.0
    %3694 = vmatpush1.msra.mxu0 %v3676
    %3695 = vmatprep.subr.mxu0 0.0
    %3696 = vmatpush1.msra.mxu0 %v3677
    %3697 = vmatprep.subr.mxu0 0.0
    %3698 = vmatpush1.msra.mxu0 %v3678
    %3699 = vmatprep.subr.mxu0 0.0
    %3700 = vmatpush1.msra.mxu0 %v3679
    %3701 = vmatprep.subr.mxu0 0.0
    %3702 = vmatpush1.msra.mxu0 %v3680
    %3703 = vmatprep.subr.mxu0 0.0
    %3704 = vmatpush1.msra.mxu0 %v3681
    %3705 = vmatprep.subr.mxu0 0.0
    %3706 = vmatpush1.msra.mxu0 %v3682
    %3707 = vmatprep.subr.mxu0 0.0
    %3708 = vmatpush1.msra.mxu0 %v3683
    %3709 = vmatprep.subr.mxu0 0.0
    %3710 = vmatpush1.msra.mxu0 %v3684
    %3711 = vmatprep.subr.mxu0 0.0
    %3712 = vmatpush1.msra.mxu0 %v3685
    %3713 = vmatprep.subr.mxu0 0.0
    %3714 = vmatpush1.msra.mxu0 %v3686
    %3715 = vmatprep.subr.mxu0 0.0
    %3716 = vmatpush1.msra.mxu0 %v3687
    %3717 = vmatprep.subr.mxu0 0.0
    %3718 = vmatpush1.msra.mxu0 %v3688
    %3719 = vmatprep.subr.mxu0 0.0
    %3720 = vmatpush1.msra.mxu0 %v3689
    %3721 = vmatprep.subr.mxu0 0.0
    %3722 = vmatpush1.msra.mxu0 %v3690
    %3723 = vmatprep.subr.mxu0 0.0
    %3724 = vmatpush1.msra.mxu0 0.0
    %3725 = vmatprep.subr.mxu0 0.0
    %3726 = vmatpush1.msra.mxu0 0.0
    %3727 = vmatprep.subr.mxu0 0.0
    %3728 = vmatpush1.msra.mxu0 0.0
    %3729 = vmatprep.subr.mxu0 0.0
    %3730 = vmatpush1.msra.mxu0 0.0
    %3731 = vmatprep.subr.mxu0 0.0
    %3732 = vmatpush1.msra.mxu0 0.0
    %3733 = vmatprep.subr.mxu0 0.0
    %3734 = vmatpush1.msra.mxu0 0.0
    %3735 = vmatprep.subr.mxu0 0.0
    %3736 = vmatpush1.msra.mxu0 0.0
    %3737 = vmatprep.subr.mxu0 0.0
    %3738 = vmatpush1.msra.mxu0 0.0
    %3739 = vmatprep.subr.mxu0 0.0
    %3740 = vmatpush1.msra.mxu0 0.0
    %3741 = vmatprep.subr.mxu0 0.0
    %3742 = vmatpush1.msra.mxu0 0.0
    %3743 = vmatprep.subr.mxu0 0.0
    %3744 = vmatpush1.msra.mxu0 0.0
    %3745 = vmatprep.subr.mxu0 0.0
    %3746 = vmatpush1.msra.mxu0 0.0
    %3747 = vmatprep.subr.mxu0 0.0
    %3748 = vmatpush1.msra.mxu0 0.0
    %3749 = vmatprep.subr.mxu0 0.0
    %3750 = vmatpush1.msra.mxu0 0.0
    %3751 = vmatprep.subr.mxu0 0.0
    %3752 = vmatpush1.msra.mxu0 0.0
    %3753 = vmatprep.subr.mxu0 0.0
    %3754 = vmatpush1.msra.mxu0 0.0
    %3755 = vmatprep.mubr.f32.mxu0 0.0
    %3756 = vmatmul.mubr.f32.gmra.mrb[0].mxu0 %v3610
    %v3757 = vpop.f32.mrb[0].mxu0
    %v3758 = vadd.f32 0.0, %v3757
    %v3759 = vpop.f32.mrb[0].mxu0
    %3760 = vmatprep.mubr.f32.mxu0 0.0
    %3761 = vmatmul.mubr.f32.gmra.mrb[0].mxu0 %v3611
    %v3762 = vpop.f32.mrb[0].mxu0
    %v3763 = vadd.f32 0.0, %v3762
    %v3764 = vpop.f32.mrb[0].mxu0
    %3765 = vmatprep.mubr.f32.mxu0 0.0
    %3766 = vmatmul.mubr.f32.gmra.mrb[0].mxu0 %v3612
    %v3767 = vpop.f32.mrb[0].mxu0
    %v3768 = vadd.f32 0.0, %v3767
    %v3769 = vpop.f32.mrb[0].mxu0
    %3770 = vmatprep.mubr.f32.mxu0 0.0
    %3771 = vmatmul.mubr.f32.gmra.mrb[0].mxu0 %v3613
    %v3772 = vpop.f32.mrb[0].mxu0
    %v3773 = vadd.f32 0.0, %v3772
    %v3774 = vpop.f32.mrb[0].mxu0
    %3775 = vmatprep.mubr.f32.mxu0 0.0
    %3776 = vmatmul.mubr.f32.gmra.mrb[0].mxu0 %v3614
    %v3777 = vpop.f32.mrb[0].mxu0
    %v3778 = vadd.f32 0.0, %v3777
    %v3779 = vpop.f32.mrb[0].mxu0
    %3780 = vmatprep.mubr.f32.mxu0 0.0
    %3781 = vmatmul.mubr.f32.gmra.mrb[0].mxu0 %v3615
    %v3782 = vpop.f32.mrb[0].mxu0
    %v3783 = vadd.f32 0.0, %v3782
    %v3784 = vpop.f32.mrb[0].mxu0
    %3785 = vmatprep.mubr.f32.mxu0 0.0
    %3786 = vmatmul.mubr.f32.gmra.mrb[0].mxu0 %v3616
    %v3787 = vpop.f32.mrb[0].mxu0
    %v3788 = vadd.f32 0.0, %v3787
    %v3789 = vpop.f32.mrb[0].mxu0
    %3790 = vmatprep.mubr.f32.mxu0 0.0
    %3791 = vmatmul.mubr.f32.gmra.mrb[0].mxu0 %v3617
    %v3792 = vpop.f32.mrb[0].mxu0
    %v3793 = vadd.f32 0.0, %v3792
    %v3794 = vpop.f32.mrb[0].mxu0
    %3795 = vmatprep.mubr.f32.mxu0 0.0
    %3796 = vmatmul.mubr.f32.gmra.mrb[0].mxu0 %v3618
    %v3797 = vpop.f32.mrb[0].mxu0
    %v3798 = vadd.f32 0.0, %v3797
    %v3799 = vpop.f32.mrb[0].mxu0
    %3800 = vmatprep.mubr.f32.mxu0 0.0
    %3801 = vmatmul.mubr.f32.gmra.mrb[0].mxu0 %v3619
    %v3802 = vpop.f32.mrb[0].mxu0
    %v3803 = vadd.f32 0.0, %v3802
    %v3804 = vpop.f32.mrb[0].mxu0
    %3805 = vmatprep.mubr.f32.mxu0 0.0
    %3806 = vmatmul.mubr.f32.gmra.mrb[0].mxu0 %v3620
    %v3807 = vpop.f32.mrb[0].mxu0
    %v3808 = vadd.f32 0.0, %v3807
    %v3809 = vpop.f32.mrb[0].mxu0
    %3810 = vmatprep.mubr.f32.mxu0 0.0
    %3811 = vmatmul.mubr.f32.gmra.mrb[0].mxu0 %v3621
    %v3812 = vpop.f32.mrb[0].mxu0
    %v3813 = vadd.f32 0.0, %v3812
    %v3814 = vpop.f32.mrb[0].mxu0
    %3815 = vmatprep.mubr.f32.mxu0 0.0
    %3816 = vmatmul.mubr.f32.gmra.mrb[0].mxu0 %v3622
    %v3817 = vpop.f32.mrb[0].mxu0
    %v3818 = vadd.f32 0.0, %v3817
    %v3819 = vpop.f32.mrb[0].mxu0
    %3820 = vmatprep.mubr.f32.mxu0 0.0
    %3821 = vmatmul.mubr.f32.gmra.mrb[0].mxu0 %v3623
    %v3822 = vpop.f32.mrb[0].mxu0
    %v3823 = vadd.f32 0.0, %v3822
    %v3824 = vpop.f32.mrb[0].mxu0
    %3825 = vmatprep.mubr.f32.mxu0 0.0
    %3826 = vmatmul.mubr.f32.gmra.mrb[0].mxu0 %v3624
    %v3827 = vpop.f32.mrb[0].mxu0
    %v3828 = vadd.f32 0.0, %v3827
    %v3829 = vpop.f32.mrb[0].mxu0
    %3830 = vmatprep.mubr.f32.mxu0 0.0
    %3831 = vmatmul.mubr.f32.gmra.mrb[0].mxu0 %v3625
    %v3832 = vpop.f32.mrb[0].mxu0
    %v3833 = vadd.f32 0.0, %v3832
    %v3834 = vpop.f32.mrb[0].mxu0
    %3835 = vmatprep.mubr.f32.mxu0 0.0
    %3836 = vmatmul.mubr.f32.gmra.mrb[0].mxu0 %v3626
    %v3837 = vpop.f32.mrb[0].mxu0
    %v3838 = vadd.f32 0.0, %v3837
    %v3839 = vpop.f32.mrb[0].mxu0
    %3840 = vmatprep.mubr.f32.mxu0 0.0
    %3841 = vmatmul.mubr.f32.gmra.mrb[0].mxu0 %v3627
    %v3842 = vpop.f32.mrb[0].mxu0
    %v3843 = vadd.f32 0.0, %v3842
    %v3844 = vpop.f32.mrb[0].mxu0
    %3845 = vmatprep.mubr.f32.mxu0 0.0
    %3846 = vmatmul.mubr.f32.gmra.mrb[0].mxu0 %v3628
    %v3847 = vpop.f32.mrb[0].mxu0
    %v3848 = vadd.f32 0.0, %v3847
    %v3849 = vpop.f32.mrb[0].mxu0
    %3850 = vmatprep.mubr.f32.mxu0 0.0
    %3851 = vmatmul.mubr.f32.gmra.mrb[0].mxu0 %v3629
    %v3852 = vpop.f32.mrb[0].mxu0
    %v3853 = vadd.f32 0.0, %v3852
    %v3854 = vpop.f32.mrb[0].mxu0
    %3855 = vmatprep.mubr.f32.mxu0 0.0
    %3856 = vmatmul.mubr.f32.gmra.mrb[0].mxu0 %v3630
    %v3857 = vpop.f32.mrb[0].mxu0
    %v3858 = vadd.f32 0.0, %v3857
    %v3859 = vpop.f32.mrb[0].mxu0
    %3860 = vmatprep.mubr.f32.mxu0 0.0
    %3861 = vmatmul.mubr.f32.gmra.mrb[0].mxu0 %v3631
    %v3862 = vpop.f32.mrb[0].mxu0
    %v3863 = vadd.f32 0.0, %v3862
    %v3864 = vpop.f32.mrb[0].mxu0
    %3865 = vmatprep.mubr.f32.mxu0 0.0
    %3866 = vmatmul.mubr.f32.gmra.mrb[0].mxu0 %v3632
    %v3867 = vpop.f32.mrb[0].mxu0
    %v3868 = vadd.f32 0.0, %v3867
    %v3869 = vpop.f32.mrb[0].mxu0
    %3870 = vmatprep.mubr.f32.mxu0 0.0
    %3871 = vmatmul.mubr.f32.gmra.mrb[0].mxu0 %v3633
    %v3872 = vpop.f32.mrb[0].mxu0
    %v3873 = vadd.f32 0.0, %v3872
    %v3874 = vpop.f32.mrb[0].mxu0
    %3875 = vmatprep.mubr.f32.mxu0 0.0
    %3876 = vmatmul.mubr.f32.gmra.mrb[0].mxu0 %v3634
    %v3877 = vpop.f32.mrb[0].mxu0
    %v3878 = vadd.f32 0.0, %v3877
    %v3879 = vpop.f32.mrb[0].mxu0
    %3880 = vmatprep.mubr.f32.mxu0 0.0
    %3881 = vmatmul.mubr.f32.gmra.mrb[0].mxu0 %v3635
    %v3882 = vpop.f32.mrb[0].mxu0
    %v3883 = vadd.f32 0.0, %v3882
    %v3884 = vpop.f32.mrb[0].mxu0
    %3885 = vmatprep.mubr.f32.mxu0 0.0
    %3886 = vmatmul.mubr.f32.gmra.mrb[0].mxu0 %v3636
    %v3887 = vpop.f32.mrb[0].mxu0
    %v3888 = vadd.f32 0.0, %v3887
    %v3889 = vpop.f32.mrb[0].mxu0
    %3890 = vmatprep.mubr.f32.mxu0 0.0
    %3891 = vmatmul.mubr.f32.gmra.mrb[0].mxu0 %v3637
    %v3892 = vpop.f32.mrb[0].mxu0
    %v3893 = vadd.f32 0.0, %v3892
    %v3894 = vpop.f32.mrb[0].mxu0
    %3895 = vmatprep.mubr.f32.mxu0 0.0
    %3896 = vmatmul.mubr.f32.gmra.mrb[0].mxu0 %v3638
    %v3897 = vpop.f32.mrb[0].mxu0
    %v3898 = vadd.f32 0.0, %v3897
    %v3899 = vpop.f32.mrb[0].mxu0
    %3900 = vmatprep.mubr.f32.mxu0 0.0
    %3901 = vmatmul.mubr.f32.gmra.mrb[0].mxu0 %v3639
    %v3902 = vpop.f32.mrb[0].mxu0
    %v3903 = vadd.f32 0.0, %v3902
    %v3904 = vpop.f32.mrb[0].mxu0
    %3905 = vmatprep.mubr.f32.mxu0 0.0
    %3906 = vmatmul.mubr.f32.gmra.mrb[0].mxu0 %v3640
    %v3907 = vpop.f32.mrb[0].mxu0
    %v3908 = vadd.f32 0.0, %v3907
    %v3909 = vpop.f32.mrb[0].mxu0
    %3910 = vmatprep.mubr.f32.mxu0 0.0
    %3911 = vmatmul.mubr.f32.gmra.mrb[0].mxu0 %v3641
    %v3912 = vpop.f32.mrb[0].mxu0
    %v3913 = vadd.f32 0.0, %v3912
    %v3914 = vpop.f32.mrb[0].mxu0
    %3915 = vmatprep.mubr.f32.mxu0 0.0
    %3916 = vmatmul.mubr.f32.gmra.mrb[0].mxu0 %v3642
    %v3917 = vpop.f32.mrb[0].mxu0
    %v3918 = vadd.f32 0.0, %v3917
    %v3919 = vpop.f32.mrb[0].mxu0
    %3920 = vmatprep.mubr.f32.mxu0 0.0
    %3921 = vmatmul.mubr.f32.gmra.mrb[0].mxu0 %v3643
    %v3922 = vpop.f32.mrb[0].mxu0
    %v3923 = vadd.f32 0.0, %v3922
    %v3924 = vpop.f32.mrb[0].mxu0
    %3925 = vmatprep.mubr.f32.mxu0 0.0
    %3926 = vmatmul.mubr.f32.gmra.mrb[0].mxu0 %v3644
    %v3927 = vpop.f32.mrb[0].mxu0
    %v3928 = vadd.f32 0.0, %v3927
    %v3929 = vpop.f32.mrb[0].mxu0
    %3930 = vmatprep.mubr.f32.mxu0 0.0
    %3931 = vmatmul.mubr.f32.gmra.mrb[0].mxu0 %v3645
    %v3932 = vpop.f32.mrb[0].mxu0
    %v3933 = vadd.f32 0.0, %v3932
    %v3934 = vpop.f32.mrb[0].mxu0
    %3935 = vmatprep.mubr.f32.mxu0 0.0
    %3936 = vmatmul.mubr.f32.gmra.mrb[0].mxu0 %v3646
    %v3937 = vpop.f32.mrb[0].mxu0
    %v3938 = vadd.f32 0.0, %v3937
    %v3939 = vpop.f32.mrb[0].mxu0
    %3940 = vmatprep.mubr.f32.mxu0 0.0
    %3941 = vmatmul.mubr.f32.gmra.mrb[0].mxu0 %v3647
    %v3942 = vpop.f32.mrb[0].mxu0
    %v3943 = vadd.f32 0.0, %v3942
    %v3944 = vpop.f32.mrb[0].mxu0
    %3945 = vmatprep.mubr.f32.mxu0 0.0
    %3946 = vmatmul.mubr.f32.gmra.mrb[0].mxu0 %v3648
    %v3947 = vpop.f32.mrb[0].mxu0
    %v3948 = vadd.f32 0.0, %v3947
    %v3949 = vpop.f32.mrb[0].mxu0
    %3950 = vmatprep.mubr.f32.mxu0 0.0
    %3951 = vmatmul.mubr.f32.gmra.mrb[0].mxu0 %v3649
    %v3952 = vpop.f32.mrb[0].mxu0
    %v3953 = vadd.f32 0.0, %v3952
    %v3954 = vpop.f32.mrb[0].mxu0
    %3955 = vmatprep.mubr.f32.mxu0 0.0
    %3956 = vmatmul.mubr.f32.gmra.mrb[0].mxu0 %v3650
    %v3957 = vpop.f32.mrb[0].mxu0
    %v3958 = vadd.f32 0.0, %v3957
    %v3959 = vpop.f32.mrb[0].mxu0
    %3960 = vmatprep.mubr.f32.mxu0 0.0
    %3961 = vmatmul.mubr.f32.gmra.mrb[0].mxu0 %v3651
    %v3962 = vpop.f32.mrb[0].mxu0
    %v3963 = vadd.f32 0.0, %v3962
    %v3964 = vpop.f32.mrb[0].mxu0
    %3965 = vmatprep.mubr.f32.mxu0 0.0
    %3966 = vmatmul.mubr.f32.gmra.mrb[0].mxu0 %v3652
    %v3967 = vpop.f32.mrb[0].mxu0
    %v3968 = vadd.f32 0.0, %v3967
    %v3969 = vpop.f32.mrb[0].mxu0
    %3970 = vmatprep.mubr.f32.mxu0 0.0
    %3971 = vmatmul.mubr.f32.gmra.mrb[0].mxu0 %v3653
    %v3972 = vpop.f32.mrb[0].mxu0
    %v3973 = vadd.f32 0.0, %v3972
    %v3974 = vpop.f32.mrb[0].mxu0
    %3975 = vmatprep.mubr.f32.mxu0 0.0
    %3976 = vmatmul.mubr.f32.gmra.mrb[0].mxu0 %v3654
    %v3977 = vpop.f32.mrb[0].mxu0
    %v3978 = vadd.f32 0.0, %v3977
    %v3979 = vpop.f32.mrb[0].mxu0
    %3980 = vmatprep.mubr.f32.mxu0 0.0
    %3981 = vmatmul.mubr.f32.gmra.mrb[0].mxu0 %v3655
    %v3982 = vpop.f32.mrb[0].mxu0
    %v3983 = vadd.f32 0.0, %v3982
    %v3984 = vpop.f32.mrb[0].mxu0
    %3985 = vmatprep.mubr.f32.mxu0 0.0
    %3986 = vmatmul.mubr.f32.gmra.mrb[0].mxu0 %v3656
    %v3987 = vpop.f32.mrb[0].mxu0
    %v3988 = vadd.f32 0.0, %v3987
    %v3989 = vpop.f32.mrb[0].mxu0
    %3990 = vmatprep.mubr.f32.mxu0 0.0
    %3991 = vmatmul.mubr.f32.gmra.mrb[0].mxu0 %v3657
    %v3992 = vpop.f32.mrb[0].mxu0
    %v3993 = vadd.f32 0.0, %v3992
    %v3994 = vpop.f32.mrb[0].mxu0
    %3995 = vmatprep.mubr.f32.mxu0 0.0
    %3996 = vmatmul.mubr.f32.gmra.mrb[0].mxu0 %v3658
    %v3997 = vpop.f32.mrb[0].mxu0
    %v3998 = vadd.f32 0.0, %v3997
    %v3999 = vpop.f32.mrb[0].mxu0
    %4000 = vmatprep.mubr.f32.mxu0 0.0
    %4001 = vmatmul.mubr.f32.gmra.mrb[0].mxu0 %v3659
    %v4002 = vpop.f32.mrb[0].mxu0
    %v4003 = vadd.f32 0.0, %v4002
    %v4004 = vpop.f32.mrb[0].mxu0
    %4005 = vmatprep.mubr.f32.mxu0 0.0
    %4006 = vmatmul.mubr.f32.gmra.mrb[0].mxu0 %v3660
    %v4007 = vpop.f32.mrb[0].mxu0
    %v4008 = vadd.f32 0.0, %v4007
    %v4009 = vpop.f32.mrb[0].mxu0
    %4010 = vmatprep.mubr.f32.mxu0 0.0
    %4011 = vmatmul.mubr.f32.gmra.mrb[0].mxu0 %v3661
    %v4012 = vpop.f32.mrb[0].mxu0
    %v4013 = vadd.f32 0.0, %v4012
    %v4014 = vpop.f32.mrb[0].mxu0
    %4015 = vmatprep.mubr.f32.mxu0 0.0
    %4016 = vmatmul.mubr.f32.gmra.mrb[0].mxu0 %v3662
    %v4017 = vpop.f32.mrb[0].mxu0
    %v4018 = vadd.f32 0.0, %v4017
    %v4019 = vpop.f32.mrb[0].mxu0
    %4020 = vmatprep.mubr.f32.mxu0 0.0
    %4021 = vmatmul.mubr.f32.gmra.mrb[0].mxu0 %v3663
    %v4022 = vpop.f32.mrb[0].mxu0
    %v4023 = vadd.f32 0.0, %v4022
    %v4024 = vpop.f32.mrb[0].mxu0
    %4025 = vmatprep.mubr.f32.mxu0 0.0
    %4026 = vmatmul.mubr.f32.gmra.mrb[0].mxu0 %v3664
    %v4027 = vpop.f32.mrb[0].mxu0
    %v4028 = vadd.f32 0.0, %v4027
    %v4029 = vpop.f32.mrb[0].mxu0
    %4030 = vmatprep.mubr.f32.mxu0 0.0
    %4031 = vmatmul.mubr.f32.gmra.mrb[0].mxu0 %v3665
    %v4032 = vpop.f32.mrb[0].mxu0
    %v4033 = vadd.f32 0.0, %v4032
    %v4034 = vpop.f32.mrb[0].mxu0
    %4035 = vmatprep.mubr.f32.mxu0 0.0
    %4036 = vmatmul.mubr.f32.gmra.mrb[0].mxu0 %v3666
    %v4037 = vpop.f32.mrb[0].mxu0
    %v4038 = vadd.f32 0.0, %v4037
    %v4039 = vpop.f32.mrb[0].mxu0
    %4040 = vmatprep.mubr.f32.mxu0 0.0
    %4041 = vmatmul.mubr.f32.gmra.mrb[0].mxu0 %v3667
    %v4042 = vpop.f32.mrb[0].mxu0
    %v4043 = vadd.f32 0.0, %v4042
    %v4044 = vpop.f32.mrb[0].mxu0
    %4045 = vmatprep.mubr.f32.mxu0 0.0
    %4046 = vmatmul.mubr.f32.gmra.mrb[0].mxu0 %v3668
    %v4047 = vpop.f32.mrb[0].mxu0
    %v4048 = vadd.f32 0.0, %v4047
    %v4049 = vpop.f32.mrb[0].mxu0
    %4050 = vmatprep.mubr.f32.mxu0 0.0
    %4051 = vmatmul.mubr.f32.gmra.mrb[0].mxu0 %v3669
    %v4052 = vpop.f32.mrb[0].mxu0
    %v4053 = vadd.f32 0.0, %v4052
    %v4054 = vpop.f32.mrb[0].mxu0
    %4055 = vmatprep.mubr.f32.mxu0 0.0
    %4056 = vmatmul.mubr.f32.gmra.mrb[0].mxu0 %v3670
    %v4057 = vpop.f32.mrb[0].mxu0
    %v4058 = vadd.f32 0.0, %v4057
    %v4059 = vpop.f32.mrb[0].mxu0
    %4060 = vmatprep.mubr.f32.mxu0 0.0
    %4061 = vmatmul.mubr.f32.gmra.mrb[0].mxu0 %v3671
    %v4062 = vpop.f32.mrb[0].mxu0
    %v4063 = vadd.f32 0.0, %v4062
    %v4064 = vpop.f32.mrb[0].mxu0
    %4065 = vmatprep.mubr.f32.mxu0 0.0
    %4066 = vmatmul.mubr.f32.gmra.mrb[0].mxu0 %v3672
    %v4067 = vpop.f32.mrb[0].mxu0
    %v4068 = vadd.f32 0.0, %v4067
    %v4069 = vpop.f32.mrb[0].mxu0
    %4070 = vmatprep.mubr.f32.mxu0 0.0
    %4071 = vmatmul.mubr.f32.gmra.mrb[0].mxu0 %v3673
    %v4072 = vpop.f32.mrb[0].mxu0
    %v4073 = vadd.f32 0.0, %v4072
    %v4074 = vpop.f32.mrb[0].mxu0
    %4075 = vdwg.mxu0
    %v4076 = vadd.f32 %v3546, %v3758
    %v4077 = vadd.f32 %v3547, %v3763
    %v4078 = vadd.f32 %v3548, %v3768
    %v4079 = vadd.f32 %v3549, %v3773
    %v4080 = vadd.f32 %v3550, %v3778
    %v4081 = vadd.f32 %v3551, %v3783
    %v4082 = vadd.f32 %v3552, %v3788
    %v4083 = vadd.f32 %v3553, %v3793
    %v4084 = vadd.f32 %v3554, %v3798
    %v4085 = vadd.f32 %v3555, %v3803
    %v4086 = vadd.f32 %v3556, %v3808
    %v4087 = vadd.f32 %v3557, %v3813
    %v4088 = vadd.f32 %v3558, %v3818
    %v4089 = vadd.f32 %v3559, %v3823
    %v4090 = vadd.f32 %v3560, %v3828
    %v4091 = vadd.f32 %v3561, %v3833
    %v4092 = vadd.f32 %v3562, %v3838
    %v4093 = vadd.f32 %v3563, %v3843
    %v4094 = vadd.f32 %v3564, %v3848
    %v4095 = vadd.f32 %v3565, %v3853
    %v4096 = vadd.f32 %v3566, %v3858
    %v4097 = vadd.f32 %v3567, %v3863
    %v4098 = vadd.f32 %v3568, %v3868
    %v4099 = vadd.f32 %v3569, %v3873
    %v4100 = vadd.f32 %v3570, %v3878
    %v4101 = vadd.f32 %v3571, %v3883
    %v4102 = vadd.f32 %v3572, %v3888
    %v4103 = vadd.f32 %v3573, %v3893
    %v4104 = vadd.f32 %v3574, %v3898
    %v4105 = vadd.f32 %v3575, %v3903
    %v4106 = vadd.f32 %v3576, %v3908
    %v4107 = vadd.f32 %v3577, %v3913
    %v4108 = vadd.f32 %v3578, %v3918
    %v4109 = vadd.f32 %v3579, %v3923
    %v4110 = vadd.f32 %v3580, %v3928
    %v4111 = vadd.f32 %v3581, %v3933
    %v4112 = vadd.f32 %v3582, %v3938
    %v4113 = vadd.f32 %v3583, %v3943
    %v4114 = vadd.f32 %v3584, %v3948
    %v4115 = vadd.f32 %v3585, %v3953
    %v4116 = vadd.f32 %v3586, %v3958
    %v4117 = vadd.f32 %v3587, %v3963
    %v4118 = vadd.f32 %v3588, %v3968
    %v4119 = vadd.f32 %v3589, %v3973
    %v4120 = vadd.f32 %v3590, %v3978
    %v4121 = vadd.f32 %v3591, %v3983
    %v4122 = vadd.f32 %v3592, %v3988
    %v4123 = vadd.f32 %v3593, %v3993
    %v4124 = vadd.f32 %v3594, %v3998
    %v4125 = vadd.f32 %v3595, %v4003
    %v4126 = vadd.f32 %v3596, %v4008
    %v4127 = vadd.f32 %v3597, %v4013
    %v4128 = vadd.f32 %v3598, %v4018
    %v4129 = vadd.f32 %v3599, %v4023
    %v4130 = vadd.f32 %v3600, %v4028
    %v4131 = vadd.f32 %v3601, %v4033
    %v4132 = vadd.f32 %v3602, %v4038
    %v4133 = vadd.f32 %v3603, %v4043
    %v4134 = vadd.f32 %v3604, %v4048
    %v4135 = vadd.f32 %v3605, %v4053
    %v4136 = vadd.f32 %v3606, %v4058
    %v4137 = vadd.f32 %v3607, %v4063
    %v4138 = vadd.f32 %v3608, %v4068
    %v4139 = vadd.f32 %v3609, %v4073
    %v4140 = vld [vmem:[%s3079 + $0x2] sm:$0xff]
    %v4141 = vld [vmem:[%s3079 + $0xa] sm:$0xff]
    %v4142 = vld [vmem:[%s3079 + $0x12] sm:$0xff]
    %v4143 = vld [vmem:[%s3079 + $0x1a] sm:$0xff]
    %v4144 = vld [vmem:[%s3079 + $0x2a] sm:$0xff]
    %v4145 = vld [vmem:[%s3079 + $0x32] sm:$0xff]
    %v4146 = vld [vmem:[%s3079 + $0x3a] sm:$0xff]
    %v4147 = vld [vmem:[%s3079 + $0x42] sm:$0xff]
    %v4148 = vld [vmem:[%s3079 + $0x52] sm:$0xff]
    %v4149 = vld [vmem:[%s3079 + $0x5a] sm:$0xff]
    %v4150 = vld [vmem:[%s3079 + $0x62] sm:$0xff]
    %v4151 = vld [vmem:[%s3079 + $0x6a] sm:$0xff]
    %v4152 = vld [vmem:[%s3079 + $0x7a] sm:$0xff]
    %v4153 = vld [vmem:[%s3079 + $0x82] sm:$0xff]
    %v4154 = vld [vmem:[%s3079 + $0x8a] sm:$0xff]
    %v4155 = vld [vmem:[%s3079 + $0x92] sm:$0xff]
    %v4156 = vld [vmem:[%s3079 + $0xa2] sm:$0xff]
    %v4157 = vld [vmem:[%s3079 + $0xaa] sm:$0xff]
    %v4158 = vld [vmem:[%s3079 + $0xb2] sm:$0xff]
    %v4159 = vld [vmem:[%s3079 + $0xba] sm:$0xff]
    %v4160 = vld [vmem:[%s3079 + $0xca] sm:$0xff]
    %v4161 = vld [vmem:[%s3079 + $0xd2] sm:$0xff]
    %v4162 = vld [vmem:[%s3079 + $0xda] sm:$0xff]
    %v4163 = vld [vmem:[%s3079 + $0xe2] sm:$0xff]
    %v4164 = vld [vmem:[%s3079 + $0xf2] sm:$0xff]
    %v4165 = vld [vmem:[%s3079 + $0xfa] sm:$0xff]
    %v4166 = vld [vmem:[%s3079 + $0x102] sm:$0xff]
    %v4167 = vld [vmem:[%s3079 + $0x10a] sm:$0xff]
    %v4168 = vld [vmem:[%s3079 + $0x11a] sm:$0xff]
    %v4169 = vld [vmem:[%s3079 + $0x122] sm:$0xff]
    %v4170 = vld [vmem:[%s3079 + $0x12a] sm:$0xff]
    %v4171 = vld [vmem:[%s3079 + $0x132] sm:$0xff]
    %v4172 = vld [vmem:[%s3079 + $0x192] sm:$0xff]
    %v4173 = vld [vmem:[%s3079 + $0x19a] sm:$0xff]
    %v4174 = vld [vmem:[%s3079 + $0x1a2] sm:$0xff]
    %v4175 = vld [vmem:[%s3079 + $0x1aa] sm:$0xff]
    %v4176 = vld [vmem:[%s3079 + $0x1ba] sm:$0xff]
    %v4177 = vld [vmem:[%s3079 + $0x1c2] sm:$0xff]
    %v4178 = vld [vmem:[%s3079 + $0x1ca] sm:$0xff]
    %v4179 = vld [vmem:[%s3079 + $0x1d2] sm:$0xff]
    %v4180 = vld [vmem:[%s3079 + $0x1e2] sm:$0xff]
    %v4181 = vld [vmem:[%s3079 + $0x1ea] sm:$0xff]
    %v4182 = vld [vmem:[%s3079 + $0x1f2] sm:$0xff]
    %v4183 = vld [vmem:[%s3079 + $0x1fa] sm:$0xff]
    %v4184 = vld [vmem:[%s3079 + $0x20a] sm:$0xff]
    %v4185 = vld [vmem:[%s3079 + $0x212] sm:$0xff]
    %v4186 = vld [vmem:[%s3079 + $0x21a] sm:$0xff]
    %v4187 = vld [vmem:[%s3079 + $0x222] sm:$0xff]
    %v4188 = vld [vmem:[%s3079 + $0x232] sm:$0xff]
    %v4189 = vld [vmem:[%s3079 + $0x23a] sm:$0xff]
    %v4190 = vld [vmem:[%s3079 + $0x242] sm:$0xff]
    %v4191 = vld [vmem:[%s3079 + $0x24a] sm:$0xff]
    %v4192 = vld [vmem:[%s3079 + $0x25a] sm:$0xff]
    %v4193 = vld [vmem:[%s3079 + $0x262] sm:$0xff]
    %v4194 = vld [vmem:[%s3079 + $0x26a] sm:$0xff]
    %v4195 = vld [vmem:[%s3079 + $0x272] sm:$0xff]
    %v4196 = vld [vmem:[%s3079 + $0x282] sm:$0xff]
    %v4197 = vld [vmem:[%s3079 + $0x28a] sm:$0xff]
    %v4198 = vld [vmem:[%s3079 + $0x292] sm:$0xff]
    %v4199 = vld [vmem:[%s3079 + $0x29a] sm:$0xff]
    %v4200 = vld [vmem:[%s3079 + $0x2aa] sm:$0xff]
    %v4201 = vld [vmem:[%s3079 + $0x2b2] sm:$0xff]
    %v4202 = vld [vmem:[%s3079 + $0x2ba] sm:$0xff]
    %v4203 = vld [vmem:[%s3079 + $0x2c2] sm:$0xff]
    %s4204 = scalar_lea.vmem %s2, 1024
    %v4205 = vld [vmem:[%s4204] sm:$0xff]
    %v4206 = vld [vmem:[%s4204 + $0x8] sm:$0xff]
    %v4207 = vld [vmem:[%s4204 + $0x10] sm:$0xff]
    %v4208 = vld [vmem:[%s4204 + $0x18] sm:$0xff]
    %v4209 = vld [vmem:[%s4204 + $0x20] sm:$0xff]
    %v4210 = vld [vmem:[%s4204 + $0x28] sm:$0xff]
    %v4211 = vld [vmem:[%s4204 + $0x30] sm:$0xff]
    %v4212 = vld [vmem:[%s4204 + $0x38] sm:$0xff]
    %v4213 = vld [vmem:[%s4204 + $0x40] sm:$0xff]
    %v4214 = vld [vmem:[%s4204 + $0x48] sm:$0xff]
    %v4215 = vld [vmem:[%s4204 + $0x50] sm:$0xff]
    %v4216 = vld [vmem:[%s4204 + $0x58] sm:$0xff]
    %v4217 = vld [vmem:[%s4204 + $0x60] sm:$0xff]
    %v4218 = vld [vmem:[%s4204 + $0x68] sm:$0xff]
    %v4219 = vld [vmem:[%s4204 + $0x70] sm:$0xff]
    %v4220 = vld [vmem:[%s4204 + $0x78] sm:$0xff]
    %4221 = vmatprep.subr.mxu0 0.0
    %4222 = vmatpush1.msra.mxu0 %v4205
    %4223 = vmatprep.subr.mxu0 0.0
    %4224 = vmatpush1.msra.mxu0 %v4206
    %4225 = vmatprep.subr.mxu0 0.0
    %4226 = vmatpush1.msra.mxu0 %v4207
    %4227 = vmatprep.subr.mxu0 0.0
    %4228 = vmatpush1.msra.mxu0 %v4208
    %4229 = vmatprep.subr.mxu0 0.0
    %4230 = vmatpush1.msra.mxu0 %v4209
    %4231 = vmatprep.subr.mxu0 0.0
    %4232 = vmatpush1.msra.mxu0 %v4210
    %4233 = vmatprep.subr.mxu0 0.0
    %4234 = vmatpush1.msra.mxu0 %v4211
    %4235 = vmatprep.subr.mxu0 0.0
    %4236 = vmatpush1.msra.mxu0 %v4212
    %4237 = vmatprep.subr.mxu0 0.0
    %4238 = vmatpush1.msra.mxu0 %v4213
    %4239 = vmatprep.subr.mxu0 0.0
    %4240 = vmatpush1.msra.mxu0 %v4214
    %4241 = vmatprep.subr.mxu0 0.0
    %4242 = vmatpush1.msra.mxu0 %v4215
    %4243 = vmatprep.subr.mxu0 0.0
    %4244 = vmatpush1.msra.mxu0 %v4216
    %4245 = vmatprep.subr.mxu0 0.0
    %4246 = vmatpush1.msra.mxu0 %v4217
    %4247 = vmatprep.subr.mxu0 0.0
    %4248 = vmatpush1.msra.mxu0 %v4218
    %4249 = vmatprep.subr.mxu0 0.0
    %4250 = vmatpush1.msra.mxu0 %v4219
    %4251 = vmatprep.subr.mxu0 0.0
    %4252 = vmatpush1.msra.mxu0 %v4220
    %4253 = vmatprep.subr.mxu0 0.0
    %4254 = vmatpush1.msra.mxu0 0.0
    %4255 = vmatprep.subr.mxu0 0.0
    %4256 = vmatpush1.msra.mxu0 0.0
    %4257 = vmatprep.subr.mxu0 0.0
    %4258 = vmatpush1.msra.mxu0 0.0
    %4259 = vmatprep.subr.mxu0 0.0
    %4260 = vmatpush1.msra.mxu0 0.0
    %4261 = vmatprep.subr.mxu0 0.0
    %4262 = vmatpush1.msra.mxu0 0.0
    %4263 = vmatprep.subr.mxu0 0.0
    %4264 = vmatpush1.msra.mxu0 0.0
    %4265 = vmatprep.subr.mxu0 0.0
    %4266 = vmatpush1.msra.mxu0 0.0
    %4267 = vmatprep.subr.mxu0 0.0
    %4268 = vmatpush1.msra.mxu0 0.0
    %4269 = vmatprep.subr.mxu0 0.0
    %4270 = vmatpush1.msra.mxu0 0.0
    %4271 = vmatprep.subr.mxu0 0.0
    %4272 = vmatpush1.msra.mxu0 0.0
    %4273 = vmatprep.subr.mxu0 0.0
    %4274 = vmatpush1.msra.mxu0 0.0
    %4275 = vmatprep.subr.mxu0 0.0
    %4276 = vmatpush1.msra.mxu0 0.0
    %4277 = vmatprep.subr.mxu0 0.0
    %4278 = vmatpush1.msra.mxu0 0.0
    %4279 = vmatprep.subr.mxu0 0.0
    %4280 = vmatpush1.msra.mxu0 0.0
    %4281 = vmatprep.subr.mxu0 0.0
    %4282 = vmatpush1.msra.mxu0 0.0
    %4283 = vmatprep.subr.mxu0 0.0
    %4284 = vmatpush1.msra.mxu0 0.0
    %4285 = vmatprep.mubr.f32.mxu0 0.0
    %4286 = vmatmul.mubr.f32.gmra.mrb[0].mxu0 %v4140
    %v4287 = vpop.f32.mrb[0].mxu0
    %v4288 = vadd.f32 0.0, %v4287
    %v4289 = vpop.f32.mrb[0].mxu0
    %4290 = vmatprep.mubr.f32.mxu0 0.0
    %4291 = vmatmul.mubr.f32.gmra.mrb[0].mxu0 %v4141
    %v4292 = vpop.f32.mrb[0].mxu0
    %v4293 = vadd.f32 0.0, %v4292
    %v4294 = vpop.f32.mrb[0].mxu0
    %4295 = vmatprep.mubr.f32.mxu0 0.0
    %4296 = vmatmul.mubr.f32.gmra.mrb[0].mxu0 %v4142
    %v4297 = vpop.f32.mrb[0].mxu0
    %v4298 = vadd.f32 0.0, %v4297
    %v4299 = vpop.f32.mrb[0].mxu0
    %4300 = vmatprep.mubr.f32.mxu0 0.0
    %4301 = vmatmul.mubr.f32.gmra.mrb[0].mxu0 %v4143
    %v4302 = vpop.f32.mrb[0].mxu0
    %v4303 = vadd.f32 0.0, %v4302
    %v4304 = vpop.f32.mrb[0].mxu0
    %4305 = vmatprep.mubr.f32.mxu0 0.0
    %4306 = vmatmul.mubr.f32.gmra.mrb[0].mxu0 %v4144
    %v4307 = vpop.f32.mrb[0].mxu0
    %v4308 = vadd.f32 0.0, %v4307
    %v4309 = vpop.f32.mrb[0].mxu0
    %4310 = vmatprep.mubr.f32.mxu0 0.0
    %4311 = vmatmul.mubr.f32.gmra.mrb[0].mxu0 %v4145
    %v4312 = vpop.f32.mrb[0].mxu0
    %v4313 = vadd.f32 0.0, %v4312
    %v4314 = vpop.f32.mrb[0].mxu0
    %4315 = vmatprep.mubr.f32.mxu0 0.0
    %4316 = vmatmul.mubr.f32.gmra.mrb[0].mxu0 %v4146
    %v4317 = vpop.f32.mrb[0].mxu0
    %v4318 = vadd.f32 0.0, %v4317
    %v4319 = vpop.f32.mrb[0].mxu0
    %4320 = vmatprep.mubr.f32.mxu0 0.0
    %4321 = vmatmul.mubr.f32.gmra.mrb[0].mxu0 %v4147
    %v4322 = vpop.f32.mrb[0].mxu0
    %v4323 = vadd.f32 0.0, %v4322
    %v4324 = vpop.f32.mrb[0].mxu0
    %4325 = vmatprep.mubr.f32.mxu0 0.0
    %4326 = vmatmul.mubr.f32.gmra.mrb[0].mxu0 %v4148
    %v4327 = vpop.f32.mrb[0].mxu0
    %v4328 = vadd.f32 0.0, %v4327
    %v4329 = vpop.f32.mrb[0].mxu0
    %4330 = vmatprep.mubr.f32.mxu0 0.0
    %4331 = vmatmul.mubr.f32.gmra.mrb[0].mxu0 %v4149
    %v4332 = vpop.f32.mrb[0].mxu0
    %v4333 = vadd.f32 0.0, %v4332
    %v4334 = vpop.f32.mrb[0].mxu0
    %4335 = vmatprep.mubr.f32.mxu0 0.0
    %4336 = vmatmul.mubr.f32.gmra.mrb[0].mxu0 %v4150
    %v4337 = vpop.f32.mrb[0].mxu0
    %v4338 = vadd.f32 0.0, %v4337
    %v4339 = vpop.f32.mrb[0].mxu0
    %4340 = vmatprep.mubr.f32.mxu0 0.0
    %4341 = vmatmul.mubr.f32.gmra.mrb[0].mxu0 %v4151
    %v4342 = vpop.f32.mrb[0].mxu0
    %v4343 = vadd.f32 0.0, %v4342
    %v4344 = vpop.f32.mrb[0].mxu0
    %4345 = vmatprep.mubr.f32.mxu0 0.0
    %4346 = vmatmul.mubr.f32.gmra.mrb[0].mxu0 %v4152
    %v4347 = vpop.f32.mrb[0].mxu0
    %v4348 = vadd.f32 0.0, %v4347
    %v4349 = vpop.f32.mrb[0].mxu0
    %4350 = vmatprep.mubr.f32.mxu0 0.0
    %4351 = vmatmul.mubr.f32.gmra.mrb[0].mxu0 %v4153
    %v4352 = vpop.f32.mrb[0].mxu0
    %v4353 = vadd.f32 0.0, %v4352
    %v4354 = vpop.f32.mrb[0].mxu0
    %4355 = vmatprep.mubr.f32.mxu0 0.0
    %4356 = vmatmul.mubr.f32.gmra.mrb[0].mxu0 %v4154
    %v4357 = vpop.f32.mrb[0].mxu0
    %v4358 = vadd.f32 0.0, %v4357
    %v4359 = vpop.f32.mrb[0].mxu0
    %4360 = vmatprep.mubr.f32.mxu0 0.0
    %4361 = vmatmul.mubr.f32.gmra.mrb[0].mxu0 %v4155
    %v4362 = vpop.f32.mrb[0].mxu0
    %v4363 = vadd.f32 0.0, %v4362
    %v4364 = vpop.f32.mrb[0].mxu0
    %4365 = vmatprep.mubr.f32.mxu0 0.0
    %4366 = vmatmul.mubr.f32.gmra.mrb[0].mxu0 %v4156
    %v4367 = vpop.f32.mrb[0].mxu0
    %v4368 = vadd.f32 0.0, %v4367
    %v4369 = vpop.f32.mrb[0].mxu0
    %4370 = vmatprep.mubr.f32.mxu0 0.0
    %4371 = vmatmul.mubr.f32.gmra.mrb[0].mxu0 %v4157
    %v4372 = vpop.f32.mrb[0].mxu0
    %v4373 = vadd.f32 0.0, %v4372
    %v4374 = vpop.f32.mrb[0].mxu0
    %4375 = vmatprep.mubr.f32.mxu0 0.0
    %4376 = vmatmul.mubr.f32.gmra.mrb[0].mxu0 %v4158
    %v4377 = vpop.f32.mrb[0].mxu0
    %v4378 = vadd.f32 0.0, %v4377
    %v4379 = vpop.f32.mrb[0].mxu0
    %4380 = vmatprep.mubr.f32.mxu0 0.0
    %4381 = vmatmul.mubr.f32.gmra.mrb[0].mxu0 %v4159
    %v4382 = vpop.f32.mrb[0].mxu0
    %v4383 = vadd.f32 0.0, %v4382
    %v4384 = vpop.f32.mrb[0].mxu0
    %4385 = vmatprep.mubr.f32.mxu0 0.0
    %4386 = vmatmul.mubr.f32.gmra.mrb[0].mxu0 %v4160
    %v4387 = vpop.f32.mrb[0].mxu0
    %v4388 = vadd.f32 0.0, %v4387
    %v4389 = vpop.f32.mrb[0].mxu0
    %4390 = vmatprep.mubr.f32.mxu0 0.0
    %4391 = vmatmul.mubr.f32.gmra.mrb[0].mxu0 %v4161
    %v4392 = vpop.f32.mrb[0].mxu0
    %v4393 = vadd.f32 0.0, %v4392
    %v4394 = vpop.f32.mrb[0].mxu0
    %4395 = vmatprep.mubr.f32.mxu0 0.0
    %4396 = vmatmul.mubr.f32.gmra.mrb[0].mxu0 %v4162
    %v4397 = vpop.f32.mrb[0].mxu0
    %v4398 = vadd.f32 0.0, %v4397
    %v4399 = vpop.f32.mrb[0].mxu0
    %4400 = vmatprep.mubr.f32.mxu0 0.0
    %4401 = vmatmul.mubr.f32.gmra.mrb[0].mxu0 %v4163
    %v4402 = vpop.f32.mrb[0].mxu0
    %v4403 = vadd.f32 0.0, %v4402
    %v4404 = vpop.f32.mrb[0].mxu0
    %4405 = vmatprep.mubr.f32.mxu0 0.0
    %4406 = vmatmul.mubr.f32.gmra.mrb[0].mxu0 %v4164
    %v4407 = vpop.f32.mrb[0].mxu0
    %v4408 = vadd.f32 0.0, %v4407
    %v4409 = vpop.f32.mrb[0].mxu0
    %4410 = vmatprep.mubr.f32.mxu0 0.0
    %4411 = vmatmul.mubr.f32.gmra.mrb[0].mxu0 %v4165
    %v4412 = vpop.f32.mrb[0].mxu0
    %v4413 = vadd.f32 0.0, %v4412
    %v4414 = vpop.f32.mrb[0].mxu0
    %4415 = vmatprep.mubr.f32.mxu0 0.0
    %4416 = vmatmul.mubr.f32.gmra.mrb[0].mxu0 %v4166
    %v4417 = vpop.f32.mrb[0].mxu0
    %v4418 = vadd.f32 0.0, %v4417
    %v4419 = vpop.f32.mrb[0].mxu0
    %4420 = vmatprep.mubr.f32.mxu0 0.0
    %4421 = vmatmul.mubr.f32.gmra.mrb[0].mxu0 %v4167
    %v4422 = vpop.f32.mrb[0].mxu0
    %v4423 = vadd.f32 0.0, %v4422
    %v4424 = vpop.f32.mrb[0].mxu0
    %4425 = vmatprep.mubr.f32.mxu0 0.0
    %4426 = vmatmul.mubr.f32.gmra.mrb[0].mxu0 %v4168
    %v4427 = vpop.f32.mrb[0].mxu0
    %v4428 = vadd.f32 0.0, %v4427
    %v4429 = vpop.f32.mrb[0].mxu0
    %4430 = vmatprep.mubr.f32.mxu0 0.0
    %4431 = vmatmul.mubr.f32.gmra.mrb[0].mxu0 %v4169
    %v4432 = vpop.f32.mrb[0].mxu0
    %v4433 = vadd.f32 0.0, %v4432
    %v4434 = vpop.f32.mrb[0].mxu0
    %4435 = vmatprep.mubr.f32.mxu0 0.0
    %4436 = vmatmul.mubr.f32.gmra.mrb[0].mxu0 %v4170
    %v4437 = vpop.f32.mrb[0].mxu0
    %v4438 = vadd.f32 0.0, %v4437
    %v4439 = vpop.f32.mrb[0].mxu0
    %4440 = vmatprep.mubr.f32.mxu0 0.0
    %4441 = vmatmul.mubr.f32.gmra.mrb[0].mxu0 %v4171
    %v4442 = vpop.f32.mrb[0].mxu0
    %v4443 = vadd.f32 0.0, %v4442
    %v4444 = vpop.f32.mrb[0].mxu0
    %4445 = vmatprep.mubr.f32.mxu0 0.0
    %4446 = vmatmul.mubr.f32.gmra.mrb[0].mxu0 %v4172
    %v4447 = vpop.f32.mrb[0].mxu0
    %v4448 = vadd.f32 0.0, %v4447
    %v4449 = vpop.f32.mrb[0].mxu0
    %4450 = vmatprep.mubr.f32.mxu0 0.0
    %4451 = vmatmul.mubr.f32.gmra.mrb[0].mxu0 %v4173
    %v4452 = vpop.f32.mrb[0].mxu0
    %v4453 = vadd.f32 0.0, %v4452
    %v4454 = vpop.f32.mrb[0].mxu0
    %4455 = vmatprep.mubr.f32.mxu0 0.0
    %4456 = vmatmul.mubr.f32.gmra.mrb[0].mxu0 %v4174
    %v4457 = vpop.f32.mrb[0].mxu0
    %v4458 = vadd.f32 0.0, %v4457
    %v4459 = vpop.f32.mrb[0].mxu0
    %4460 = vmatprep.mubr.f32.mxu0 0.0
    %4461 = vmatmul.mubr.f32.gmra.mrb[0].mxu0 %v4175
    %v4462 = vpop.f32.mrb[0].mxu0
    %v4463 = vadd.f32 0.0, %v4462
    %v4464 = vpop.f32.mrb[0].mxu0
    %4465 = vmatprep.mubr.f32.mxu0 0.0
    %4466 = vmatmul.mubr.f32.gmra.mrb[0].mxu0 %v4176
    %v4467 = vpop.f32.mrb[0].mxu0
    %v4468 = vadd.f32 0.0, %v4467
    %v4469 = vpop.f32.mrb[0].mxu0
    %4470 = vmatprep.mubr.f32.mxu0 0.0
    %4471 = vmatmul.mubr.f32.gmra.mrb[0].mxu0 %v4177
    %v4472 = vpop.f32.mrb[0].mxu0
    %v4473 = vadd.f32 0.0, %v4472
    %v4474 = vpop.f32.mrb[0].mxu0
    %4475 = vmatprep.mubr.f32.mxu0 0.0
    %4476 = vmatmul.mubr.f32.gmra.mrb[0].mxu0 %v4178
    %v4477 = vpop.f32.mrb[0].mxu0
    %v4478 = vadd.f32 0.0, %v4477
    %v4479 = vpop.f32.mrb[0].mxu0
    %4480 = vmatprep.mubr.f32.mxu0 0.0
    %4481 = vmatmul.mubr.f32.gmra.mrb[0].mxu0 %v4179
    %v4482 = vpop.f32.mrb[0].mxu0
    %v4483 = vadd.f32 0.0, %v4482
    %v4484 = vpop.f32.mrb[0].mxu0
    %4485 = vmatprep.mubr.f32.mxu0 0.0
    %4486 = vmatmul.mubr.f32.gmra.mrb[0].mxu0 %v4180
    %v4487 = vpop.f32.mrb[0].mxu0
    %v4488 = vadd.f32 0.0, %v4487
    %v4489 = vpop.f32.mrb[0].mxu0
    %4490 = vmatprep.mubr.f32.mxu0 0.0
    %4491 = vmatmul.mubr.f32.gmra.mrb[0].mxu0 %v4181
    %v4492 = vpop.f32.mrb[0].mxu0
    %v4493 = vadd.f32 0.0, %v4492
    %v4494 = vpop.f32.mrb[0].mxu0
    %4495 = vmatprep.mubr.f32.mxu0 0.0
    %4496 = vmatmul.mubr.f32.gmra.mrb[0].mxu0 %v4182
    %v4497 = vpop.f32.mrb[0].mxu0
    %v4498 = vadd.f32 0.0, %v4497
    %v4499 = vpop.f32.mrb[0].mxu0
    %4500 = vmatprep.mubr.f32.mxu0 0.0
    %4501 = vmatmul.mubr.f32.gmra.mrb[0].mxu0 %v4183
    %v4502 = vpop.f32.mrb[0].mxu0
    %v4503 = vadd.f32 0.0, %v4502
    %v4504 = vpop.f32.mrb[0].mxu0
    %4505 = vmatprep.mubr.f32.mxu0 0.0
    %4506 = vmatmul.mubr.f32.gmra.mrb[0].mxu0 %v4184
    %v4507 = vpop.f32.mrb[0].mxu0
    %v4508 = vadd.f32 0.0, %v4507
    %v4509 = vpop.f32.mrb[0].mxu0
    %4510 = vmatprep.mubr.f32.mxu0 0.0
    %4511 = vmatmul.mubr.f32.gmra.mrb[0].mxu0 %v4185
    %v4512 = vpop.f32.mrb[0].mxu0
    %v4513 = vadd.f32 0.0, %v4512
    %v4514 = vpop.f32.mrb[0].mxu0
    %4515 = vmatprep.mubr.f32.mxu0 0.0
    %4516 = vmatmul.mubr.f32.gmra.mrb[0].mxu0 %v4186
    %v4517 = vpop.f32.mrb[0].mxu0
    %v4518 = vadd.f32 0.0, %v4517
    %v4519 = vpop.f32.mrb[0].mxu0
    %4520 = vmatprep.mubr.f32.mxu0 0.0
    %4521 = vmatmul.mubr.f32.gmra.mrb[0].mxu0 %v4187
    %v4522 = vpop.f32.mrb[0].mxu0
    %v4523 = vadd.f32 0.0, %v4522
    %v4524 = vpop.f32.mrb[0].mxu0
    %4525 = vmatprep.mubr.f32.mxu0 0.0
    %4526 = vmatmul.mubr.f32.gmra.mrb[0].mxu0 %v4188
    %v4527 = vpop.f32.mrb[0].mxu0
    %v4528 = vadd.f32 0.0, %v4527
    %v4529 = vpop.f32.mrb[0].mxu0
    %4530 = vmatprep.mubr.f32.mxu0 0.0
    %4531 = vmatmul.mubr.f32.gmra.mrb[0].mxu0 %v4189
    %v4532 = vpop.f32.mrb[0].mxu0
    %v4533 = vadd.f32 0.0, %v4532
    %v4534 = vpop.f32.mrb[0].mxu0
    %4535 = vmatprep.mubr.f32.mxu0 0.0
    %4536 = vmatmul.mubr.f32.gmra.mrb[0].mxu0 %v4190
    %v4537 = vpop.f32.mrb[0].mxu0
    %v4538 = vadd.f32 0.0, %v4537
    %v4539 = vpop.f32.mrb[0].mxu0
    %4540 = vmatprep.mubr.f32.mxu0 0.0
    %4541 = vmatmul.mubr.f32.gmra.mrb[0].mxu0 %v4191
    %v4542 = vpop.f32.mrb[0].mxu0
    %v4543 = vadd.f32 0.0, %v4542
    %v4544 = vpop.f32.mrb[0].mxu0
    %4545 = vmatprep.mubr.f32.mxu0 0.0
    %4546 = vmatmul.mubr.f32.gmra.mrb[0].mxu0 %v4192
    %v4547 = vpop.f32.mrb[0].mxu0
    %v4548 = vadd.f32 0.0, %v4547
    %v4549 = vpop.f32.mrb[0].mxu0
    %4550 = vmatprep.mubr.f32.mxu0 0.0
    %4551 = vmatmul.mubr.f32.gmra.mrb[0].mxu0 %v4193
    %v4552 = vpop.f32.mrb[0].mxu0
    %v4553 = vadd.f32 0.0, %v4552
    %v4554 = vpop.f32.mrb[0].mxu0
    %4555 = vmatprep.mubr.f32.mxu0 0.0
    %4556 = vmatmul.mubr.f32.gmra.mrb[0].mxu0 %v4194
    %v4557 = vpop.f32.mrb[0].mxu0
    %v4558 = vadd.f32 0.0, %v4557
    %v4559 = vpop.f32.mrb[0].mxu0
    %4560 = vmatprep.mubr.f32.mxu0 0.0
    %4561 = vmatmul.mubr.f32.gmra.mrb[0].mxu0 %v4195
    %v4562 = vpop.f32.mrb[0].mxu0
    %v4563 = vadd.f32 0.0, %v4562
    %v4564 = vpop.f32.mrb[0].mxu0
    %4565 = vmatprep.mubr.f32.mxu0 0.0
    %4566 = vmatmul.mubr.f32.gmra.mrb[0].mxu0 %v4196
    %v4567 = vpop.f32.mrb[0].mxu0
    %v4568 = vadd.f32 0.0, %v4567
    %v4569 = vpop.f32.mrb[0].mxu0
    %4570 = vmatprep.mubr.f32.mxu0 0.0
    %4571 = vmatmul.mubr.f32.gmra.mrb[0].mxu0 %v4197
    %v4572 = vpop.f32.mrb[0].mxu0
    %v4573 = vadd.f32 0.0, %v4572
    %v4574 = vpop.f32.mrb[0].mxu0
    %4575 = vmatprep.mubr.f32.mxu0 0.0
    %4576 = vmatmul.mubr.f32.gmra.mrb[0].mxu0 %v4198
    %v4577 = vpop.f32.mrb[0].mxu0
    %v4578 = vadd.f32 0.0, %v4577
    %v4579 = vpop.f32.mrb[0].mxu0
    %4580 = vmatprep.mubr.f32.mxu0 0.0
    %4581 = vmatmul.mubr.f32.gmra.mrb[0].mxu0 %v4199
    %v4582 = vpop.f32.mrb[0].mxu0
    %v4583 = vadd.f32 0.0, %v4582
    %v4584 = vpop.f32.mrb[0].mxu0
    %4585 = vmatprep.mubr.f32.mxu0 0.0
    %4586 = vmatmul.mubr.f32.gmra.mrb[0].mxu0 %v4200
    %v4587 = vpop.f32.mrb[0].mxu0
    %v4588 = vadd.f32 0.0, %v4587
    %v4589 = vpop.f32.mrb[0].mxu0
    %4590 = vmatprep.mubr.f32.mxu0 0.0
    %4591 = vmatmul.mubr.f32.gmra.mrb[0].mxu0 %v4201
    %v4592 = vpop.f32.mrb[0].mxu0
    %v4593 = vadd.f32 0.0, %v4592
    %v4594 = vpop.f32.mrb[0].mxu0
    %4595 = vmatprep.mubr.f32.mxu0 0.0
    %4596 = vmatmul.mubr.f32.gmra.mrb[0].mxu0 %v4202
    %v4597 = vpop.f32.mrb[0].mxu0
    %v4598 = vadd.f32 0.0, %v4597
    %v4599 = vpop.f32.mrb[0].mxu0
    %4600 = vmatprep.mubr.f32.mxu0 0.0
    %4601 = vmatmul.mubr.f32.gmra.mrb[0].mxu0 %v4203
    %v4602 = vpop.f32.mrb[0].mxu0
    %v4603 = vadd.f32 0.0, %v4602
    %v4604 = vpop.f32.mrb[0].mxu0
    %4605 = vdwg.mxu0
    %v4606 = vadd.f32 %v4076, %v4288
    %v4607 = vadd.f32 %v4077, %v4293
    %v4608 = vadd.f32 %v4078, %v4298
    %v4609 = vadd.f32 %v4079, %v4303
    %v4610 = vadd.f32 %v4080, %v4308
    %v4611 = vadd.f32 %v4081, %v4313
    %v4612 = vadd.f32 %v4082, %v4318
    %v4613 = vadd.f32 %v4083, %v4323
    %v4614 = vadd.f32 %v4084, %v4328
    %v4615 = vadd.f32 %v4085, %v4333
    %v4616 = vadd.f32 %v4086, %v4338
    %v4617 = vadd.f32 %v4087, %v4343
    %v4618 = vadd.f32 %v4088, %v4348
    %v4619 = vadd.f32 %v4089, %v4353
    %v4620 = vadd.f32 %v4090, %v4358
    %v4621 = vadd.f32 %v4091, %v4363
    %v4622 = vadd.f32 %v4092, %v4368
    %v4623 = vadd.f32 %v4093, %v4373
    %v4624 = vadd.f32 %v4094, %v4378
    %v4625 = vadd.f32 %v4095, %v4383
    %v4626 = vadd.f32 %v4096, %v4388
    %v4627 = vadd.f32 %v4097, %v4393
    %v4628 = vadd.f32 %v4098, %v4398
    %v4629 = vadd.f32 %v4099, %v4403
    %v4630 = vadd.f32 %v4100, %v4408
    %v4631 = vadd.f32 %v4101, %v4413
    %v4632 = vadd.f32 %v4102, %v4418
    %v4633 = vadd.f32 %v4103, %v4423
    %v4634 = vadd.f32 %v4104, %v4428
    %v4635 = vadd.f32 %v4105, %v4433
    %v4636 = vadd.f32 %v4106, %v4438
    %v4637 = vadd.f32 %v4107, %v4443
    %v4638 = vadd.f32 %v4108, %v4448
    %v4639 = vadd.f32 %v4109, %v4453
    %v4640 = vadd.f32 %v4110, %v4458
    %v4641 = vadd.f32 %v4111, %v4463
    %v4642 = vadd.f32 %v4112, %v4468
    %v4643 = vadd.f32 %v4113, %v4473
    %v4644 = vadd.f32 %v4114, %v4478
    %v4645 = vadd.f32 %v4115, %v4483
    %v4646 = vadd.f32 %v4116, %v4488
    %v4647 = vadd.f32 %v4117, %v4493
    %v4648 = vadd.f32 %v4118, %v4498
    %v4649 = vadd.f32 %v4119, %v4503
    %v4650 = vadd.f32 %v4120, %v4508
    %v4651 = vadd.f32 %v4121, %v4513
    %v4652 = vadd.f32 %v4122, %v4518
    %v4653 = vadd.f32 %v4123, %v4523
    %v4654 = vadd.f32 %v4124, %v4528
    %v4655 = vadd.f32 %v4125, %v4533
    %v4656 = vadd.f32 %v4126, %v4538
    %v4657 = vadd.f32 %v4127, %v4543
    %v4658 = vadd.f32 %v4128, %v4548
    %v4659 = vadd.f32 %v4129, %v4553
    %v4660 = vadd.f32 %v4130, %v4558
    %v4661 = vadd.f32 %v4131, %v4563
    %v4662 = vadd.f32 %v4132, %v4568
    %v4663 = vadd.f32 %v4133, %v4573
    %v4664 = vadd.f32 %v4134, %v4578
    %v4665 = vadd.f32 %v4135, %v4583
    %v4666 = vadd.f32 %v4136, %v4588
    %v4667 = vadd.f32 %v4137, %v4593
    %v4668 = vadd.f32 %v4138, %v4598
    %v4669 = vadd.f32 %v4139, %v4603
    %v4670 = vld [vmem:[%s3] sm:$0x1]
    %v4672 = vlaneseq
    %v4673 = vshrl.u32 %v4672, 7
    %v4674 = vsub.s32 0, %v4673
    %v4675 = vrot.slane %v4670, %v4674
    %v4677 = vadd.f32 %v4606, %v4675
    %v4678 = vadd.f32 %v4607, %v4675
    %v4679 = vadd.f32 %v4608, %v4675
    %v4680 = vadd.f32 %v4609, %v4675
    %v4681 = vadd.f32 %v4610, %v4675
    %v4682 = vadd.f32 %v4611, %v4675
    %v4683 = vadd.f32 %v4612, %v4675
    %v4684 = vadd.f32 %v4613, %v4675
    %v4685 = vadd.f32 %v4614, %v4675
    %v4686 = vadd.f32 %v4615, %v4675
    %v4687 = vadd.f32 %v4616, %v4675
    %v4688 = vadd.f32 %v4617, %v4675
    %v4689 = vadd.f32 %v4618, %v4675
    %v4690 = vadd.f32 %v4619, %v4675
    %v4691 = vadd.f32 %v4620, %v4675
    %v4692 = vadd.f32 %v4621, %v4675
    %v4693 = vadd.f32 %v4622, %v4675
    %v4694 = vadd.f32 %v4623, %v4675
    %v4695 = vadd.f32 %v4624, %v4675
    %v4696 = vadd.f32 %v4625, %v4675
    %v4697 = vadd.f32 %v4626, %v4675
    %v4698 = vadd.f32 %v4627, %v4675
    %v4699 = vadd.f32 %v4628, %v4675
    %v4700 = vadd.f32 %v4629, %v4675
    %v4701 = vadd.f32 %v4630, %v4675
    %v4702 = vadd.f32 %v4631, %v4675
    %v4703 = vadd.f32 %v4632, %v4675
    %v4704 = vadd.f32 %v4633, %v4675
    %v4705 = vadd.f32 %v4634, %v4675
    %v4706 = vadd.f32 %v4635, %v4675
    %v4707 = vadd.f32 %v4636, %v4675
    %v4708 = vadd.f32 %v4637, %v4675
    %v4709 = vadd.f32 %v4638, %v4675
    %v4710 = vadd.f32 %v4639, %v4675
    %v4711 = vadd.f32 %v4640, %v4675
    %v4712 = vadd.f32 %v4641, %v4675
    %v4713 = vadd.f32 %v4642, %v4675
    %v4714 = vadd.f32 %v4643, %v4675
    %v4715 = vadd.f32 %v4644, %v4675
    %v4716 = vadd.f32 %v4645, %v4675
    %v4717 = vadd.f32 %v4646, %v4675
    %v4718 = vadd.f32 %v4647, %v4675
    %v4719 = vadd.f32 %v4648, %v4675
    %v4720 = vadd.f32 %v4649, %v4675
    %v4721 = vadd.f32 %v4650, %v4675
    %v4722 = vadd.f32 %v4651, %v4675
    %v4723 = vadd.f32 %v4652, %v4675
    %v4724 = vadd.f32 %v4653, %v4675
    %v4725 = vadd.f32 %v4654, %v4675
    %v4726 = vadd.f32 %v4655, %v4675
    %v4727 = vadd.f32 %v4656, %v4675
    %v4728 = vadd.f32 %v4657, %v4675
    %v4729 = vadd.f32 %v4658, %v4675
    %v4730 = vadd.f32 %v4659, %v4675
    %v4731 = vadd.f32 %v4660, %v4675
    %v4732 = vadd.f32 %v4661, %v4675
    %v4733 = vadd.f32 %v4662, %v4675
    %v4734 = vadd.f32 %v4663, %v4675
    %v4735 = vadd.f32 %v4664, %v4675
    %v4736 = vadd.f32 %v4665, %v4675
    %v4737 = vadd.f32 %v4666, %v4675
    %v4738 = vadd.f32 %v4667, %v4675
    %v4739 = vadd.f32 %v4668, %v4675
    %v4740 = vadd.f32 %v4669, %v4675
    %vm4741 = vcmp.ge.f32.partialorder %v4677, 0.0
    %vm4742 = vcmp.ge.f32.partialorder %v4678, 0.0
    %vm4743 = vcmp.ge.f32.partialorder %v4679, 0.0
    %vm4744 = vcmp.ge.f32.partialorder %v4680, 0.0
    %vm4745 = vcmp.ge.f32.partialorder %v4681, 0.0
    %vm4746 = vcmp.ge.f32.partialorder %v4682, 0.0
    %vm4747 = vcmp.ge.f32.partialorder %v4683, 0.0
    %vm4748 = vcmp.ge.f32.partialorder %v4684, 0.0
    %vm4749 = vcmp.ge.f32.partialorder %v4685, 0.0
    %vm4750 = vcmp.ge.f32.partialorder %v4686, 0.0
    %vm4751 = vcmp.ge.f32.partialorder %v4687, 0.0
    %vm4752 = vcmp.ge.f32.partialorder %v4688, 0.0
    %vm4753 = vcmp.ge.f32.partialorder %v4689, 0.0
    %vm4754 = vcmp.ge.f32.partialorder %v4690, 0.0
    %vm4755 = vcmp.ge.f32.partialorder %v4691, 0.0
    %vm4756 = vcmp.ge.f32.partialorder %v4692, 0.0
    %vm4757 = vcmp.ge.f32.partialorder %v4693, 0.0
    %vm4758 = vcmp.ge.f32.partialorder %v4694, 0.0
    %vm4759 = vcmp.ge.f32.partialorder %v4695, 0.0
    %vm4760 = vcmp.ge.f32.partialorder %v4696, 0.0
    %vm4761 = vcmp.ge.f32.partialorder %v4697, 0.0
    %vm4762 = vcmp.ge.f32.partialorder %v4698, 0.0
    %vm4763 = vcmp.ge.f32.partialorder %v4699, 0.0
    %vm4764 = vcmp.ge.f32.partialorder %v4700, 0.0
    %vm4765 = vcmp.ge.f32.partialorder %v4701, 0.0
    %vm4766 = vcmp.ge.f32.partialorder %v4702, 0.0
    %vm4767 = vcmp.ge.f32.partialorder %v4703, 0.0
    %vm4768 = vcmp.ge.f32.partialorder %v4704, 0.0
    %vm4769 = vcmp.ge.f32.partialorder %v4705, 0.0
    %vm4770 = vcmp.ge.f32.partialorder %v4706, 0.0
    %vm4771 = vcmp.ge.f32.partialorder %v4707, 0.0
    %vm4772 = vcmp.ge.f32.partialorder %v4708, 0.0
    %vm4773 = vcmp.ge.f32.partialorder %v4709, 0.0
    %vm4774 = vcmp.ge.f32.partialorder %v4710, 0.0
    %vm4775 = vcmp.ge.f32.partialorder %v4711, 0.0
    %vm4776 = vcmp.ge.f32.partialorder %v4712, 0.0
    %vm4777 = vcmp.ge.f32.partialorder %v4713, 0.0
    %vm4778 = vcmp.ge.f32.partialorder %v4714, 0.0
    %vm4779 = vcmp.ge.f32.partialorder %v4715, 0.0
    %vm4780 = vcmp.ge.f32.partialorder %v4716, 0.0
    %vm4781 = vcmp.ge.f32.partialorder %v4717, 0.0
    %vm4782 = vcmp.ge.f32.partialorder %v4718, 0.0
    %vm4783 = vcmp.ge.f32.partialorder %v4719, 0.0
    %vm4784 = vcmp.ge.f32.partialorder %v4720, 0.0
    %vm4785 = vcmp.ge.f32.partialorder %v4721, 0.0
    %vm4786 = vcmp.ge.f32.partialorder %v4722, 0.0
    %vm4787 = vcmp.ge.f32.partialorder %v4723, 0.0
    %vm4788 = vcmp.ge.f32.partialorder %v4724, 0.0
    %vm4789 = vcmp.ge.f32.partialorder %v4725, 0.0
    %vm4790 = vcmp.ge.f32.partialorder %v4726, 0.0
    %vm4791 = vcmp.ge.f32.partialorder %v4727, 0.0
    %vm4792 = vcmp.ge.f32.partialorder %v4728, 0.0
    %vm4793 = vcmp.ge.f32.partialorder %v4729, 0.0
    %vm4794 = vcmp.ge.f32.partialorder %v4730, 0.0
    %vm4795 = vcmp.ge.f32.partialorder %v4731, 0.0
    %vm4796 = vcmp.ge.f32.partialorder %v4732, 0.0
    %vm4797 = vcmp.ge.f32.partialorder %v4733, 0.0
    %vm4798 = vcmp.ge.f32.partialorder %v4734, 0.0
    %vm4799 = vcmp.ge.f32.partialorder %v4735, 0.0
    %vm4800 = vcmp.ge.f32.partialorder %v4736, 0.0
    %vm4801 = vcmp.ge.f32.partialorder %v4737, 0.0
    %vm4802 = vcmp.ge.f32.partialorder %v4738, 0.0
    %vm4803 = vcmp.ge.f32.partialorder %v4739, 0.0
    %vm4804 = vcmp.ge.f32.partialorder %v4740, 0.0
    %v4805 = vmul.f32 %v4677, 0.2
    %v4806 = vmul.f32 %v4678, 0.2
    %v4807 = vmul.f32 %v4679, 0.2
    %v4808 = vmul.f32 %v4680, 0.2
    %v4809 = vmul.f32 %v4681, 0.2
    %v4810 = vmul.f32 %v4682, 0.2
    %v4811 = vmul.f32 %v4683, 0.2
    %v4812 = vmul.f32 %v4684, 0.2
    %v4813 = vmul.f32 %v4685, 0.2
    %v4814 = vmul.f32 %v4686, 0.2
    %v4815 = vmul.f32 %v4687, 0.2
    %v4816 = vmul.f32 %v4688, 0.2
    %v4817 = vmul.f32 %v4689, 0.2
    %v4818 = vmul.f32 %v4690, 0.2
    %v4819 = vmul.f32 %v4691, 0.2
    %v4820 = vmul.f32 %v4692, 0.2
    %v4821 = vmul.f32 %v4693, 0.2
    %v4822 = vmul.f32 %v4694, 0.2
    %v4823 = vmul.f32 %v4695, 0.2
    %v4824 = vmul.f32 %v4696, 0.2
    %v4825 = vmul.f32 %v4697, 0.2
    %v4826 = vmul.f32 %v4698, 0.2
    %v4827 = vmul.f32 %v4699, 0.2
    %v4828 = vmul.f32 %v4700, 0.2
    %v4829 = vmul.f32 %v4701, 0.2
    %v4830 = vmul.f32 %v4702, 0.2
    %v4831 = vmul.f32 %v4703, 0.2
    %v4832 = vmul.f32 %v4704, 0.2
    %v4833 = vmul.f32 %v4705, 0.2
    %v4834 = vmul.f32 %v4706, 0.2
    %v4835 = vmul.f32 %v4707, 0.2
    %v4836 = vmul.f32 %v4708, 0.2
    %v4837 = vmul.f32 %v4709, 0.2
    %v4838 = vmul.f32 %v4710, 0.2
    %v4839 = vmul.f32 %v4711, 0.2
    %v4840 = vmul.f32 %v4712, 0.2
    %v4841 = vmul.f32 %v4713, 0.2
    %v4842 = vmul.f32 %v4714, 0.2
    %v4843 = vmul.f32 %v4715, 0.2
    %v4844 = vmul.f32 %v4716, 0.2
    %v4845 = vmul.f32 %v4717, 0.2
    %v4846 = vmul.f32 %v4718, 0.2
    %v4847 = vmul.f32 %v4719, 0.2
    %v4848 = vmul.f32 %v4720, 0.2
    %v4849 = vmul.f32 %v4721, 0.2
    %v4850 = vmul.f32 %v4722, 0.2
    %v4851 = vmul.f32 %v4723, 0.2
    %v4852 = vmul.f32 %v4724, 0.2
    %v4853 = vmul.f32 %v4725, 0.2
    %v4854 = vmul.f32 %v4726, 0.2
    %v4855 = vmul.f32 %v4727, 0.2
    %v4856 = vmul.f32 %v4728, 0.2
    %v4857 = vmul.f32 %v4729, 0.2
    %v4858 = vmul.f32 %v4730, 0.2
    %v4859 = vmul.f32 %v4731, 0.2
    %v4860 = vmul.f32 %v4732, 0.2
    %v4861 = vmul.f32 %v4733, 0.2
    %v4862 = vmul.f32 %v4734, 0.2
    %v4863 = vmul.f32 %v4735, 0.2
    %v4864 = vmul.f32 %v4736, 0.2
    %v4865 = vmul.f32 %v4737, 0.2
    %v4866 = vmul.f32 %v4738, 0.2
    %v4867 = vmul.f32 %v4739, 0.2
    %v4868 = vmul.f32 %v4740, 0.2
    %v4869 = vsel %vm4741, %v4677, %v4805
    %v4870 = vsel %vm4742, %v4678, %v4806
    %v4871 = vsel %vm4743, %v4679, %v4807
    %v4872 = vsel %vm4744, %v4680, %v4808
    %v4873 = vsel %vm4745, %v4681, %v4809
    %v4874 = vsel %vm4746, %v4682, %v4810
    %v4875 = vsel %vm4747, %v4683, %v4811
    %v4876 = vsel %vm4748, %v4684, %v4812
    %v4877 = vsel %vm4749, %v4685, %v4813
    %v4878 = vsel %vm4750, %v4686, %v4814
    %v4879 = vsel %vm4751, %v4687, %v4815
    %v4880 = vsel %vm4752, %v4688, %v4816
    %v4881 = vsel %vm4753, %v4689, %v4817
    %v4882 = vsel %vm4754, %v4690, %v4818
    %v4883 = vsel %vm4755, %v4691, %v4819
    %v4884 = vsel %vm4756, %v4692, %v4820
    %v4885 = vsel %vm4757, %v4693, %v4821
    %v4886 = vsel %vm4758, %v4694, %v4822
    %v4887 = vsel %vm4759, %v4695, %v4823
    %v4888 = vsel %vm4760, %v4696, %v4824
    %v4889 = vsel %vm4761, %v4697, %v4825
    %v4890 = vsel %vm4762, %v4698, %v4826
    %v4891 = vsel %vm4763, %v4699, %v4827
    %v4892 = vsel %vm4764, %v4700, %v4828
    %v4893 = vsel %vm4765, %v4701, %v4829
    %v4894 = vsel %vm4766, %v4702, %v4830
    %v4895 = vsel %vm4767, %v4703, %v4831
    %v4896 = vsel %vm4768, %v4704, %v4832
    %v4897 = vsel %vm4769, %v4705, %v4833
    %v4898 = vsel %vm4770, %v4706, %v4834
    %v4899 = vsel %vm4771, %v4707, %v4835
    %v4900 = vsel %vm4772, %v4708, %v4836
    %v4901 = vsel %vm4773, %v4709, %v4837
    %v4902 = vsel %vm4774, %v4710, %v4838
    %v4903 = vsel %vm4775, %v4711, %v4839
    %v4904 = vsel %vm4776, %v4712, %v4840
    %v4905 = vsel %vm4777, %v4713, %v4841
    %v4906 = vsel %vm4778, %v4714, %v4842
    %v4907 = vsel %vm4779, %v4715, %v4843
    %v4908 = vsel %vm4780, %v4716, %v4844
    %v4909 = vsel %vm4781, %v4717, %v4845
    %v4910 = vsel %vm4782, %v4718, %v4846
    %v4911 = vsel %vm4783, %v4719, %v4847
    %v4912 = vsel %vm4784, %v4720, %v4848
    %v4913 = vsel %vm4785, %v4721, %v4849
    %v4914 = vsel %vm4786, %v4722, %v4850
    %v4915 = vsel %vm4787, %v4723, %v4851
    %v4916 = vsel %vm4788, %v4724, %v4852
    %v4917 = vsel %vm4789, %v4725, %v4853
    %v4918 = vsel %vm4790, %v4726, %v4854
    %v4919 = vsel %vm4791, %v4727, %v4855
    %v4920 = vsel %vm4792, %v4728, %v4856
    %v4921 = vsel %vm4793, %v4729, %v4857
    %v4922 = vsel %vm4794, %v4730, %v4858
    %v4923 = vsel %vm4795, %v4731, %v4859
    %v4924 = vsel %vm4796, %v4732, %v4860
    %v4925 = vsel %vm4797, %v4733, %v4861
    %v4926 = vsel %vm4798, %v4734, %v4862
    %v4927 = vsel %vm4799, %v4735, %v4863
    %v4928 = vsel %vm4800, %v4736, %v4864
    %v4929 = vsel %vm4801, %v4737, %v4865
    %v4930 = vsel %vm4802, %v4738, %v4866
    %v4931 = vsel %vm4803, %v4739, %v4867
    %v4932 = vsel %vm4804, %v4740, %v4868
    %4933 = vst [vmem:[#allocation2] sm:$0xff] %v4869
    %4934 = vst [vmem:[#allocation2 + $0x8] sm:$0xff] %v4870
    %4935 = vst [vmem:[#allocation2 + $0x10] sm:$0xff] %v4871
    %4936 = vst [vmem:[#allocation2 + $0x18] sm:$0xff] %v4872
    %4937 = vst [vmem:[#allocation2 + $0x20] sm:$0xff] %v4873
    %4938 = vst [vmem:[#allocation2 + $0x28] sm:$0xff] %v4874
    %4939 = vst [vmem:[#allocation2 + $0x30] sm:$0xff] %v4875
    %4940 = vst [vmem:[#allocation2 + $0x38] sm:$0xff] %v4876
    %4941 = vst [vmem:[#allocation2 + $0x40] sm:$0xff] %v4877
    %4942 = vst [vmem:[#allocation2 + $0x48] sm:$0xff] %v4878
    %4943 = vst [vmem:[#allocation2 + $0x50] sm:$0xff] %v4879
    %4944 = vst [vmem:[#allocation2 + $0x58] sm:$0xff] %v4880
    %4945 = vst [vmem:[#allocation2 + $0x60] sm:$0xff] %v4881
    %4946 = vst [vmem:[#allocation2 + $0x68] sm:$0xff] %v4882
    %4947 = vst [vmem:[#allocation2 + $0x70] sm:$0xff] %v4883
    %4948 = vst [vmem:[#allocation2 + $0x78] sm:$0xff] %v4884
    %4949 = vst [vmem:[#allocation2 + $0x80] sm:$0xff] %v4885
    %4950 = vst [vmem:[#allocation2 + $0x88] sm:$0xff] %v4886
    %4951 = vst [vmem:[#allocation2 + $0x90] sm:$0xff] %v4887
    %4952 = vst [vmem:[#allocation2 + $0x98] sm:$0xff] %v4888
    %4953 = vst [vmem:[#allocation2 + $0xa0] sm:$0xff] %v4889
    %4954 = vst [vmem:[#allocation2 + $0xa8] sm:$0xff] %v4890
    %4955 = vst [vmem:[#allocation2 + $0xb0] sm:$0xff] %v4891
    %4956 = vst [vmem:[#allocation2 + $0xb8] sm:$0xff] %v4892
    %4957 = vst [vmem:[#allocation2 + $0xc0] sm:$0xff] %v4893
    %4958 = vst [vmem:[#allocation2 + $0xc8] sm:$0xff] %v4894
    %4959 = vst [vmem:[#allocation2 + $0xd0] sm:$0xff] %v4895
    %4960 = vst [vmem:[#allocation2 + $0xd8] sm:$0xff] %v4896
    %4961 = vst [vmem:[#allocation2 + $0xe0] sm:$0xff] %v4897
    %4962 = vst [vmem:[#allocation2 + $0xe8] sm:$0xff] %v4898
    %4963 = vst [vmem:[#allocation2 + $0xf0] sm:$0xff] %v4899
    %4964 = vst [vmem:[#allocation2 + $0xf8] sm:$0xff] %v4900
    %4965 = vst [vmem:[#allocation2 + $0x100] sm:$0xff] %v4901
    %4966 = vst [vmem:[#allocation2 + $0x108] sm:$0xff] %v4902
    %4967 = vst [vmem:[#allocation2 + $0x110] sm:$0xff] %v4903
    %4968 = vst [vmem:[#allocation2 + $0x118] sm:$0xff] %v4904
    %4969 = vst [vmem:[#allocation2 + $0x120] sm:$0xff] %v4905
    %4970 = vst [vmem:[#allocation2 + $0x128] sm:$0xff] %v4906
    %4971 = vst [vmem:[#allocation2 + $0x130] sm:$0xff] %v4907
    %4972 = vst [vmem:[#allocation2 + $0x138] sm:$0xff] %v4908
    %4973 = vst [vmem:[#allocation2 + $0x140] sm:$0xff] %v4909
    %4974 = vst [vmem:[#allocation2 + $0x148] sm:$0xff] %v4910
    %4975 = vst [vmem:[#allocation2 + $0x150] sm:$0xff] %v4911
    %4976 = vst [vmem:[#allocation2 + $0x158] sm:$0xff] %v4912
    %4977 = vst [vmem:[#allocation2 + $0x160] sm:$0xff] %v4913
    %4978 = vst [vmem:[#allocation2 + $0x168] sm:$0xff] %v4914
    %4979 = vst [vmem:[#allocation2 + $0x170] sm:$0xff] %v4915
    %4980 = vst [vmem:[#allocation2 + $0x178] sm:$0xff] %v4916
    %4981 = vst [vmem:[#allocation2 + $0x180] sm:$0xff] %v4917
    %4982 = vst [vmem:[#allocation2 + $0x188] sm:$0xff] %v4918
    %4983 = vst [vmem:[#allocation2 + $0x190] sm:$0xff] %v4919
    %4984 = vst [vmem:[#allocation2 + $0x198] sm:$0xff] %v4920
    %4985 = vst [vmem:[#allocation2 + $0x1a0] sm:$0xff] %v4921
    %4986 = vst [vmem:[#allocation2 + $0x1a8] sm:$0xff] %v4922
    %4987 = vst [vmem:[#allocation2 + $0x1b0] sm:$0xff] %v4923
    %4988 = vst [vmem:[#allocation2 + $0x1b8] sm:$0xff] %v4924
    %4989 = vst [vmem:[#allocation2 + $0x1c0] sm:$0xff] %v4925
    %4990 = vst [vmem:[#allocation2 + $0x1c8] sm:$0xff] %v4926
    %4991 = vst [vmem:[#allocation2 + $0x1d0] sm:$0xff] %v4927
    %4992 = vst [vmem:[#allocation2 + $0x1d8] sm:$0xff] %v4928
    %4993 = vst [vmem:[#allocation2 + $0x1e0] sm:$0xff] %v4929
    %4994 = vst [vmem:[#allocation2 + $0x1e8] sm:$0xff] %v4930
    %4995 = vst [vmem:[#allocation2 + $0x1f0] sm:$0xff] %v4931
    %4996 = vst [vmem:[#allocation2 + $0x1f8] sm:$0xff] %v4932
    %v4997 = vld [vmem:[%s1] sm:$0xff]
    %v4998 = vld [vmem:[%s1 + $0x8] sm:$0xff]
    %v4999 = vld [vmem:[%s1 + $0x10] sm:$0xff]
    %v5000 = vld [vmem:[%s1 + $0x18] sm:$0xff]
    %v5001 = vld [vmem:[%s1 + $0x20] sm:$0xff]
    %v5002 = vld [vmem:[%s1 + $0x28] sm:$0xff]
    %v5003 = vld [vmem:[%s1 + $0x30] sm:$0xff]
    %v5004 = vld [vmem:[%s1 + $0x38] sm:$0xff]
    %v5005 = vld [vmem:[%s1 + $0x40] sm:$0xff]
    %v5006 = vld [vmem:[%s1 + $0x48] sm:$0xff]
    %v5007 = vld [vmem:[%s1 + $0x50] sm:$0xff]
    %v5008 = vld [vmem:[%s1 + $0x58] sm:$0xff]
    %v5009 = vld [vmem:[%s1 + $0x60] sm:$0xff]
    %v5010 = vld [vmem:[%s1 + $0x68] sm:$0xff]
    %v5011 = vld [vmem:[%s1 + $0x70] sm:$0xff]
    %v5012 = vld [vmem:[%s1 + $0x78] sm:$0xff]
    %v5013 = vld [vmem:[%s4] sm:$0xff]
    %v5014 = vld [vmem:[%s4 + $0x8] sm:$0xff]
    %v5015 = vld [vmem:[%s4 + $0x10] sm:$0xff]
    %v5016 = vld [vmem:[%s4 + $0x18] sm:$0xff]
    %v5017 = vld [vmem:[%s4 + $0x20] sm:$0xff]
    %v5018 = vld [vmem:[%s4 + $0x28] sm:$0xff]
    %v5019 = vld [vmem:[%s4 + $0x30] sm:$0xff]
    %v5020 = vld [vmem:[%s4 + $0x38] sm:$0xff]
    %v5021 = vld [vmem:[%s4 + $0x40] sm:$0xff]
    %v5022 = vld [vmem:[%s4 + $0x48] sm:$0xff]
    %v5023 = vld [vmem:[%s4 + $0x50] sm:$0xff]
    %v5024 = vld [vmem:[%s4 + $0x58] sm:$0xff]
    %v5025 = vld [vmem:[%s4 + $0x60] sm:$0xff]
    %v5026 = vld [vmem:[%s4 + $0x68] sm:$0xff]
    %v5027 = vld [vmem:[%s4 + $0x70] sm:$0xff]
    %v5028 = vld [vmem:[%s4 + $0x78] sm:$0xff]
    %v5029 = vld [vmem:[%s5] sm:$0x1]
    %v5031 = vlaneseq
    %v5032 = vshrl.u32 %v5031, 7
    %v5033 = vsub.s32 0, %v5032
    %v5034 = vrot.slane %v5029, %v5033
    %5036 = vmatprep.subr.mxu0 0.0
    %5037 = vmatpush1.msra.mxu0 %v5013
    %5038 = vmatprep.subr.mxu0 0.0
    %5039 = vmatpush1.msra.mxu0 %v5014
    %5040 = vmatprep.subr.mxu0 0.0
    %5041 = vmatpush1.msra.mxu0 %v5015
    %5042 = vmatprep.subr.mxu0 0.0
    %5043 = vmatpush1.msra.mxu0 %v5016
    %5044 = vmatprep.subr.mxu0 0.0
    %5045 = vmatpush1.msra.mxu0 %v5017
    %5046 = vmatprep.subr.mxu0 0.0
    %5047 = vmatpush1.msra.mxu0 %v5018
    %5048 = vmatprep.subr.mxu0 0.0
    %5049 = vmatpush1.msra.mxu0 %v5019
    %5050 = vmatprep.subr.mxu0 0.0
    %5051 = vmatpush1.msra.mxu0 %v5020
    %5052 = vmatprep.subr.mxu0 0.0
    %5053 = vmatpush1.msra.mxu0 %v5021
    %5054 = vmatprep.subr.mxu0 0.0
    %5055 = vmatpush1.msra.mxu0 %v5022
    %5056 = vmatprep.subr.mxu0 0.0
    %5057 = vmatpush1.msra.mxu0 %v5023
    %5058 = vmatprep.subr.mxu0 0.0
    %5059 = vmatpush1.msra.mxu0 %v5024
    %5060 = vmatprep.subr.mxu0 0.0
    %5061 = vmatpush1.msra.mxu0 %v5025
    %5062 = vmatprep.subr.mxu0 0.0
    %5063 = vmatpush1.msra.mxu0 %v5026
    %5064 = vmatprep.subr.mxu0 0.0
    %5065 = vmatpush1.msra.mxu0 %v5027
    %5066 = vmatprep.subr.mxu0 0.0
    %5067 = vmatpush1.msra.mxu0 %v5028
    %5068 = vmatprep.subr.mxu0 0.0
    %5069 = vmatpush1.msra.mxu0 0.0
    %5070 = vmatprep.subr.mxu0 0.0
    %5071 = vmatpush1.msra.mxu0 0.0
    %5072 = vmatprep.subr.mxu0 0.0
    %5073 = vmatpush1.msra.mxu0 0.0
    %5074 = vmatprep.subr.mxu0 0.0
    %5075 = vmatpush1.msra.mxu0 0.0
    %5076 = vmatprep.subr.mxu0 0.0
    %5077 = vmatpush1.msra.mxu0 0.0
    %5078 = vmatprep.subr.mxu0 0.0
    %5079 = vmatpush1.msra.mxu0 0.0
    %5080 = vmatprep.subr.mxu0 0.0
    %5081 = vmatpush1.msra.mxu0 0.0
    %5082 = vmatprep.subr.mxu0 0.0
    %5083 = vmatpush1.msra.mxu0 0.0
    %5084 = vmatprep.subr.mxu0 0.0
    %5085 = vmatpush1.msra.mxu0 0.0
    %5086 = vmatprep.subr.mxu0 0.0
    %5087 = vmatpush1.msra.mxu0 0.0
    %5088 = vmatprep.subr.mxu0 0.0
    %5089 = vmatpush1.msra.mxu0 0.0
    %5090 = vmatprep.subr.mxu0 0.0
    %5091 = vmatpush1.msra.mxu0 0.0
    %5092 = vmatprep.subr.mxu0 0.0
    %5093 = vmatpush1.msra.mxu0 0.0
    %5094 = vmatprep.subr.mxu0 0.0
    %5095 = vmatpush1.msra.mxu0 0.0
    %5096 = vmatprep.subr.mxu0 0.0
    %5097 = vmatpush1.msra.mxu0 0.0
    %5098 = vmatprep.subr.mxu0 0.0
    %5099 = vmatpush1.msra.mxu0 0.0
    %5100 = vmatprep.mubr.f32.mxu0 0.0
    %5101 = vmatmul.mubr.f32.gmra.mrb[0].mxu0 %v4997
    %v5102 = vpop.f32.mrb[0].mxu0
    %v5103 = vadd.f32 %v5034, %v5102
    %v5104 = vpop.f32.mrb[0].mxu0
    %5105 = vmatprep.mubr.f32.mxu0 0.0
    %5106 = vmatmul.mubr.f32.gmra.mrb[0].mxu0 %v4998
    %v5107 = vpop.f32.mrb[0].mxu0
    %v5108 = vadd.f32 %v5034, %v5107
    %v5109 = vpop.f32.mrb[0].mxu0
    %5110 = vmatprep.mubr.f32.mxu0 0.0
    %5111 = vmatmul.mubr.f32.gmra.mrb[0].mxu0 %v4999
    %v5112 = vpop.f32.mrb[0].mxu0
    %v5113 = vadd.f32 %v5034, %v5112
    %v5114 = vpop.f32.mrb[0].mxu0
    %5115 = vmatprep.mubr.f32.mxu0 0.0
    %5116 = vmatmul.mubr.f32.gmra.mrb[0].mxu0 %v5000
    %v5117 = vpop.f32.mrb[0].mxu0
    %v5118 = vadd.f32 %v5034, %v5117
    %v5119 = vpop.f32.mrb[0].mxu0
    %5120 = vmatprep.mubr.f32.mxu0 0.0
    %5121 = vmatmul.mubr.f32.gmra.mrb[0].mxu0 %v5001
    %v5122 = vpop.f32.mrb[0].mxu0
    %v5123 = vadd.f32 %v5034, %v5122
    %v5124 = vpop.f32.mrb[0].mxu0
    %5125 = vmatprep.mubr.f32.mxu0 0.0
    %5126 = vmatmul.mubr.f32.gmra.mrb[0].mxu0 %v5002
    %v5127 = vpop.f32.mrb[0].mxu0
    %v5128 = vadd.f32 %v5034, %v5127
    %v5129 = vpop.f32.mrb[0].mxu0
    %5130 = vmatprep.mubr.f32.mxu0 0.0
    %5131 = vmatmul.mubr.f32.gmra.mrb[0].mxu0 %v5003
    %v5132 = vpop.f32.mrb[0].mxu0
    %v5133 = vadd.f32 %v5034, %v5132
    %v5134 = vpop.f32.mrb[0].mxu0
    %5135 = vmatprep.mubr.f32.mxu0 0.0
    %5136 = vmatmul.mubr.f32.gmra.mrb[0].mxu0 %v5004
    %v5137 = vpop.f32.mrb[0].mxu0
    %v5138 = vadd.f32 %v5034, %v5137
    %v5139 = vpop.f32.mrb[0].mxu0
    %5140 = vmatprep.mubr.f32.mxu0 0.0
    %5141 = vmatmul.mubr.f32.gmra.mrb[0].mxu0 %v5005
    %v5142 = vpop.f32.mrb[0].mxu0
    %v5143 = vadd.f32 %v5034, %v5142
    %v5144 = vpop.f32.mrb[0].mxu0
    %5145 = vmatprep.mubr.f32.mxu0 0.0
    %5146 = vmatmul.mubr.f32.gmra.mrb[0].mxu0 %v5006
    %v5147 = vpop.f32.mrb[0].mxu0
    %v5148 = vadd.f32 %v5034, %v5147
    %v5149 = vpop.f32.mrb[0].mxu0
    %5150 = vmatprep.mubr.f32.mxu0 0.0
    %5151 = vmatmul.mubr.f32.gmra.mrb[0].mxu0 %v5007
    %v5152 = vpop.f32.mrb[0].mxu0
    %v5153 = vadd.f32 %v5034, %v5152
    %v5154 = vpop.f32.mrb[0].mxu0
    %5155 = vmatprep.mubr.f32.mxu0 0.0
    %5156 = vmatmul.mubr.f32.gmra.mrb[0].mxu0 %v5008
    %v5157 = vpop.f32.mrb[0].mxu0
    %v5158 = vadd.f32 %v5034, %v5157
    %v5159 = vpop.f32.mrb[0].mxu0
    %5160 = vmatprep.mubr.f32.mxu0 0.0
    %5161 = vmatmul.mubr.f32.gmra.mrb[0].mxu0 %v5009
    %v5162 = vpop.f32.mrb[0].mxu0
    %v5163 = vadd.f32 %v5034, %v5162
    %v5164 = vpop.f32.mrb[0].mxu0
    %5165 = vmatprep.mubr.f32.mxu0 0.0
    %5166 = vmatmul.mubr.f32.gmra.mrb[0].mxu0 %v5010
    %v5167 = vpop.f32.mrb[0].mxu0
    %v5168 = vadd.f32 %v5034, %v5167
    %v5169 = vpop.f32.mrb[0].mxu0
    %5170 = vmatprep.mubr.f32.mxu0 0.0
    %5171 = vmatmul.mubr.f32.gmra.mrb[0].mxu0 %v5011
    %v5172 = vpop.f32.mrb[0].mxu0
    %v5173 = vadd.f32 %v5034, %v5172
    %v5174 = vpop.f32.mrb[0].mxu0
    %5175 = vmatprep.mubr.f32.mxu0 0.0
    %5176 = vmatmul.mubr.f32.gmra.mrb[0].mxu0 %v5012
    %v5177 = vpop.f32.mrb[0].mxu0
    %v5178 = vadd.f32 %v5034, %v5177
    %v5179 = vpop.f32.mrb[0].mxu0
    %5180 = vdwg.mxu0
    %5181 = vst [vmem:[#allocation4] sm:$0xff] %v5103
    %5182 = vst [vmem:[#allocation4 + $0x8] sm:$0xff] %v5108
    %5183 = vst [vmem:[#allocation4 + $0x10] sm:$0xff] %v5113
    %5184 = vst [vmem:[#allocation4 + $0x18] sm:$0xff] %v5118
    %5185 = vst [vmem:[#allocation4 + $0x20] sm:$0xff] %v5123
    %5186 = vst [vmem:[#allocation4 + $0x28] sm:$0xff] %v5128
    %5187 = vst [vmem:[#allocation4 + $0x30] sm:$0xff] %v5133
    %5188 = vst [vmem:[#allocation4 + $0x38] sm:$0xff] %v5138
    %5189 = vst [vmem:[#allocation4 + $0x40] sm:$0xff] %v5143
    %5190 = vst [vmem:[#allocation4 + $0x48] sm:$0xff] %v5148
    %5191 = vst [vmem:[#allocation4 + $0x50] sm:$0xff] %v5153
    %5192 = vst [vmem:[#allocation4 + $0x58] sm:$0xff] %v5158
    %5193 = vst [vmem:[#allocation4 + $0x60] sm:$0xff] %v5163
    %5194 = vst [vmem:[#allocation4 + $0x68] sm:$0xff] %v5168
    %5195 = vst [vmem:[#allocation4 + $0x70] sm:$0xff] %v5173
    %5196 = vst [vmem:[#allocation4 + $0x78] sm:$0xff] %v5178
    // Predicated region
    $region26: #{tpu_custom_call.1} parent=1 // pred_check
      _
    $region27: #{tpu_custom_call.1} parent=1 // pred_check_branch
      %5198 = sbr.rel (0) target = $region29
    $region28: #{tpu_custom_call.1} parent=1 // pred_region
      %s5200 = ssub.s32 8192, 8192
      %5201 = vsyncadd [#allocation3], %s5200
      %s5202 = sshll.u32 [#allocation2], 4
      %s5203 = int_to_ptr.vmem [resolvable:$true] %s5202
      %5208 = dma.vmem_to_hbm [thread:$0]  %s5203, 8192, %s6, [#allocation3], 128, 128, 8
    $region29: #{tpu_custom_call.1} parent=1 // pred_fallthru
      _
    // Predicated region
    $region30: #{tpu_custom_call.1} parent=1 // pred_check
      _
    $region31: #{tpu_custom_call.1} parent=1 // pred_check_branch
      %5210 = sbr.rel (0) target = $region33
    $region32: #{tpu_custom_call.1} parent=1 // pred_region
      %s5212 = ssub.s32 2048, 2048
      %5213 = vsyncadd [#allocation5], %s5212
      %s5214 = sshll.u32 [#allocation4], 4
      %s5215 = int_to_ptr.vmem [resolvable:$true] %s5214
      %5220 = dma.vmem_to_hbm [thread:$0]  %s5215, 2048, %s7, [#allocation5], 128, 128, 8
    $region33: #{tpu_custom_call.1} parent=1 // pred_fallthru
      _
    // Predicated region
    $region34: #{tpu_custom_call.1} parent=1 // pred_check
      _
    $region35: #{tpu_custom_call.1} parent=1 // pred_check_branch
      %5222 = sbr.rel (0) target = $region37
    $region36: #{tpu_custom_call.1} parent=1 // pred_region
      %5223 = dma.done [#allocation3], 8192
    $region37: #{tpu_custom_call.1} parent=1 // pred_fallthru
      _
    // Predicated region
    $region38: #{tpu_custom_call.1} parent=1 // pred_check
      _
    $region39: #{tpu_custom_call.1} parent=1 // pred_check_branch
      %5225 = sbr.rel (0) target = $region41
    $region40: #{tpu_custom_call.1} parent=1 // pred_region
      %5226 = dma.done [#allocation5], 2048
    $region41: #{tpu_custom_call.1} parent=1 // pred_fallthru
      _
    %5227 = vsyncpa [#allocation3], 1
    %5228 = vsyncpa [#allocation5], 1

</llo_original>
